<compile_context>
chip_gen: v7x
topology: tpu7x:2x2x1
jax: 0.10.0
libtpu: 0.0.40
codegen_flags: <defaults>
</compile_context>

<pallas_src>
import jax
import jax.numpy as jnp
import numpy as np
from jax.experimental import pallas as pl
from jax.experimental.pallas import tpu as pltpu


# ----------------------------- Pallas kernel ------------------------------- #

def _softmax_lastdim(x):
    """Max-subtracted softmax over the last dim; reciprocal on the EUP."""
    m = jnp.max(x, axis=-1, keepdims=True)
    p = jnp.exp(x - m)
    return p * pl.reciprocal(jnp.sum(p, axis=-1, keepdims=True), approx=True)


def _attn_path(q, k, v, w0, scale):
    """Batched-over-heads cross attention + fused per-head output projection.

    q, k, v: (H, T, dh) f32 values; w0: (H, dh, D) bf16.
    Returns the W0-projected attention output summed over heads: (T, D) f32.
    """
    s = jnp.einsum('hqe,hke->hqk',
                   q.astype(jnp.bfloat16), k.astype(jnp.bfloat16),
                   preferred_element_type=jnp.float32) * scale
    p = _softmax_lastdim(s)                                       # (H, T, T) f32
    o = jnp.einsum('hqk,hke->hqe',
                   p.astype(jnp.bfloat16), v.astype(jnp.bfloat16),
                   preferred_element_type=jnp.float32)            # (H, T, dh) f32
    proj = jnp.einsum('hqe,hed->hqd',
                      o.astype(jnp.bfloat16), w0,
                      preferred_element_type=jnp.float32)         # (H, T, D) f32
    return jnp.sum(proj, axis=0)                                  # (T, D) f32


def face_transfer_kernel(ws_ref, wt_ref,
                         wq_s_ref, wk_s_ref, wv_s_ref, w0_s_ref,
                         wq_t_ref, wk_t_ref, wv_t_ref, w0_t_ref,
                         o_ref):
    heads, D, dh = wq_s_ref.shape
    T = ws_ref.shape[1]
    scale = dh ** (-0.5)

    x_s = ws_ref[0]                                   # (T, D)
    x_t = wt_ref[0]
    x_s32 = x_s.astype(jnp.float32)                   # f32 for the gating math
    x_t32 = x_t.astype(jnp.float32)

    # bf16 MXU operands, broadcast over heads for batched projections.
    xs_b = jnp.broadcast_to(x_s.astype(jnp.bfloat16), (heads, T, D))
    xt_b = jnp.broadcast_to(x_t.astype(jnp.bfloat16), (heads, T, D))

    def proj(xb, w_ref):
        return jnp.einsum('htd,hde->hte', xb, w_ref[...],
                          preferred_element_type=jnp.float32)     # (H, T, dh) f32

    q_s = proj(xs_b, wq_s_ref)
    k_s = proj(xs_b, wk_s_ref)
    v_s = proj(xs_b, wv_s_ref)
    q_t = proj(xt_b, wq_t_ref)
    k_t = proj(xt_b, wk_t_ref)
    v_t = proj(xt_b, wv_t_ref)

    # A_s = mhca_s(q_t, k_s, v_s) ; A_t = mhca_t(q_s, k_t, v_t)
    A_s = _attn_path(q_t, k_s, v_s, w0_s_ref[...], scale)         # (T, D) f32
    A_t = _attn_path(q_s, k_t, v_t, w0_t_ref[...], scale)         # (T, D) f32

    # Gating: exp(A)/sum(exp(A)) over the embed dim, written as a max-subtracted
    # softmax (identical math, overflow-safe), divide -> EUP reciprocal.
    g_s = jnp.exp(A_s - jnp.max(A_s, axis=-1, keepdims=True))
    g_s = g_s * pl.reciprocal(jnp.sum(g_s, axis=-1, keepdims=True), approx=True)
    g_t = jnp.exp(A_t - jnp.max(A_t, axis=-1, keepdims=True))
    g_t = g_t * pl.reciprocal(jnp.sum(g_t, axis=-1, keepdims=True), approx=True)

    o_ref[0] = (g_s * x_s32 + g_t * x_t32).astype(o_ref.dtype)


# --------------------------- wrapper / param glue --------------------------- #

def split_qkv_weight(Wqkv, heads, dim_head):
    """(D, 3D) 'y = x @ W' weight with torch/einops column order
    c = d*(3*heads) + which*heads + h  ->  (Wq, Wk, Wv), each (heads, D, dim_head)."""
    D_in = Wqkv.shape[0]
    W = Wqkv.reshape(D_in, dim_head, 3, heads)        # (in, d, which, h)
    W = jnp.transpose(W, (2, 3, 0, 1))                # (which, h, in, d)
    return W[0], W[1], W[2]


def face_transfer_attn(W_s, W_t, Wqkv_s, Wqkv_t, W0_s, W0_t, *, heads):
    B, T, D = W_s.shape
    dh = D // heads

    # Parameter restructuring (once, outside the kernel) + bf16 cast for the MXU.
    wq_s, wk_s, wv_s = (w.astype(jnp.bfloat16) for w in split_qkv_weight(Wqkv_s, heads, dh))
    wq_t, wk_t, wv_t = (w.astype(jnp.bfloat16) for w in split_qkv_weight(Wqkv_t, heads, dh))
    w0_s = W0_s.reshape(heads, dh, D).astype(jnp.bfloat16)
    w0_t = W0_t.reshape(heads, dh, D).astype(jnp.bfloat16)

    act_spec = pl.BlockSpec((1, T, D), lambda b: (b, 0, 0))
    wqkv_spec = pl.BlockSpec((heads, D, dh), lambda b: (0, 0, 0))
    w0_spec = pl.BlockSpec((heads, dh, D), lambda b: (0, 0, 0))

    return pl.pallas_call(
        face_transfer_kernel,
        out_shape=jax.ShapeDtypeStruct((B, T, D), W_s.dtype),
        grid_spec=pltpu.PrefetchScalarGridSpec(
            num_scalar_prefetch=0,
            grid=(B,),
            in_specs=[
                act_spec, act_spec,                     # W_s, W_t
                wqkv_spec, wqkv_spec, wqkv_spec, w0_spec,   # s-path weights
                wqkv_spec, wqkv_spec, wqkv_spec, w0_spec,   # t-path weights
            ],
            out_specs=act_spec,
        ),
        compiler_params=pltpu.CompilerParams(dimension_semantics=("parallel",)),
    )(W_s, W_t, wq_s, wk_s, wv_s, w0_s, wq_t, wk_t, wv_t, w0_t)


# ------------------------------ pure-JAX reference -------------------------- #

def reference_forward(W_s, W_t, Wqkv_s, Wqkv_t, W0_s, W0_t, heads):
    """Pure-JAX (f32) replica of the PyTorch forward (y = x @ W convention)."""
    B, T, D = W_s.shape
    dh = D // heads

    def split(qkv):
        # 'b t (d k h) -> k b h t d'
        r = qkv.reshape(B, T, dh, 3, heads)
        r = jnp.transpose(r, (3, 0, 4, 1, 2))
        return r[0], r[1], r[2]

    qkv_s = W_s @ Wqkv_s
    qkv_t = W_t @ Wqkv_t
    q_s, k_s, v_s = split(qkv_s)
    q_t, k_t, v_t = split(qkv_t)

    def mhca(q, k, v, W0):
        scale = dh ** (-0.5)
        s = jnp.einsum('bhid,bhjd->bhij', q, k) * scale
        a = jax.nn.softmax(s, axis=-1)
        o = jnp.einsum('bhij,bhjd->bhid', a, v)
        o = jnp.transpose(o, (0, 2, 1, 3)).reshape(B, T, D)   # 'b h t d -> b t (h d)'
        return o @ W0

    A_s = mhca(q_t, k_s, v_s, W0_s)
    A_t = mhca(q_s, k_t, v_t, W0_t)
    A_s = jnp.exp(A_s)
    A_t = jnp.exp(A_t)
    A_s = A_s / jnp.sum(A_s, axis=-1, keepdims=True)
    A_t = A_t / jnp.sum(A_t, axis=-1, keepdims=True)
    return A_s * W_s + A_t * W_t


# ----------------------------------- main ----------------------------------- #

if __name__ == "__main__":
    B, T, D, HEADS = 2, 8, 32, 4
    dh = D // HEADS

    key = jax.random.PRNGKey(0)
    k1, k2, k3, k4, k5, k6 = jax.random.split(key, 6)

    # Inputs
    W_s = jax.random.normal(k1, (B, T, D), jnp.float32)
    W_t = jax.random.normal(k2, (B, T, D), jnp.float32)

    # Synthetic parameters (torch Linear weights transposed: (in, out)).
    scale = 0.1
    Wqkv_s = jax.random.normal(k3, (D, 3 * D), jnp.float32) * scale   # mhca_s.to_qvk
    Wqkv_t = jax.random.normal(k4, (D, 3 * D), jnp.float32) * scale   # mhca_t.to_qvk
    W0_s = jax.random.normal(k5, (D, D), jnp.float32) * scale         # mhca_s.W_0
    W0_t = jax.random.normal(k6, (D, D), jnp.float32) * scale         # mhca_t.W_0

    out = face_transfer_attn(W_s, W_t, Wqkv_s, Wqkv_t, W0_s, W0_t, heads=HEADS)
    out = jax.block_until_ready(out)

    ref = reference_forward(W_s, W_t, Wqkv_s, Wqkv_t, W0_s, W0_t, HEADS)
    # Kernel runs bf16 MXU operands + approx reciprocals, so compare against the
    # f32 reference with a correspondingly looser tolerance.
    np.testing.assert_allclose(np.asarray(out), np.asarray(ref), rtol=2e-2, atol=2e-2)

    print("KERNEL_OK")
</pallas_src>

<mosaic_0001>
module attributes {stable_mosaic.version = 11 : i64} {
  func.func @face_transfer_kernel(%arg0: i32, %arg1: memref<1x8x32xf32, #tpu.memory_space<vmem>>, %arg2: memref<1x8x32xf32, #tpu.memory_space<vmem>>, %arg3: memref<4x32x8xbf16, #tpu.memory_space<vmem>>, %arg4: memref<4x32x8xbf16, #tpu.memory_space<vmem>>, %arg5: memref<4x32x8xbf16, #tpu.memory_space<vmem>>, %arg6: memref<4x8x32xbf16, #tpu.memory_space<vmem>>, %arg7: memref<4x32x8xbf16, #tpu.memory_space<vmem>>, %arg8: memref<4x32x8xbf16, #tpu.memory_space<vmem>>, %arg9: memref<4x32x8xbf16, #tpu.memory_space<vmem>>, %arg10: memref<4x8x32xbf16, #tpu.memory_space<vmem>>, %arg11: memref<1x8x32xf32, #tpu.memory_space<vmem>>) attributes {dimension_semantics = [#tpu.dimension_semantics<parallel>], iteration_bounds = array<i64: 2>, scalar_prefetch = 0 : i64, scratch_operands = 0 : i64, tpu.core_type = #tpu.core_type<tc>, window_params = [{transform_indices = @transform_0, window_bounds = array<i64: 1, 8, 32>}, {transform_indices = @transform_1, window_bounds = array<i64: 1, 8, 32>}, {pipeline_mode = #tpu.pipeline_mode<synchronous>, transform_indices = @transform_2, window_bounds = array<i64: 4, 32, 8>}, {pipeline_mode = #tpu.pipeline_mode<synchronous>, transform_indices = @transform_3, window_bounds = array<i64: 4, 32, 8>}, {pipeline_mode = #tpu.pipeline_mode<synchronous>, transform_indices = @transform_4, window_bounds = array<i64: 4, 32, 8>}, {pipeline_mode = #tpu.pipeline_mode<synchronous>, transform_indices = @transform_5, window_bounds = array<i64: 4, 8, 32>}, {pipeline_mode = #tpu.pipeline_mode<synchronous>, transform_indices = @transform_6, window_bounds = array<i64: 4, 32, 8>}, {pipeline_mode = #tpu.pipeline_mode<synchronous>, transform_indices = @transform_7, window_bounds = array<i64: 4, 32, 8>}, {pipeline_mode = #tpu.pipeline_mode<synchronous>, transform_indices = @transform_8, window_bounds = array<i64: 4, 32, 8>}, {pipeline_mode = #tpu.pipeline_mode<synchronous>, transform_indices = @transform_9, window_bounds = array<i64: 4, 8, 32>}, {transform_indices = @transform_10, window_bounds = array<i64: 1, 8, 32>}]} {
    %c0 = arith.constant 0 : index
    %c0_0 = arith.constant 0 : index
    %c0_1 = arith.constant 0 : index
    %0 = vector.load %arg1[%c0, %c0_0, %c0_1] : memref<1x8x32xf32, #tpu.memory_space<vmem>>, vector<1x8x32xf32>
    %1 = vector.shape_cast %0 : vector<1x8x32xf32> to vector<8x32xf32>
    %c0_2 = arith.constant 0 : index
    %c0_3 = arith.constant 0 : index
    %c0_4 = arith.constant 0 : index
    %2 = vector.load %arg2[%c0_2, %c0_3, %c0_4] : memref<1x8x32xf32, #tpu.memory_space<vmem>>, vector<1x8x32xf32>
    %3 = vector.shape_cast %2 : vector<1x8x32xf32> to vector<8x32xf32>
    %4 = arith.truncf %1 : vector<8x32xf32> to vector<8x32xbf16>
    %5 = vector.shape_cast %4 : vector<8x32xbf16> to vector<1x8x32xbf16>
    %6 = vector.broadcast %5 : vector<1x8x32xbf16> to vector<4x8x32xbf16>
    %7 = arith.truncf %3 : vector<8x32xf32> to vector<8x32xbf16>
    %8 = vector.shape_cast %7 : vector<8x32xbf16> to vector<1x8x32xbf16>
    %9 = vector.broadcast %8 : vector<1x8x32xbf16> to vector<4x8x32xbf16>
    %c0_5 = arith.constant 0 : index
    %c0_6 = arith.constant 0 : index
    %c0_7 = arith.constant 0 : index
    %10 = vector.load %arg3[%c0_5, %c0_6, %c0_7] : memref<4x32x8xbf16, #tpu.memory_space<vmem>>, vector<4x32x8xbf16>
    "tpu.trace_start"() <{level = 10 : i32, message = "htd,hde->hte"}> : () -> ()
    %cst = arith.constant dense<0.000000e+00> : vector<4x8x8xf32>
    %11 = tpu.matmul %6, %10, %cst {dimension_numbers = #tpu.dot_dimension_numbers<[2], [1], [1], [2], [0, 0, 0, 1, 1, 2], [0], [0]>} : vector<4x8x32xbf16>, vector<4x32x8xbf16>, vector<4x8x8xf32> -> vector<4x8x8xf32>
    "tpu.trace_stop"() : () -> ()
    %c0_8 = arith.constant 0 : index
    %c0_9 = arith.constant 0 : index
    %c0_10 = arith.constant 0 : index
    %12 = vector.load %arg4[%c0_8, %c0_9, %c0_10] : memref<4x32x8xbf16, #tpu.memory_space<vmem>>, vector<4x32x8xbf16>
    "tpu.trace_start"() <{level = 10 : i32, message = "htd,hde->hte"}> : () -> ()
    %cst_11 = arith.constant dense<0.000000e+00> : vector<4x8x8xf32>
    %13 = tpu.matmul %6, %12, %cst_11 {dimension_numbers = #tpu.dot_dimension_numbers<[2], [1], [1], [2], [0, 0, 0, 1, 1, 2], [0], [0]>} : vector<4x8x32xbf16>, vector<4x32x8xbf16>, vector<4x8x8xf32> -> vector<4x8x8xf32>
    "tpu.trace_stop"() : () -> ()
    %c0_12 = arith.constant 0 : index
    %c0_13 = arith.constant 0 : index
    %c0_14 = arith.constant 0 : index
    %14 = vector.load %arg5[%c0_12, %c0_13, %c0_14] : memref<4x32x8xbf16, #tpu.memory_space<vmem>>, vector<4x32x8xbf16>
    "tpu.trace_start"() <{level = 10 : i32, message = "htd,hde->hte"}> : () -> ()
    %cst_15 = arith.constant dense<0.000000e+00> : vector<4x8x8xf32>
    %15 = tpu.matmul %6, %14, %cst_15 {dimension_numbers = #tpu.dot_dimension_numbers<[2], [1], [1], [2], [0, 0, 0, 1, 1, 2], [0], [0]>} : vector<4x8x32xbf16>, vector<4x32x8xbf16>, vector<4x8x8xf32> -> vector<4x8x8xf32>
    "tpu.trace_stop"() : () -> ()
    %c0_16 = arith.constant 0 : index
    %c0_17 = arith.constant 0 : index
    %c0_18 = arith.constant 0 : index
    %16 = vector.load %arg7[%c0_16, %c0_17, %c0_18] : memref<4x32x8xbf16, #tpu.memory_space<vmem>>, vector<4x32x8xbf16>
    "tpu.trace_start"() <{level = 10 : i32, message = "htd,hde->hte"}> : () -> ()
    %cst_19 = arith.constant dense<0.000000e+00> : vector<4x8x8xf32>
    %17 = tpu.matmul %9, %16, %cst_19 {dimension_numbers = #tpu.dot_dimension_numbers<[2], [1], [1], [2], [0, 0, 0, 1, 1, 2], [0], [0]>} : vector<4x8x32xbf16>, vector<4x32x8xbf16>, vector<4x8x8xf32> -> vector<4x8x8xf32>
    "tpu.trace_stop"() : () -> ()
    %c0_20 = arith.constant 0 : index
    %c0_21 = arith.constant 0 : index
    %c0_22 = arith.constant 0 : index
    %18 = vector.load %arg8[%c0_20, %c0_21, %c0_22] : memref<4x32x8xbf16, #tpu.memory_space<vmem>>, vector<4x32x8xbf16>
    "tpu.trace_start"() <{level = 10 : i32, message = "htd,hde->hte"}> : () -> ()
    %cst_23 = arith.constant dense<0.000000e+00> : vector<4x8x8xf32>
    %19 = tpu.matmul %9, %18, %cst_23 {dimension_numbers = #tpu.dot_dimension_numbers<[2], [1], [1], [2], [0, 0, 0, 1, 1, 2], [0], [0]>} : vector<4x8x32xbf16>, vector<4x32x8xbf16>, vector<4x8x8xf32> -> vector<4x8x8xf32>
    "tpu.trace_stop"() : () -> ()
    %c0_24 = arith.constant 0 : index
    %c0_25 = arith.constant 0 : index
    %c0_26 = arith.constant 0 : index
    %20 = vector.load %arg9[%c0_24, %c0_25, %c0_26] : memref<4x32x8xbf16, #tpu.memory_space<vmem>>, vector<4x32x8xbf16>
    "tpu.trace_start"() <{level = 10 : i32, message = "htd,hde->hte"}> : () -> ()
    %cst_27 = arith.constant dense<0.000000e+00> : vector<4x8x8xf32>
    %21 = tpu.matmul %9, %20, %cst_27 {dimension_numbers = #tpu.dot_dimension_numbers<[2], [1], [1], [2], [0, 0, 0, 1, 1, 2], [0], [0]>} : vector<4x8x32xbf16>, vector<4x32x8xbf16>, vector<4x8x8xf32> -> vector<4x8x8xf32>
    "tpu.trace_stop"() : () -> ()
    %c0_28 = arith.constant 0 : index
    %c0_29 = arith.constant 0 : index
    %c0_30 = arith.constant 0 : index
    %22 = vector.load %arg6[%c0_28, %c0_29, %c0_30] : memref<4x8x32xbf16, #tpu.memory_space<vmem>>, vector<4x8x32xbf16>
    %23 = arith.truncf %17 : vector<4x8x8xf32> to vector<4x8x8xbf16>
    %24 = arith.truncf %13 : vector<4x8x8xf32> to vector<4x8x8xbf16>
    "tpu.trace_start"() <{level = 10 : i32, message = "hqe,hke->hqk"}> : () -> ()
    %cst_31 = arith.constant dense<0.000000e+00> : vector<4x8x8xf32>
    %25 = tpu.matmul %23, %24, %cst_31 {dimension_numbers = #tpu.dot_dimension_numbers<[2], [2], [1], [1], [0, 0, 0, 1, 1, 1], [0], [0]>} : vector<4x8x8xbf16>, vector<4x8x8xbf16>, vector<4x8x8xf32> -> vector<4x8x8xf32>
    "tpu.trace_stop"() : () -> ()
    %cst_32 = arith.constant 0.353553385 : f32
    %26 = vector.broadcast %cst_32 : f32 to vector<4x8x8xf32>
    %27 = arith.mulf %25, %26 : vector<4x8x8xf32>
    %cst_33 = arith.constant dense<0xFF800000> : vector<4x8xf32>
    %28 = vector.multi_reduction <maximumf>, %27, %cst_33 [2] : vector<4x8x8xf32> to vector<4x8xf32>
    %29 = vector.shape_cast %28 : vector<4x8xf32> to vector<4x8x1xf32>
    %30 = vector.broadcast %29 : vector<4x8x1xf32> to vector<4x8x8xf32>
    %31 = arith.subf %27, %30 : vector<4x8x8xf32>
    %32 = math.exp %31 : vector<4x8x8xf32>
    %cst_34 = arith.constant dense<0.000000e+00> : vector<4x8xf32>
    %33 = vector.multi_reduction <add>, %32, %cst_34 [2] : vector<4x8x8xf32> to vector<4x8xf32>
    %34 = vector.shape_cast %33 : vector<4x8xf32> to vector<4x8x1xf32>
    %35 = tpu.reciprocal %34 {approx = true} : vector<4x8x1xf32> -> vector<4x8x1xf32>
    %36 = vector.broadcast %35 : vector<4x8x1xf32> to vector<4x8x8xf32>
    %37 = arith.mulf %32, %36 : vector<4x8x8xf32>
    %38 = arith.truncf %37 : vector<4x8x8xf32> to vector<4x8x8xbf16>
    %39 = arith.truncf %15 : vector<4x8x8xf32> to vector<4x8x8xbf16>
    "tpu.trace_start"() <{level = 10 : i32, message = "hqk,hke->hqe"}> : () -> ()
    %cst_35 = arith.constant dense<0.000000e+00> : vector<4x8x8xf32>
    %40 = tpu.matmul %38, %39, %cst_35 {dimension_numbers = #tpu.dot_dimension_numbers<[2], [1], [1], [2], [0, 0, 0, 1, 1, 2], [0], [0]>} : vector<4x8x8xbf16>, vector<4x8x8xbf16>, vector<4x8x8xf32> -> vector<4x8x8xf32>
    "tpu.trace_stop"() : () -> ()
    %41 = arith.truncf %40 : vector<4x8x8xf32> to vector<4x8x8xbf16>
    "tpu.trace_start"() <{level = 10 : i32, message = "hqe,hed->hqd"}> : () -> ()
    %cst_36 = arith.constant dense<0.000000e+00> : vector<4x8x32xf32>
    %42 = tpu.matmul %41, %22, %cst_36 {dimension_numbers = #tpu.dot_dimension_numbers<[2], [1], [1], [2], [0, 0, 0, 1, 1, 2], [0], [0]>} : vector<4x8x8xbf16>, vector<4x8x32xbf16>, vector<4x8x32xf32> -> vector<4x8x32xf32>
    "tpu.trace_stop"() : () -> ()
    %cst_37 = arith.constant dense<0.000000e+00> : vector<8x32xf32>
    %43 = vector.multi_reduction <add>, %42, %cst_37 [0] : vector<4x8x32xf32> to vector<8x32xf32>
    %c0_38 = arith.constant 0 : index
    %c0_39 = arith.constant 0 : index
    %c0_40 = arith.constant 0 : index
    %44 = vector.load %arg10[%c0_38, %c0_39, %c0_40] : memref<4x8x32xbf16, #tpu.memory_space<vmem>>, vector<4x8x32xbf16>
    %45 = arith.truncf %11 : vector<4x8x8xf32> to vector<4x8x8xbf16>
    %46 = arith.truncf %19 : vector<4x8x8xf32> to vector<4x8x8xbf16>
    "tpu.trace_start"() <{level = 10 : i32, message = "hqe,hke->hqk"}> : () -> ()
    %cst_41 = arith.constant dense<0.000000e+00> : vector<4x8x8xf32>
    %47 = tpu.matmul %45, %46, %cst_41 {dimension_numbers = #tpu.dot_dimension_numbers<[2], [2], [1], [1], [0, 0, 0, 1, 1, 1], [0], [0]>} : vector<4x8x8xbf16>, vector<4x8x8xbf16>, vector<4x8x8xf32> -> vector<4x8x8xf32>
    "tpu.trace_stop"() : () -> ()
    %cst_42 = arith.constant 0.353553385 : f32
    %48 = vector.broadcast %cst_42 : f32 to vector<4x8x8xf32>
    %49 = arith.mulf %47, %48 : vector<4x8x8xf32>
    %cst_43 = arith.constant dense<0xFF800000> : vector<4x8xf32>
    %50 = vector.multi_reduction <maximumf>, %49, %cst_43 [2] : vector<4x8x8xf32> to vector<4x8xf32>
    %51 = vector.shape_cast %50 : vector<4x8xf32> to vector<4x8x1xf32>
    %52 = vector.broadcast %51 : vector<4x8x1xf32> to vector<4x8x8xf32>
    %53 = arith.subf %49, %52 : vector<4x8x8xf32>
    %54 = math.exp %53 : vector<4x8x8xf32>
    %cst_44 = arith.constant dense<0.000000e+00> : vector<4x8xf32>
    %55 = vector.multi_reduction <add>, %54, %cst_44 [2] : vector<4x8x8xf32> to vector<4x8xf32>
    %56 = vector.shape_cast %55 : vector<4x8xf32> to vector<4x8x1xf32>
    %57 = tpu.reciprocal %56 {approx = true} : vector<4x8x1xf32> -> vector<4x8x1xf32>
    %58 = vector.broadcast %57 : vector<4x8x1xf32> to vector<4x8x8xf32>
    %59 = arith.mulf %54, %58 : vector<4x8x8xf32>
    %60 = arith.truncf %59 : vector<4x8x8xf32> to vector<4x8x8xbf16>
    %61 = arith.truncf %21 : vector<4x8x8xf32> to vector<4x8x8xbf16>
    "tpu.trace_start"() <{level = 10 : i32, message = "hqk,hke->hqe"}> : () -> ()
    %cst_45 = arith.constant dense<0.000000e+00> : vector<4x8x8xf32>
    %62 = tpu.matmul %60, %61, %cst_45 {dimension_numbers = #tpu.dot_dimension_numbers<[2], [1], [1], [2], [0, 0, 0, 1, 1, 2], [0], [0]>} : vector<4x8x8xbf16>, vector<4x8x8xbf16>, vector<4x8x8xf32> -> vector<4x8x8xf32>
    "tpu.trace_stop"() : () -> ()
    %63 = arith.truncf %62 : vector<4x8x8xf32> to vector<4x8x8xbf16>
    "tpu.trace_start"() <{level = 10 : i32, message = "hqe,hed->hqd"}> : () -> ()
    %cst_46 = arith.constant dense<0.000000e+00> : vector<4x8x32xf32>
    %64 = tpu.matmul %63, %44, %cst_46 {dimension_numbers = #tpu.dot_dimension_numbers<[2], [1], [1], [2], [0, 0, 0, 1, 1, 2], [0], [0]>} : vector<4x8x8xbf16>, vector<4x8x32xbf16>, vector<4x8x32xf32> -> vector<4x8x32xf32>
    "tpu.trace_stop"() : () -> ()
    %cst_47 = arith.constant dense<0.000000e+00> : vector<8x32xf32>
    %65 = vector.multi_reduction <add>, %64, %cst_47 [0] : vector<4x8x32xf32> to vector<8x32xf32>
    %cst_48 = arith.constant dense<0xFF800000> : vector<8xf32>
    %66 = vector.multi_reduction <maximumf>, %43, %cst_48 [1] : vector<8x32xf32> to vector<8xf32>
    %67 = vector.shape_cast %66 : vector<8xf32> to vector<8x1xf32>
    %68 = vector.broadcast %67 : vector<8x1xf32> to vector<8x32xf32>
    %69 = arith.subf %43, %68 : vector<8x32xf32>
    %70 = math.exp %69 : vector<8x32xf32>
    %cst_49 = arith.constant dense<0.000000e+00> : vector<8xf32>
    %71 = vector.multi_reduction <add>, %70, %cst_49 [1] : vector<8x32xf32> to vector<8xf32>
    %72 = vector.shape_cast %71 : vector<8xf32> to vector<8x1xf32>
    %73 = tpu.reciprocal %72 {approx = true} : vector<8x1xf32> -> vector<8x1xf32>
    %74 = vector.broadcast %73 : vector<8x1xf32> to vector<8x32xf32>
    %75 = arith.mulf %70, %74 : vector<8x32xf32>
    %cst_50 = arith.constant dense<0xFF800000> : vector<8xf32>
    %76 = vector.multi_reduction <maximumf>, %65, %cst_50 [1] : vector<8x32xf32> to vector<8xf32>
    %77 = vector.shape_cast %76 : vector<8xf32> to vector<8x1xf32>
    %78 = vector.broadcast %77 : vector<8x1xf32> to vector<8x32xf32>
    %79 = arith.subf %65, %78 : vector<8x32xf32>
    %80 = math.exp %79 : vector<8x32xf32>
    %cst_51 = arith.constant dense<0.000000e+00> : vector<8xf32>
    %81 = vector.multi_reduction <add>, %80, %cst_51 [1] : vector<8x32xf32> to vector<8xf32>
    %82 = vector.shape_cast %81 : vector<8xf32> to vector<8x1xf32>
    %83 = tpu.reciprocal %82 {approx = true} : vector<8x1xf32> -> vector<8x1xf32>
    %84 = vector.broadcast %83 : vector<8x1xf32> to vector<8x32xf32>
    %85 = arith.mulf %80, %84 : vector<8x32xf32>
    %86 = arith.mulf %75, %1 : vector<8x32xf32>
    %87 = arith.mulf %85, %3 : vector<8x32xf32>
    %88 = arith.addf %86, %87 : vector<8x32xf32>
    %c0_52 = arith.constant 0 : index
    %c0_53 = arith.constant 0 : index
    %c0_54 = arith.constant 0 : index
    %89 = vector.load %arg11[%c0_52, %c0_53, %c0_54] : memref<1x8x32xf32, #tpu.memory_space<vmem>>, vector<1x8x32xf32>
    %90 = vector.shape_cast %89 : vector<1x8x32xf32> to vector<8x32xf32>
    %91 = vector.shape_cast %88 : vector<8x32xf32> to vector<1x8x32xf32>
    tpu.vector_store %arg11[%c0_52, %c0_53, %c0_54], %91 {strides = array<i32>} : memref<1x8x32xf32, #tpu.memory_space<vmem>>, vector<1x8x32xf32>,
    return
  }
  func.func @transform_0(%arg0: i32) -> (i32, i32, i32) {
    %c0_i32 = arith.constant 0 : i32
    %c0_i32_0 = arith.constant 0 : i32
    %c0_i32_1 = arith.constant 0 : i32
    return %arg0, %c0_i32, %c0_i32_0 : i32, i32, i32
  }
  func.func @transform_1(%arg0: i32) -> (i32, i32, i32) {
    %c0_i32 = arith.constant 0 : i32
    %c0_i32_0 = arith.constant 0 : i32
    %c0_i32_1 = arith.constant 0 : i32
    return %arg0, %c0_i32, %c0_i32_0 : i32, i32, i32
  }
  func.func @transform_2(%arg0: i32) -> (i32, i32, i32) {
    %c0_i32 = arith.constant 0 : i32
    %c0_i32_0 = arith.constant 0 : i32
    %c0_i32_1 = arith.constant 0 : i32
    %c0_i32_2 = arith.constant 0 : i32
    return %c0_i32, %c0_i32_0, %c0_i32_1 : i32, i32, i32
  }
  func.func @transform_3(%arg0: i32) -> (i32, i32, i32) {
    %c0_i32 = arith.constant 0 : i32
    %c0_i32_0 = arith.constant 0 : i32
    %c0_i32_1 = arith.constant 0 : i32
    %c0_i32_2 = arith.constant 0 : i32
    return %c0_i32, %c0_i32_0, %c0_i32_1 : i32, i32, i32
  }
  func.func @transform_4(%arg0: i32) -> (i32, i32, i32) {
    %c0_i32 = arith.constant 0 : i32
    %c0_i32_0 = arith.constant 0 : i32
    %c0_i32_1 = arith.constant 0 : i32
    %c0_i32_2 = arith.constant 0 : i32
    return %c0_i32, %c0_i32_0, %c0_i32_1 : i32, i32, i32
  }
  func.func @transform_5(%arg0: i32) -> (i32, i32, i32) {
    %c0_i32 = arith.constant 0 : i32
    %c0_i32_0 = arith.constant 0 : i32
    %c0_i32_1 = arith.constant 0 : i32
    %c0_i32_2 = arith.constant 0 : i32
    return %c0_i32, %c0_i32_0, %c0_i32_1 : i32, i32, i32
  }
  func.func @transform_6(%arg0: i32) -> (i32, i32, i32) {
    %c0_i32 = arith.constant 0 : i32
    %c0_i32_0 = arith.constant 0 : i32
    %c0_i32_1 = arith.constant 0 : i32
    %c0_i32_2 = arith.constant 0 : i32
    return %c0_i32, %c0_i32_0, %c0_i32_1 : i32, i32, i32
  }
  func.func @transform_7(%arg0: i32) -> (i32, i32, i32) {
    %c0_i32 = arith.constant 0 : i32
    %c0_i32_0 = arith.constant 0 : i32
    %c0_i32_1 = arith.constant 0 : i32
    %c0_i32_2 = arith.constant 0 : i32
    return %c0_i32, %c0_i32_0, %c0_i32_1 : i32, i32, i32
  }
  func.func @transform_8(%arg0: i32) -> (i32, i32, i32) {
    %c0_i32 = arith.constant 0 : i32
    %c0_i32_0 = arith.constant 0 : i32
    %c0_i32_1 = arith.constant 0 : i32
    %c0_i32_2 = arith.constant 0 : i32
    return %c0_i32, %c0_i32_0, %c0_i32_1 : i32, i32, i32
  }
  func.func @transform_9(%arg0: i32) -> (i32, i32, i32) {
    %c0_i32 = arith.constant 0 : i32
    %c0_i32_0 = arith.constant 0 : i32
    %c0_i32_1 = arith.constant 0 : i32
    %c0_i32_2 = arith.constant 0 : i32
    return %c0_i32, %c0_i32_0, %c0_i32_1 : i32, i32, i32
  }
  func.func @transform_10(%arg0: i32) -> (i32, i32, i32) {
    %c0_i32 = arith.constant 0 : i32
    %c0_i32_0 = arith.constant 0 : i32
    %c0_i32_1 = arith.constant 0 : i32
    return %arg0, %c0_i32, %c0_i32_0 : i32, i32, i32
  }
}

</mosaic_0001>

<llo_original>
// kernel: tpu_custom_call.1
$region0: #{tpu_custom_call.1}
  #allocation0 [shape = 'u32[]', space=smem, size = 0x4, offset = 0x4, fixed_abs, tag = 'smem constant byte address 0x4 - core index']
  #allocation1 [shape = 'u32[144,128]{1,0:T(1,128)}', space=vmem, size = 0x12000, scoped, tag = 'internal scratch']
  %s0 = inlined_call_operand.vmem [shape: f32[2,8,32], index: 0, kind: input, shape index: {}]
  %s1 = inlined_call_operand.vmem [shape: f32[2,8,32], index: 1, kind: input, shape index: {}]
  %s2 = inlined_call_operand.vmem [shape: bf16[4,32,8], index: 2, kind: input, shape index: {}]
  %s3 = inlined_call_operand.vmem [shape: bf16[4,32,8], index: 3, kind: input, shape index: {}]
  %s4 = inlined_call_operand.vmem [shape: bf16[4,32,8], index: 4, kind: input, shape index: {}]
  %s5 = inlined_call_operand.vmem [shape: bf16[4,8,32], index: 5, kind: input, shape index: {}]
  %s6 = inlined_call_operand.vmem [shape: bf16[4,32,8], index: 6, kind: input, shape index: {}]
  %s7 = inlined_call_operand.vmem [shape: bf16[4,32,8], index: 7, kind: input, shape index: {}]
  %s8 = inlined_call_operand.vmem [shape: bf16[4,32,8], index: 8, kind: input, shape index: {}]
  %s9 = inlined_call_operand.vmem [shape: bf16[4,8,32], index: 9, kind: input, shape index: {}]
  %s10 = inlined_call_operand.hbm [shape: f32[2,8,32], index: 10, kind: output, shape index: {}]
  %s11 = sld [smem:[#allocation0]]
  $region73: #{tpu_custom_call.1} parent=0
    _
  %s13 = ssub.s32 1, %s11
  %s14 = scalar_select 0, %s13, %s11
  $region1: #{tpu_custom_call.1} parent=0
    #allocation2 [shape = 'u8[8192]{0}', space=vmem, size = 0x2000, scoped, tag = 'output window, operand 0']
    #allocation3 [shape = 's32[2]{0}', space=sflag, size = 0x8, scoped, tag = 'scoped memory for tpu_custom_call.1']
    %15 = vsyncpa [#allocation3], 0
    %s16 = scalar_lea.sflag [#allocation3], 1
    %17 = vsyncpa %s16, 0
    loop: start=0, step=1, limit=4
    $region2: #{tpu_custom_call.1} parent=1 // loop_pre_header
      _
    $region3: #{tpu_custom_call.1} parent=1 // loop_header
      %s19 = sphi 0, %s23
      %p20 = scmp.ge.s32.totalorder %s19, 4
      %s29 = sphi 0, %s31
      %s32 = sphi 0, %s29
      %s33 = sphi 0, %s32
      %s49 = sphi 0, %s33
      %s55 = sphi 0, %s57
      %s58 = sphi 0, %s55
      %s59 = sphi 0, %s58
      %s75 = sphi 0, %s59
      %s79 = sphi 0, %s79
      %s81 = sphi 0, %s79
      %s82 = sphi 0, %s81
      %s96 = sphi 0, %s82
      %s100 = sphi 0, %s100
      %s102 = sphi 0, %s100
      %s103 = sphi 0, %s102
      %s117 = sphi 0, %s103
      %s121 = sphi 0, %s121
      %s123 = sphi 0, %s121
      %s124 = sphi 0, %s123
      %s138 = sphi 0, %s124
      %s142 = sphi 0, %s142
      %s144 = sphi 0, %s142
      %s145 = sphi 0, %s144
      %s159 = sphi 0, %s145
      %s163 = sphi 0, %s163
      %s165 = sphi 0, %s163
      %s166 = sphi 0, %s165
      %s180 = sphi 0, %s166
      %s184 = sphi 0, %s184
      %s186 = sphi 0, %s184
      %s187 = sphi 0, %s186
      %s201 = sphi 0, %s187
      %s205 = sphi 0, %s205
      %s207 = sphi 0, %s205
      %s208 = sphi 0, %s207
      %s222 = sphi 0, %s208
      %s226 = sphi 0, %s226
      %s228 = sphi 0, %s226
      %s229 = sphi 0, %s228
      %s243 = sphi 0, %s229
      %s249 = sphi 0, %s251
      %s252 = sphi 0, %s249
      %s253 = sphi 0, %s252
      %s269 = sphi 0, %s253
    $region4: #{tpu_custom_call.1} parent=1 // loop_header_branch
      %22 = sbr.rel (%p20) target = $region8
    $region5: #{tpu_custom_call.1} parent=1 // loop_body
      %s24 = ssub.s32 %s19, 1
      %s25 = ssub.s32 %s19, 2
      %s26 = sadd.s32 %s19, 1
      %s27 = ssub.s32 %s19, %s26
      %p28 = scmp.eq.s32.totalorder %s27, 0
      %s30 = sadd.s32 %s29, 1
      %s31 = scalar_select %p28, %s29, %s30
      %p34 = pneg %p28
      %p35 = scmp.eq.s32.totalorder %s19, 1
      %p36 = por %p34, %p35
      %p37 = scmp.ne.s32.totalorder %s29, %s32
      %p38 = scmp.eq.s32.totalorder %s19, 0
      %p39 = por %p37, %p38
      %p40 = scmp.ne.s32.totalorder %s29, %s32
      %p41 = scmp.eq.s32.totalorder %s24, 1
      %p42 = por %p40, %p41
      %p43 = scmp.ne.s32.totalorder %s32, %s33
      %p44 = scmp.eq.s32.totalorder %s24, 0
      %p45 = por %p43, %p44
      %p46 = scmp.ne.s32.totalorder %s32, %s33
      %p47 = scmp.eq.s32.totalorder %s25, 1
      %p48 = por %p46, %p47
      %p50 = scmp.ne.s32.totalorder %s33, %s49
      %p51 = scmp.eq.s32.totalorder %s25, 0
      %p52 = por %p50, %p51
      %s53 = ssub.s32 %s19, %s26
      %p54 = scmp.eq.s32.totalorder %s53, 0
      %s56 = sadd.s32 %s55, 1
      %s57 = scalar_select %p54, %s55, %s56
      %p60 = pneg %p54
      %p61 = scmp.eq.s32.totalorder %s19, 1
      %p62 = por %p60, %p61
      %p63 = scmp.ne.s32.totalorder %s55, %s58
      %p64 = scmp.eq.s32.totalorder %s19, 0
      %p65 = por %p63, %p64
      %p66 = scmp.ne.s32.totalorder %s55, %s58
      %p67 = scmp.eq.s32.totalorder %s24, 1
      %p68 = por %p66, %p67
      %p69 = scmp.ne.s32.totalorder %s58, %s59
      %p70 = scmp.eq.s32.totalorder %s24, 0
      %p71 = por %p69, %p70
      %p72 = scmp.ne.s32.totalorder %s58, %s59
      %p73 = scmp.eq.s32.totalorder %s25, 1
      %p74 = por %p72, %p73
      %p76 = scmp.ne.s32.totalorder %s59, %s75
      %p77 = scmp.eq.s32.totalorder %s25, 0
      %p78 = por %p76, %p77
      %s80 = sadd.s32 %s79, 1
      %p83 = scmp.eq.s32.totalorder %s19, 1
      %p84 = scmp.ne.s32.totalorder %s79, %s81
      %p85 = scmp.eq.s32.totalorder %s19, 0
      %p86 = por %p84, %p85
      %p87 = scmp.ne.s32.totalorder %s79, %s81
      %p88 = scmp.eq.s32.totalorder %s24, 1
      %p89 = por %p87, %p88
      %p90 = scmp.ne.s32.totalorder %s81, %s82
      %p91 = scmp.eq.s32.totalorder %s24, 0
      %p92 = por %p90, %p91
      %p93 = scmp.ne.s32.totalorder %s81, %s82
      %p94 = scmp.eq.s32.totalorder %s25, 1
      %p95 = por %p93, %p94
      %p97 = scmp.ne.s32.totalorder %s82, %s96
      %p98 = scmp.eq.s32.totalorder %s25, 0
      %p99 = por %p97, %p98
      %s101 = sadd.s32 %s100, 1
      %p104 = scmp.eq.s32.totalorder %s19, 1
      %p105 = scmp.ne.s32.totalorder %s100, %s102
      %p106 = scmp.eq.s32.totalorder %s19, 0
      %p107 = por %p105, %p106
      %p108 = scmp.ne.s32.totalorder %s100, %s102
      %p109 = scmp.eq.s32.totalorder %s24, 1
      %p110 = por %p108, %p109
      %p111 = scmp.ne.s32.totalorder %s102, %s103
      %p112 = scmp.eq.s32.totalorder %s24, 0
      %p113 = por %p111, %p112
      %p114 = scmp.ne.s32.totalorder %s102, %s103
      %p115 = scmp.eq.s32.totalorder %s25, 1
      %p116 = por %p114, %p115
      %p118 = scmp.ne.s32.totalorder %s103, %s117
      %p119 = scmp.eq.s32.totalorder %s25, 0
      %p120 = por %p118, %p119
      %s122 = sadd.s32 %s121, 1
      %p125 = scmp.eq.s32.totalorder %s19, 1
      %p126 = scmp.ne.s32.totalorder %s121, %s123
      %p127 = scmp.eq.s32.totalorder %s19, 0
      %p128 = por %p126, %p127
      %p129 = scmp.ne.s32.totalorder %s121, %s123
      %p130 = scmp.eq.s32.totalorder %s24, 1
      %p131 = por %p129, %p130
      %p132 = scmp.ne.s32.totalorder %s123, %s124
      %p133 = scmp.eq.s32.totalorder %s24, 0
      %p134 = por %p132, %p133
      %p135 = scmp.ne.s32.totalorder %s123, %s124
      %p136 = scmp.eq.s32.totalorder %s25, 1
      %p137 = por %p135, %p136
      %p139 = scmp.ne.s32.totalorder %s124, %s138
      %p140 = scmp.eq.s32.totalorder %s25, 0
      %p141 = por %p139, %p140
      %s143 = sadd.s32 %s142, 1
      %p146 = scmp.eq.s32.totalorder %s19, 1
      %p147 = scmp.ne.s32.totalorder %s142, %s144
      %p148 = scmp.eq.s32.totalorder %s19, 0
      %p149 = por %p147, %p148
      %p150 = scmp.ne.s32.totalorder %s142, %s144
      %p151 = scmp.eq.s32.totalorder %s24, 1
      %p152 = por %p150, %p151
      %p153 = scmp.ne.s32.totalorder %s144, %s145
      %p154 = scmp.eq.s32.totalorder %s24, 0
      %p155 = por %p153, %p154
      %p156 = scmp.ne.s32.totalorder %s144, %s145
      %p157 = scmp.eq.s32.totalorder %s25, 1
      %p158 = por %p156, %p157
      %p160 = scmp.ne.s32.totalorder %s145, %s159
      %p161 = scmp.eq.s32.totalorder %s25, 0
      %p162 = por %p160, %p161
      %s164 = sadd.s32 %s163, 1
      %p167 = scmp.eq.s32.totalorder %s19, 1
      %p168 = scmp.ne.s32.totalorder %s163, %s165
      %p169 = scmp.eq.s32.totalorder %s19, 0
      %p170 = por %p168, %p169
      %p171 = scmp.ne.s32.totalorder %s163, %s165
      %p172 = scmp.eq.s32.totalorder %s24, 1
      %p173 = por %p171, %p172
      %p174 = scmp.ne.s32.totalorder %s165, %s166
      %p175 = scmp.eq.s32.totalorder %s24, 0
      %p176 = por %p174, %p175
      %p177 = scmp.ne.s32.totalorder %s165, %s166
      %p178 = scmp.eq.s32.totalorder %s25, 1
      %p179 = por %p177, %p178
      %p181 = scmp.ne.s32.totalorder %s166, %s180
      %p182 = scmp.eq.s32.totalorder %s25, 0
      %p183 = por %p181, %p182
      %s185 = sadd.s32 %s184, 1
      %p188 = scmp.eq.s32.totalorder %s19, 1
      %p189 = scmp.ne.s32.totalorder %s184, %s186
      %p190 = scmp.eq.s32.totalorder %s19, 0
      %p191 = por %p189, %p190
      %p192 = scmp.ne.s32.totalorder %s184, %s186
      %p193 = scmp.eq.s32.totalorder %s24, 1
      %p194 = por %p192, %p193
      %p195 = scmp.ne.s32.totalorder %s186, %s187
      %p196 = scmp.eq.s32.totalorder %s24, 0
      %p197 = por %p195, %p196
      %p198 = scmp.ne.s32.totalorder %s186, %s187
      %p199 = scmp.eq.s32.totalorder %s25, 1
      %p200 = por %p198, %p199
      %p202 = scmp.ne.s32.totalorder %s187, %s201
      %p203 = scmp.eq.s32.totalorder %s25, 0
      %p204 = por %p202, %p203
      %s206 = sadd.s32 %s205, 1
      %p209 = scmp.eq.s32.totalorder %s19, 1
      %p210 = scmp.ne.s32.totalorder %s205, %s207
      %p211 = scmp.eq.s32.totalorder %s19, 0
      %p212 = por %p210, %p211
      %p213 = scmp.ne.s32.totalorder %s205, %s207
      %p214 = scmp.eq.s32.totalorder %s24, 1
      %p215 = por %p213, %p214
      %p216 = scmp.ne.s32.totalorder %s207, %s208
      %p217 = scmp.eq.s32.totalorder %s24, 0
      %p218 = por %p216, %p217
      %p219 = scmp.ne.s32.totalorder %s207, %s208
      %p220 = scmp.eq.s32.totalorder %s25, 1
      %p221 = por %p219, %p220
      %p223 = scmp.ne.s32.totalorder %s208, %s222
      %p224 = scmp.eq.s32.totalorder %s25, 0
      %p225 = por %p223, %p224
      %s227 = sadd.s32 %s226, 1
      %p230 = scmp.eq.s32.totalorder %s19, 1
      %p231 = scmp.ne.s32.totalorder %s226, %s228
      %p232 = scmp.eq.s32.totalorder %s19, 0
      %p233 = por %p231, %p232
      %p234 = scmp.ne.s32.totalorder %s226, %s228
      %p235 = scmp.eq.s32.totalorder %s24, 1
      %p236 = por %p234, %p235
      %p237 = scmp.ne.s32.totalorder %s228, %s229
      %p238 = scmp.eq.s32.totalorder %s24, 0
      %p239 = por %p237, %p238
      %p240 = scmp.ne.s32.totalorder %s228, %s229
      %p241 = scmp.eq.s32.totalorder %s25, 1
      %p242 = por %p240, %p241
      %p244 = scmp.ne.s32.totalorder %s229, %s243
      %p245 = scmp.eq.s32.totalorder %s25, 0
      %p246 = por %p244, %p245
      %s247 = ssub.s32 %s19, %s26
      %p248 = scmp.eq.s32.totalorder %s247, 0
      %s250 = sadd.s32 %s249, 1
      %s251 = scalar_select %p248, %s249, %s250
      %p254 = pneg %p248
      %p255 = scmp.eq.s32.totalorder %s19, 1
      %p256 = por %p254, %p255
      %p257 = scmp.ne.s32.totalorder %s249, %s252
      %p258 = scmp.eq.s32.totalorder %s19, 0
      %p259 = por %p257, %p258
      %p260 = scmp.ne.s32.totalorder %s249, %s252
      %p261 = scmp.eq.s32.totalorder %s24, 1
      %p262 = por %p260, %p261
      %p263 = scmp.ne.s32.totalorder %s252, %s253
      %p264 = scmp.eq.s32.totalorder %s24, 0
      %p265 = por %p263, %p264
      %p266 = scmp.ne.s32.totalorder %s252, %s253
      %p267 = scmp.eq.s32.totalorder %s25, 1
      %p268 = por %p266, %p267
      %p270 = scmp.ne.s32.totalorder %s253, %s269
      %p271 = scmp.eq.s32.totalorder %s25, 0
      %p272 = por %p270, %p271
      %p273 = scmp.le.s32.totalorder 1, %s19
      %p274 = scmp.lt.s32.totalorder %s19, 3
      %p275 = pnand %p273, %p274
      %p276 = pneg %p275
      // Predicated region
      $region9: #{tpu_custom_call.1} parent=5 // pred_check
        _
      $region10: #{tpu_custom_call.1} parent=5 // pred_check_branch
        %278 = sbr.rel (%p275) target = $region12
      $region11: #{tpu_custom_call.1} parent=5 // pred_region
        %s279 = ssub.s32 %s19, 1
        // Predicated region
        $region13: #{tpu_custom_call.1} parent=11 // pred_check
          %p280 = pneg %p92
        $region14: #{tpu_custom_call.1} parent=11 // pred_check_branch
          %282 = sbr.rel (%p280) target = $region16
        $region15: #{tpu_custom_call.1} parent=11 // pred_region
          _
        $region16: #{tpu_custom_call.1} parent=11 // pred_fallthru
          _
        // Predicated region
        $region17: #{tpu_custom_call.1} parent=11 // pred_check
          %p283 = pneg %p113
        $region18: #{tpu_custom_call.1} parent=11 // pred_check_branch
          %285 = sbr.rel (%p283) target = $region20
        $region19: #{tpu_custom_call.1} parent=11 // pred_region
          _
        $region20: #{tpu_custom_call.1} parent=11 // pred_fallthru
          _
        // Predicated region
        $region21: #{tpu_custom_call.1} parent=11 // pred_check
          %p286 = pneg %p134
        $region22: #{tpu_custom_call.1} parent=11 // pred_check_branch
          %288 = sbr.rel (%p286) target = $region24
        $region23: #{tpu_custom_call.1} parent=11 // pred_region
          _
        $region24: #{tpu_custom_call.1} parent=11 // pred_fallthru
          _
        // Predicated region
        $region25: #{tpu_custom_call.1} parent=11 // pred_check
          %p289 = pneg %p155
        $region26: #{tpu_custom_call.1} parent=11 // pred_check_branch
          %291 = sbr.rel (%p289) target = $region28
        $region27: #{tpu_custom_call.1} parent=11 // pred_region
          _
        $region28: #{tpu_custom_call.1} parent=11 // pred_fallthru
          _
        // Predicated region
        $region29: #{tpu_custom_call.1} parent=11 // pred_check
          %p292 = pneg %p176
        $region30: #{tpu_custom_call.1} parent=11 // pred_check_branch
          %294 = sbr.rel (%p292) target = $region32
        $region31: #{tpu_custom_call.1} parent=11 // pred_region
          _
        $region32: #{tpu_custom_call.1} parent=11 // pred_fallthru
          _
        // Predicated region
        $region33: #{tpu_custom_call.1} parent=11 // pred_check
          %p295 = pneg %p197
        $region34: #{tpu_custom_call.1} parent=11 // pred_check_branch
          %297 = sbr.rel (%p295) target = $region36
        $region35: #{tpu_custom_call.1} parent=11 // pred_region
          _
        $region36: #{tpu_custom_call.1} parent=11 // pred_fallthru
          _
        // Predicated region
        $region37: #{tpu_custom_call.1} parent=11 // pred_check
          %p298 = pneg %p218
        $region38: #{tpu_custom_call.1} parent=11 // pred_check_branch
          %300 = sbr.rel (%p298) target = $region40
        $region39: #{tpu_custom_call.1} parent=11 // pred_region
          _
        $region40: #{tpu_custom_call.1} parent=11 // pred_fallthru
          _
        // Predicated region
        $region41: #{tpu_custom_call.1} parent=11 // pred_check
          %p301 = pneg %p239
        $region42: #{tpu_custom_call.1} parent=11 // pred_check_branch
          %303 = sbr.rel (%p301) target = $region44
        $region43: #{tpu_custom_call.1} parent=11 // pred_region
          _
        $region44: #{tpu_custom_call.1} parent=11 // pred_fallthru
          _
      $region12: #{tpu_custom_call.1} parent=5 // pred_fallthru
        _
      %p304 = scmp.lt.s32.totalorder %s19, 2
      // Predicated region
      $region45: #{tpu_custom_call.1} parent=5 // pred_check
        %p305 = pneg %p304
      $region46: #{tpu_custom_call.1} parent=5 // pred_check_branch
        %307 = sbr.rel (%p305) target = $region48
      $region47: #{tpu_custom_call.1} parent=5 // pred_region
        // Predicated region
        $region49: #{tpu_custom_call.1} parent=47 // pred_check
          %p308 = pneg %p39
        $region50: #{tpu_custom_call.1} parent=47 // pred_check_branch
          %310 = sbr.rel (%p308) target = $region52
        $region51: #{tpu_custom_call.1} parent=47 // pred_region
          %p311 = scmp.lt.s32.totalorder %s19, 1
          %s312 = scalar_select %p311, %s19, 1
          %s313 = smul.addr %s312, 8
          %s314 = scalar_lea.vmem %s0, %s313
        $region52: #{tpu_custom_call.1} parent=47 // pred_fallthru
          _
        // Predicated region
        $region53: #{tpu_custom_call.1} parent=47 // pred_check
          %p315 = pneg %p65
        $region54: #{tpu_custom_call.1} parent=47 // pred_check_branch
          %317 = sbr.rel (%p315) target = $region56
        $region55: #{tpu_custom_call.1} parent=47 // pred_region
          %p318 = scmp.lt.s32.totalorder %s19, 1
          %s319 = scalar_select %p318, %s19, 1
          %s320 = smul.addr %s319, 8
          %s321 = scalar_lea.vmem %s1, %s320
        $region56: #{tpu_custom_call.1} parent=47 // pred_fallthru
          _
      $region48: #{tpu_custom_call.1} parent=5 // pred_fallthru
        _
      %p322 = scmp.le.s32.totalorder 1, %s19
      %p323 = scmp.lt.s32.totalorder %s19, 3
      %p324 = pnand %p322, %p323
      %p325 = pneg %p324
      // Predicated region
      $region57: #{tpu_custom_call.1} parent=5 // pred_check
        _
      $region58: #{tpu_custom_call.1} parent=5 // pred_check_branch
        %327 = sbr.rel (%p324) target = $region60
      $region59: #{tpu_custom_call.1} parent=5 // pred_region
        %s328 = ssub.s32 %s19, 1
        %p329 = scmp.lt.s32.totalorder %s24, 1
        %s330 = scalar_select %p329, %s24, 1
        %s331 = smul.addr %s330, 8
        %s332 = scalar_lea.vmem %s0, %s331
        %p333 = pneg %p45
        %p334 = pneg %p42
        %p335 = scmp.lt.s32.totalorder %s24, 1
        %s336 = scalar_select %p335, %s24, 1
        %s337 = smul.addr %s336, 8
        %s338 = scalar_lea.vmem %s1, %s337
        %p339 = pneg %p71
        %p340 = pneg %p68
        %p341 = pneg %p92
        %p342 = pneg %p89
        %p343 = pneg %p113
        %p344 = pneg %p110
        %p345 = pneg %p134
        %p346 = pneg %p131
        %p347 = pneg %p155
        %p348 = pneg %p152
        %p349 = pneg %p176
        %p350 = pneg %p173
        %p351 = pneg %p197
        %p352 = pneg %p194
        %p353 = pneg %p218
        %p354 = pneg %p215
        %p355 = pneg %p239
        %p356 = pneg %p236
        %p357 = pneg %p265
        %p358 = pneg %p262
        %s359 = sand.u32 %s252, 1
        %s360 = scalar_lea.sflag [#allocation3], %s359
        %s361 = sand.u32 %s252, 1
        %s362 = smul.addr %s361, 8
        %s363 = scalar_lea.vmem [#allocation2], %s362
        %p364 = scmp.lt.s32.totalorder %s24, 1
        %s365 = scalar_select %p364, %s24, 1
        %s366 = smul.addr %s365, 8
        %s367 = scalar_lea.vmem %s0, %s366
        %p368 = scmp.lt.s32.totalorder %s24, 1
        %s369 = scalar_select %p368, %s24, 1
        %s370 = smul.addr %s369, 8
        %s371 = scalar_lea.vmem %s1, %s370
        %v373 = vld [vmem:[%s367] sm:$0xff]
        %v374 = vld [vmem:[%s371] sm:$0xff]
        %v375 = vpack.c.bf16 %v373, %v373
        %v376 = vpack.c.bf16 %v374, %v374
        %v377 = vld [vmem:[%s2] sm:$0xf]
        %v378 = vld [vmem:[%s2 + $0x4] sm:$0xf]
        %v379 = vld [vmem:[%s2 + $0x8] sm:$0xf]
        %v380 = vld [vmem:[%s2 + $0xc] sm:$0xf]
        %v381 = vld [vmem:[%s2 + $0x10] sm:$0xf]
        %v382 = vld [vmem:[%s2 + $0x14] sm:$0xf]
        %v383 = vld [vmem:[%s2 + $0x18] sm:$0xf]
        %v384 = vld [vmem:[%s2 + $0x1c] sm:$0xf]
        %v385 = vld [vmem:[%s2 + $0x20] sm:$0xf]
        %v386 = vld [vmem:[%s2 + $0x24] sm:$0xf]
        %v387 = vld [vmem:[%s2 + $0x28] sm:$0xf]
        %v388 = vld [vmem:[%s2 + $0x2c] sm:$0xf]
        %v389 = vld [vmem:[%s2 + $0x30] sm:$0xf]
        %v390 = vld [vmem:[%s2 + $0x34] sm:$0xf]
        %v391 = vld [vmem:[%s2 + $0x38] sm:$0xf]
        %v392 = vld [vmem:[%s2 + $0x3c] sm:$0xf]
        %v397 = vunpack.c.l.b16 %v377
        %v398 = vunpack.c.l.b16 %v378
        %v399 = vunpack.c.l.b16 %v379
        %v400 = vunpack.c.l.b16 %v380
        %v401 = vpack.c.b16 %v398, %v397
        %v402 = vpack.c.b16 %v400, %v399
        %vm405 = vcmask 261120
        %v407 = vsel %vm405, %v375, 0
        %409 = vmatprep.subr.bf16.mxu0 0
        %410 = vmatpush1.bf16.msra.mxu0 %v401
        %411 = vmatprep.subr.bf16.mxu0 0
        %412 = vmatpush1.bf16.msra.mxu0 %v402
        %413 = vmatprep.subr.bf16.mxu0 0
        %414 = vmatpush1.bf16.msra.mxu0 0
        %415 = vmatprep.subr.bf16.mxu0 0
        %416 = vmatpush1.bf16.msra.mxu0 0
        %417 = vmatprep.subr.bf16.mxu0 0
        %418 = vmatpush1.bf16.msra.mxu0 0
        %419 = vmatprep.subr.bf16.mxu0 0
        %420 = vmatpush1.bf16.msra.mxu0 0
        %421 = vmatprep.subr.bf16.mxu0 0
        %422 = vmatpush1.bf16.msra.mxu0 0
        %423 = vmatprep.subr.bf16.mxu0 0
        %424 = vmatpush1.bf16.msra.mxu0 0
        %425 = vmatprep.subr.bf16.mxu0 0
        %426 = vmatpush1.bf16.msra.mxu0 0
        %427 = vmatprep.subr.bf16.mxu0 0
        %428 = vmatpush1.bf16.msra.mxu0 0
        %429 = vmatprep.subr.bf16.mxu0 0
        %430 = vmatpush1.bf16.msra.mxu0 0
        %431 = vmatprep.subr.bf16.mxu0 0
        %432 = vmatpush1.bf16.msra.mxu0 0
        %433 = vmatprep.subr.bf16.mxu0 0
        %434 = vmatpush1.bf16.msra.mxu0 0
        %435 = vmatprep.subr.bf16.mxu0 0
        %436 = vmatpush1.bf16.msra.mxu0 0
        %437 = vmatprep.subr.bf16.mxu0 0
        %438 = vmatpush1.bf16.msra.mxu0 0
        %439 = vmatprep.subr.bf16.mxu0 0
        %440 = vmatpush1.bf16.msra.mxu0 0
        %441 = vmatprep.mubr.bf16.mxu0 0
        %442 = vmatmul.mubr.bf16.gmra.mrb[0].mxu0 %v407
        %v443 = vpop.f32.mrb[0].mxu0
        %v444 = vadd.f32 0.0, %v443
        %v445 = vpop.f32.mrb[0].mxu0
        %v446 = vpop.f32.mrb[0].mxu0
        %v447 = vpop.f32.mrb[0].mxu0
        %448 = vdwg.mxu0
        %v453 = vunpack.c.l.b16 %v381
        %v454 = vunpack.c.l.b16 %v382
        %v455 = vunpack.c.l.b16 %v383
        %v456 = vunpack.c.l.b16 %v384
        %v457 = vpack.c.b16 %v454, %v453
        %v458 = vpack.c.b16 %v456, %v455
        %461 = vmatprep.subr.bf16.mxu0 0
        %462 = vmatpush1.bf16.msra.mxu0 %v457
        %463 = vmatprep.subr.bf16.mxu0 0
        %464 = vmatpush1.bf16.msra.mxu0 %v458
        %465 = vmatprep.subr.bf16.mxu0 0
        %466 = vmatpush1.bf16.msra.mxu0 0
        %467 = vmatprep.subr.bf16.mxu0 0
        %468 = vmatpush1.bf16.msra.mxu0 0
        %469 = vmatprep.subr.bf16.mxu0 0
        %470 = vmatpush1.bf16.msra.mxu0 0
        %471 = vmatprep.subr.bf16.mxu0 0
        %472 = vmatpush1.bf16.msra.mxu0 0
        %473 = vmatprep.subr.bf16.mxu0 0
        %474 = vmatpush1.bf16.msra.mxu0 0
        %475 = vmatprep.subr.bf16.mxu0 0
        %476 = vmatpush1.bf16.msra.mxu0 0
        %477 = vmatprep.subr.bf16.mxu0 0
        %478 = vmatpush1.bf16.msra.mxu0 0
        %479 = vmatprep.subr.bf16.mxu0 0
        %480 = vmatpush1.bf16.msra.mxu0 0
        %481 = vmatprep.subr.bf16.mxu0 0
        %482 = vmatpush1.bf16.msra.mxu0 0
        %483 = vmatprep.subr.bf16.mxu0 0
        %484 = vmatpush1.bf16.msra.mxu0 0
        %485 = vmatprep.subr.bf16.mxu0 0
        %486 = vmatpush1.bf16.msra.mxu0 0
        %487 = vmatprep.subr.bf16.mxu0 0
        %488 = vmatpush1.bf16.msra.mxu0 0
        %489 = vmatprep.subr.bf16.mxu0 0
        %490 = vmatpush1.bf16.msra.mxu0 0
        %491 = vmatprep.subr.bf16.mxu0 0
        %492 = vmatpush1.bf16.msra.mxu0 0
        %493 = vmatprep.mubr.bf16.mxu0 0
        %494 = vmatmul.mubr.bf16.gmra.mrb[0].mxu0 %v407
        %v495 = vpop.f32.mrb[0].mxu0
        %v496 = vadd.f32 0.0, %v495
        %v497 = vpop.f32.mrb[0].mxu0
        %v498 = vpop.f32.mrb[0].mxu0
        %v499 = vpop.f32.mrb[0].mxu0
        %500 = vdwg.mxu0
        %v505 = vunpack.c.l.b16 %v385
        %v506 = vunpack.c.l.b16 %v386
        %v507 = vunpack.c.l.b16 %v387
        %v508 = vunpack.c.l.b16 %v388
        %v509 = vpack.c.b16 %v506, %v505
        %v510 = vpack.c.b16 %v508, %v507
        %513 = vmatprep.subr.bf16.mxu0 0
        %514 = vmatpush1.bf16.msra.mxu0 %v509
        %515 = vmatprep.subr.bf16.mxu0 0
        %516 = vmatpush1.bf16.msra.mxu0 %v510
        %517 = vmatprep.subr.bf16.mxu0 0
        %518 = vmatpush1.bf16.msra.mxu0 0
        %519 = vmatprep.subr.bf16.mxu0 0
        %520 = vmatpush1.bf16.msra.mxu0 0
        %521 = vmatprep.subr.bf16.mxu0 0
        %522 = vmatpush1.bf16.msra.mxu0 0
        %523 = vmatprep.subr.bf16.mxu0 0
        %524 = vmatpush1.bf16.msra.mxu0 0
        %525 = vmatprep.subr.bf16.mxu0 0
        %526 = vmatpush1.bf16.msra.mxu0 0
        %527 = vmatprep.subr.bf16.mxu0 0
        %528 = vmatpush1.bf16.msra.mxu0 0
        %529 = vmatprep.subr.bf16.mxu0 0
        %530 = vmatpush1.bf16.msra.mxu0 0
        %531 = vmatprep.subr.bf16.mxu0 0
        %532 = vmatpush1.bf16.msra.mxu0 0
        %533 = vmatprep.subr.bf16.mxu0 0
        %534 = vmatpush1.bf16.msra.mxu0 0
        %535 = vmatprep.subr.bf16.mxu0 0
        %536 = vmatpush1.bf16.msra.mxu0 0
        %537 = vmatprep.subr.bf16.mxu0 0
        %538 = vmatpush1.bf16.msra.mxu0 0
        %539 = vmatprep.subr.bf16.mxu0 0
        %540 = vmatpush1.bf16.msra.mxu0 0
        %541 = vmatprep.subr.bf16.mxu0 0
        %542 = vmatpush1.bf16.msra.mxu0 0
        %543 = vmatprep.subr.bf16.mxu0 0
        %544 = vmatpush1.bf16.msra.mxu0 0
        %545 = vmatprep.mubr.bf16.mxu0 0
        %546 = vmatmul.mubr.bf16.gmra.mrb[0].mxu0 %v407
        %v547 = vpop.f32.mrb[0].mxu0
        %v548 = vadd.f32 0.0, %v547
        %v549 = vpop.f32.mrb[0].mxu0
        %v550 = vpop.f32.mrb[0].mxu0
        %v551 = vpop.f32.mrb[0].mxu0
        %552 = vdwg.mxu0
        %v557 = vunpack.c.l.b16 %v389
        %v558 = vunpack.c.l.b16 %v390
        %v559 = vunpack.c.l.b16 %v391
        %v560 = vunpack.c.l.b16 %v392
        %v561 = vpack.c.b16 %v558, %v557
        %v562 = vpack.c.b16 %v560, %v559
        %565 = vmatprep.subr.bf16.mxu0 0
        %566 = vmatpush1.bf16.msra.mxu0 %v561
        %567 = vmatprep.subr.bf16.mxu0 0
        %568 = vmatpush1.bf16.msra.mxu0 %v562
        %569 = vmatprep.subr.bf16.mxu0 0
        %570 = vmatpush1.bf16.msra.mxu0 0
        %571 = vmatprep.subr.bf16.mxu0 0
        %572 = vmatpush1.bf16.msra.mxu0 0
        %573 = vmatprep.subr.bf16.mxu0 0
        %574 = vmatpush1.bf16.msra.mxu0 0
        %575 = vmatprep.subr.bf16.mxu0 0
        %576 = vmatpush1.bf16.msra.mxu0 0
        %577 = vmatprep.subr.bf16.mxu0 0
        %578 = vmatpush1.bf16.msra.mxu0 0
        %579 = vmatprep.subr.bf16.mxu0 0
        %580 = vmatpush1.bf16.msra.mxu0 0
        %581 = vmatprep.subr.bf16.mxu0 0
        %582 = vmatpush1.bf16.msra.mxu0 0
        %583 = vmatprep.subr.bf16.mxu0 0
        %584 = vmatpush1.bf16.msra.mxu0 0
        %585 = vmatprep.subr.bf16.mxu0 0
        %586 = vmatpush1.bf16.msra.mxu0 0
        %587 = vmatprep.subr.bf16.mxu0 0
        %588 = vmatpush1.bf16.msra.mxu0 0
        %589 = vmatprep.subr.bf16.mxu0 0
        %590 = vmatpush1.bf16.msra.mxu0 0
        %591 = vmatprep.subr.bf16.mxu0 0
        %592 = vmatpush1.bf16.msra.mxu0 0
        %593 = vmatprep.subr.bf16.mxu0 0
        %594 = vmatpush1.bf16.msra.mxu0 0
        %595 = vmatprep.subr.bf16.mxu0 0
        %596 = vmatpush1.bf16.msra.mxu0 0
        %597 = vmatprep.mubr.bf16.mxu0 0
        %598 = vmatmul.mubr.bf16.gmra.mrb[0].mxu0 %v407
        %v599 = vpop.f32.mrb[0].mxu0
        %v600 = vadd.f32 0.0, %v599
        %v601 = vpop.f32.mrb[0].mxu0
        %v602 = vpop.f32.mrb[0].mxu0
        %v603 = vpop.f32.mrb[0].mxu0
        %604 = vdwg.mxu0
        %v605 = vld [vmem:[%s3] sm:$0xf]
        %v606 = vld [vmem:[%s3 + $0x4] sm:$0xf]
        %v607 = vld [vmem:[%s3 + $0x8] sm:$0xf]
        %v608 = vld [vmem:[%s3 + $0xc] sm:$0xf]
        %v609 = vld [vmem:[%s3 + $0x10] sm:$0xf]
        %v610 = vld [vmem:[%s3 + $0x14] sm:$0xf]
        %v611 = vld [vmem:[%s3 + $0x18] sm:$0xf]
        %v612 = vld [vmem:[%s3 + $0x1c] sm:$0xf]
        %v613 = vld [vmem:[%s3 + $0x20] sm:$0xf]
        %v614 = vld [vmem:[%s3 + $0x24] sm:$0xf]
        %v615 = vld [vmem:[%s3 + $0x28] sm:$0xf]
        %v616 = vld [vmem:[%s3 + $0x2c] sm:$0xf]
        %v617 = vld [vmem:[%s3 + $0x30] sm:$0xf]
        %v618 = vld [vmem:[%s3 + $0x34] sm:$0xf]
        %v619 = vld [vmem:[%s3 + $0x38] sm:$0xf]
        %v620 = vld [vmem:[%s3 + $0x3c] sm:$0xf]
        %v625 = vunpack.c.l.b16 %v605
        %v626 = vunpack.c.l.b16 %v606
        %v627 = vunpack.c.l.b16 %v607
        %v628 = vunpack.c.l.b16 %v608
        %v629 = vpack.c.b16 %v626, %v625
        %v630 = vpack.c.b16 %v628, %v627
        %633 = vmatprep.subr.bf16.mxu0 0
        %634 = vmatpush1.bf16.msra.mxu0 %v629
        %635 = vmatprep.subr.bf16.mxu0 0
        %636 = vmatpush1.bf16.msra.mxu0 %v630
        %637 = vmatprep.subr.bf16.mxu0 0
        %638 = vmatpush1.bf16.msra.mxu0 0
        %639 = vmatprep.subr.bf16.mxu0 0
        %640 = vmatpush1.bf16.msra.mxu0 0
        %641 = vmatprep.subr.bf16.mxu0 0
        %642 = vmatpush1.bf16.msra.mxu0 0
        %643 = vmatprep.subr.bf16.mxu0 0
        %644 = vmatpush1.bf16.msra.mxu0 0
        %645 = vmatprep.subr.bf16.mxu0 0
        %646 = vmatpush1.bf16.msra.mxu0 0
        %647 = vmatprep.subr.bf16.mxu0 0
        %648 = vmatpush1.bf16.msra.mxu0 0
        %649 = vmatprep.subr.bf16.mxu0 0
        %650 = vmatpush1.bf16.msra.mxu0 0
        %651 = vmatprep.subr.bf16.mxu0 0
        %652 = vmatpush1.bf16.msra.mxu0 0
        %653 = vmatprep.subr.bf16.mxu0 0
        %654 = vmatpush1.bf16.msra.mxu0 0
        %655 = vmatprep.subr.bf16.mxu0 0
        %656 = vmatpush1.bf16.msra.mxu0 0
        %657 = vmatprep.subr.bf16.mxu0 0
        %658 = vmatpush1.bf16.msra.mxu0 0
        %659 = vmatprep.subr.bf16.mxu0 0
        %660 = vmatpush1.bf16.msra.mxu0 0
        %661 = vmatprep.subr.bf16.mxu0 0
        %662 = vmatpush1.bf16.msra.mxu0 0
        %663 = vmatprep.subr.bf16.mxu0 0
        %664 = vmatpush1.bf16.msra.mxu0 0
        %665 = vmatprep.mubr.bf16.mxu0 0
        %666 = vmatmul.mubr.bf16.gmra.mrb[0].mxu0 %v407
        %v667 = vpop.f32.mrb[0].mxu0
        %v668 = vadd.f32 0.0, %v667
        %v669 = vpop.f32.mrb[0].mxu0
        %v670 = vpop.f32.mrb[0].mxu0
        %v671 = vpop.f32.mrb[0].mxu0
        %672 = vdwg.mxu0
        %v677 = vunpack.c.l.b16 %v609
        %v678 = vunpack.c.l.b16 %v610
        %v679 = vunpack.c.l.b16 %v611
        %v680 = vunpack.c.l.b16 %v612
        %v681 = vpack.c.b16 %v678, %v677
        %v682 = vpack.c.b16 %v680, %v679
        %685 = vmatprep.subr.bf16.mxu0 0
        %686 = vmatpush1.bf16.msra.mxu0 %v681
        %687 = vmatprep.subr.bf16.mxu0 0
        %688 = vmatpush1.bf16.msra.mxu0 %v682
        %689 = vmatprep.subr.bf16.mxu0 0
        %690 = vmatpush1.bf16.msra.mxu0 0
        %691 = vmatprep.subr.bf16.mxu0 0
        %692 = vmatpush1.bf16.msra.mxu0 0
        %693 = vmatprep.subr.bf16.mxu0 0
        %694 = vmatpush1.bf16.msra.mxu0 0
        %695 = vmatprep.subr.bf16.mxu0 0
        %696 = vmatpush1.bf16.msra.mxu0 0
        %697 = vmatprep.subr.bf16.mxu0 0
        %698 = vmatpush1.bf16.msra.mxu0 0
        %699 = vmatprep.subr.bf16.mxu0 0
        %700 = vmatpush1.bf16.msra.mxu0 0
        %701 = vmatprep.subr.bf16.mxu0 0
        %702 = vmatpush1.bf16.msra.mxu0 0
        %703 = vmatprep.subr.bf16.mxu0 0
        %704 = vmatpush1.bf16.msra.mxu0 0
        %705 = vmatprep.subr.bf16.mxu0 0
        %706 = vmatpush1.bf16.msra.mxu0 0
        %707 = vmatprep.subr.bf16.mxu0 0
        %708 = vmatpush1.bf16.msra.mxu0 0
        %709 = vmatprep.subr.bf16.mxu0 0
        %710 = vmatpush1.bf16.msra.mxu0 0
        %711 = vmatprep.subr.bf16.mxu0 0
        %712 = vmatpush1.bf16.msra.mxu0 0
        %713 = vmatprep.subr.bf16.mxu0 0
        %714 = vmatpush1.bf16.msra.mxu0 0
        %715 = vmatprep.subr.bf16.mxu0 0
        %716 = vmatpush1.bf16.msra.mxu0 0
        %717 = vmatprep.mubr.bf16.mxu0 0
        %718 = vmatmul.mubr.bf16.gmra.mrb[0].mxu0 %v407
        %v719 = vpop.f32.mrb[0].mxu0
        %v720 = vadd.f32 0.0, %v719
        %v721 = vpop.f32.mrb[0].mxu0
        %v722 = vpop.f32.mrb[0].mxu0
        %v723 = vpop.f32.mrb[0].mxu0
        %724 = vdwg.mxu0
        %v729 = vunpack.c.l.b16 %v613
        %v730 = vunpack.c.l.b16 %v614
        %v731 = vunpack.c.l.b16 %v615
        %v732 = vunpack.c.l.b16 %v616
        %v733 = vpack.c.b16 %v730, %v729
        %v734 = vpack.c.b16 %v732, %v731
        %737 = vmatprep.subr.bf16.mxu0 0
        %738 = vmatpush1.bf16.msra.mxu0 %v733
        %739 = vmatprep.subr.bf16.mxu0 0
        %740 = vmatpush1.bf16.msra.mxu0 %v734
        %741 = vmatprep.subr.bf16.mxu0 0
        %742 = vmatpush1.bf16.msra.mxu0 0
        %743 = vmatprep.subr.bf16.mxu0 0
        %744 = vmatpush1.bf16.msra.mxu0 0
        %745 = vmatprep.subr.bf16.mxu0 0
        %746 = vmatpush1.bf16.msra.mxu0 0
        %747 = vmatprep.subr.bf16.mxu0 0
        %748 = vmatpush1.bf16.msra.mxu0 0
        %749 = vmatprep.subr.bf16.mxu0 0
        %750 = vmatpush1.bf16.msra.mxu0 0
        %751 = vmatprep.subr.bf16.mxu0 0
        %752 = vmatpush1.bf16.msra.mxu0 0
        %753 = vmatprep.subr.bf16.mxu0 0
        %754 = vmatpush1.bf16.msra.mxu0 0
        %755 = vmatprep.subr.bf16.mxu0 0
        %756 = vmatpush1.bf16.msra.mxu0 0
        %757 = vmatprep.subr.bf16.mxu0 0
        %758 = vmatpush1.bf16.msra.mxu0 0
        %759 = vmatprep.subr.bf16.mxu0 0
        %760 = vmatpush1.bf16.msra.mxu0 0
        %761 = vmatprep.subr.bf16.mxu0 0
        %762 = vmatpush1.bf16.msra.mxu0 0
        %763 = vmatprep.subr.bf16.mxu0 0
        %764 = vmatpush1.bf16.msra.mxu0 0
        %765 = vmatprep.subr.bf16.mxu0 0
        %766 = vmatpush1.bf16.msra.mxu0 0
        %767 = vmatprep.subr.bf16.mxu0 0
        %768 = vmatpush1.bf16.msra.mxu0 0
        %769 = vmatprep.mubr.bf16.mxu0 0
        %770 = vmatmul.mubr.bf16.gmra.mrb[0].mxu0 %v407
        %v771 = vpop.f32.mrb[0].mxu0
        %v772 = vadd.f32 0.0, %v771
        %v773 = vpop.f32.mrb[0].mxu0
        %v774 = vpop.f32.mrb[0].mxu0
        %v775 = vpop.f32.mrb[0].mxu0
        %776 = vdwg.mxu0
        %v781 = vunpack.c.l.b16 %v617
        %v782 = vunpack.c.l.b16 %v618
        %v783 = vunpack.c.l.b16 %v619
        %v784 = vunpack.c.l.b16 %v620
        %v785 = vpack.c.b16 %v782, %v781
        %v786 = vpack.c.b16 %v784, %v783
        %789 = vmatprep.subr.bf16.mxu0 0
        %790 = vmatpush1.bf16.msra.mxu0 %v785
        %791 = vmatprep.subr.bf16.mxu0 0
        %792 = vmatpush1.bf16.msra.mxu0 %v786
        %793 = vmatprep.subr.bf16.mxu0 0
        %794 = vmatpush1.bf16.msra.mxu0 0
        %795 = vmatprep.subr.bf16.mxu0 0
        %796 = vmatpush1.bf16.msra.mxu0 0
        %797 = vmatprep.subr.bf16.mxu0 0
        %798 = vmatpush1.bf16.msra.mxu0 0
        %799 = vmatprep.subr.bf16.mxu0 0
        %800 = vmatpush1.bf16.msra.mxu0 0
        %801 = vmatprep.subr.bf16.mxu0 0
        %802 = vmatpush1.bf16.msra.mxu0 0
        %803 = vmatprep.subr.bf16.mxu0 0
        %804 = vmatpush1.bf16.msra.mxu0 0
        %805 = vmatprep.subr.bf16.mxu0 0
        %806 = vmatpush1.bf16.msra.mxu0 0
        %807 = vmatprep.subr.bf16.mxu0 0
        %808 = vmatpush1.bf16.msra.mxu0 0
        %809 = vmatprep.subr.bf16.mxu0 0
        %810 = vmatpush1.bf16.msra.mxu0 0
        %811 = vmatprep.subr.bf16.mxu0 0
        %812 = vmatpush1.bf16.msra.mxu0 0
        %813 = vmatprep.subr.bf16.mxu0 0
        %814 = vmatpush1.bf16.msra.mxu0 0
        %815 = vmatprep.subr.bf16.mxu0 0
        %816 = vmatpush1.bf16.msra.mxu0 0
        %817 = vmatprep.subr.bf16.mxu0 0
        %818 = vmatpush1.bf16.msra.mxu0 0
        %819 = vmatprep.subr.bf16.mxu0 0
        %820 = vmatpush1.bf16.msra.mxu0 0
        %821 = vmatprep.mubr.bf16.mxu0 0
        %822 = vmatmul.mubr.bf16.gmra.mrb[0].mxu0 %v407
        %v823 = vpop.f32.mrb[0].mxu0
        %v824 = vadd.f32 0.0, %v823
        %v825 = vpop.f32.mrb[0].mxu0
        %v826 = vpop.f32.mrb[0].mxu0
        %v827 = vpop.f32.mrb[0].mxu0
        %828 = vdwg.mxu0
        %v829 = vld [vmem:[%s4] sm:$0xf]
        %v830 = vld [vmem:[%s4 + $0x4] sm:$0xf]
        %v831 = vld [vmem:[%s4 + $0x8] sm:$0xf]
        %v832 = vld [vmem:[%s4 + $0xc] sm:$0xf]
        %v833 = vld [vmem:[%s4 + $0x10] sm:$0xf]
        %v834 = vld [vmem:[%s4 + $0x14] sm:$0xf]
        %v835 = vld [vmem:[%s4 + $0x18] sm:$0xf]
        %v836 = vld [vmem:[%s4 + $0x1c] sm:$0xf]
        %v837 = vld [vmem:[%s4 + $0x20] sm:$0xf]
        %v838 = vld [vmem:[%s4 + $0x24] sm:$0xf]
        %v839 = vld [vmem:[%s4 + $0x28] sm:$0xf]
        %v840 = vld [vmem:[%s4 + $0x2c] sm:$0xf]
        %v841 = vld [vmem:[%s4 + $0x30] sm:$0xf]
        %v842 = vld [vmem:[%s4 + $0x34] sm:$0xf]
        %v843 = vld [vmem:[%s4 + $0x38] sm:$0xf]
        %v844 = vld [vmem:[%s4 + $0x3c] sm:$0xf]
        %v849 = vunpack.c.l.b16 %v829
        %v850 = vunpack.c.l.b16 %v830
        %v851 = vunpack.c.l.b16 %v831
        %v852 = vunpack.c.l.b16 %v832
        %v853 = vpack.c.b16 %v850, %v849
        %v854 = vpack.c.b16 %v852, %v851
        %857 = vmatprep.subr.bf16.mxu0 0
        %858 = vmatpush1.bf16.msra.mxu0 %v853
        %859 = vmatprep.subr.bf16.mxu0 0
        %860 = vmatpush1.bf16.msra.mxu0 %v854
        %861 = vmatprep.subr.bf16.mxu0 0
        %862 = vmatpush1.bf16.msra.mxu0 0
        %863 = vmatprep.subr.bf16.mxu0 0
        %864 = vmatpush1.bf16.msra.mxu0 0
        %865 = vmatprep.subr.bf16.mxu0 0
        %866 = vmatpush1.bf16.msra.mxu0 0
        %867 = vmatprep.subr.bf16.mxu0 0
        %868 = vmatpush1.bf16.msra.mxu0 0
        %869 = vmatprep.subr.bf16.mxu0 0
        %870 = vmatpush1.bf16.msra.mxu0 0
        %871 = vmatprep.subr.bf16.mxu0 0
        %872 = vmatpush1.bf16.msra.mxu0 0
        %873 = vmatprep.subr.bf16.mxu0 0
        %874 = vmatpush1.bf16.msra.mxu0 0
        %875 = vmatprep.subr.bf16.mxu0 0
        %876 = vmatpush1.bf16.msra.mxu0 0
        %877 = vmatprep.subr.bf16.mxu0 0
        %878 = vmatpush1.bf16.msra.mxu0 0
        %879 = vmatprep.subr.bf16.mxu0 0
        %880 = vmatpush1.bf16.msra.mxu0 0
        %881 = vmatprep.subr.bf16.mxu0 0
        %882 = vmatpush1.bf16.msra.mxu0 0
        %883 = vmatprep.subr.bf16.mxu0 0
        %884 = vmatpush1.bf16.msra.mxu0 0
        %885 = vmatprep.subr.bf16.mxu0 0
        %886 = vmatpush1.bf16.msra.mxu0 0
        %887 = vmatprep.subr.bf16.mxu0 0
        %888 = vmatpush1.bf16.msra.mxu0 0
        %889 = vmatprep.mubr.bf16.mxu0 0
        %890 = vmatmul.mubr.bf16.gmra.mrb[0].mxu0 %v407
        %v891 = vpop.f32.mrb[0].mxu0
        %v892 = vadd.f32 0.0, %v891
        %v893 = vpop.f32.mrb[0].mxu0
        %v894 = vpop.f32.mrb[0].mxu0
        %v895 = vpop.f32.mrb[0].mxu0
        %896 = vdwg.mxu0
        %v901 = vunpack.c.l.b16 %v833
        %v902 = vunpack.c.l.b16 %v834
        %v903 = vunpack.c.l.b16 %v835
        %v904 = vunpack.c.l.b16 %v836
        %v905 = vpack.c.b16 %v902, %v901
        %v906 = vpack.c.b16 %v904, %v903
        %909 = vmatprep.subr.bf16.mxu0 0
        %910 = vmatpush1.bf16.msra.mxu0 %v905
        %911 = vmatprep.subr.bf16.mxu0 0
        %912 = vmatpush1.bf16.msra.mxu0 %v906
        %913 = vmatprep.subr.bf16.mxu0 0
        %914 = vmatpush1.bf16.msra.mxu0 0
        %915 = vmatprep.subr.bf16.mxu0 0
        %916 = vmatpush1.bf16.msra.mxu0 0
        %917 = vmatprep.subr.bf16.mxu0 0
        %918 = vmatpush1.bf16.msra.mxu0 0
        %919 = vmatprep.subr.bf16.mxu0 0
        %920 = vmatpush1.bf16.msra.mxu0 0
        %921 = vmatprep.subr.bf16.mxu0 0
        %922 = vmatpush1.bf16.msra.mxu0 0
        %923 = vmatprep.subr.bf16.mxu0 0
        %924 = vmatpush1.bf16.msra.mxu0 0
        %925 = vmatprep.subr.bf16.mxu0 0
        %926 = vmatpush1.bf16.msra.mxu0 0
        %927 = vmatprep.subr.bf16.mxu0 0
        %928 = vmatpush1.bf16.msra.mxu0 0
        %929 = vmatprep.subr.bf16.mxu0 0
        %930 = vmatpush1.bf16.msra.mxu0 0
        %931 = vmatprep.subr.bf16.mxu0 0
        %932 = vmatpush1.bf16.msra.mxu0 0
        %933 = vmatprep.subr.bf16.mxu0 0
        %934 = vmatpush1.bf16.msra.mxu0 0
        %935 = vmatprep.subr.bf16.mxu0 0
        %936 = vmatpush1.bf16.msra.mxu0 0
        %937 = vmatprep.subr.bf16.mxu0 0
        %938 = vmatpush1.bf16.msra.mxu0 0
        %939 = vmatprep.subr.bf16.mxu0 0
        %940 = vmatpush1.bf16.msra.mxu0 0
        %941 = vmatprep.mubr.bf16.mxu0 0
        %942 = vmatmul.mubr.bf16.gmra.mrb[0].mxu0 %v407
        %v943 = vpop.f32.mrb[0].mxu0
        %v944 = vadd.f32 0.0, %v943
        %v945 = vpop.f32.mrb[0].mxu0
        %v946 = vpop.f32.mrb[0].mxu0
        %v947 = vpop.f32.mrb[0].mxu0
        %948 = vdwg.mxu0
        %v953 = vunpack.c.l.b16 %v837
        %v954 = vunpack.c.l.b16 %v838
        %v955 = vunpack.c.l.b16 %v839
        %v956 = vunpack.c.l.b16 %v840
        %v957 = vpack.c.b16 %v954, %v953
        %v958 = vpack.c.b16 %v956, %v955
        %961 = vmatprep.subr.bf16.mxu0 0
        %962 = vmatpush1.bf16.msra.mxu0 %v957
        %963 = vmatprep.subr.bf16.mxu0 0
        %964 = vmatpush1.bf16.msra.mxu0 %v958
        %965 = vmatprep.subr.bf16.mxu0 0
        %966 = vmatpush1.bf16.msra.mxu0 0
        %967 = vmatprep.subr.bf16.mxu0 0
        %968 = vmatpush1.bf16.msra.mxu0 0
        %969 = vmatprep.subr.bf16.mxu0 0
        %970 = vmatpush1.bf16.msra.mxu0 0
        %971 = vmatprep.subr.bf16.mxu0 0
        %972 = vmatpush1.bf16.msra.mxu0 0
        %973 = vmatprep.subr.bf16.mxu0 0
        %974 = vmatpush1.bf16.msra.mxu0 0
        %975 = vmatprep.subr.bf16.mxu0 0
        %976 = vmatpush1.bf16.msra.mxu0 0
        %977 = vmatprep.subr.bf16.mxu0 0
        %978 = vmatpush1.bf16.msra.mxu0 0
        %979 = vmatprep.subr.bf16.mxu0 0
        %980 = vmatpush1.bf16.msra.mxu0 0
        %981 = vmatprep.subr.bf16.mxu0 0
        %982 = vmatpush1.bf16.msra.mxu0 0
        %983 = vmatprep.subr.bf16.mxu0 0
        %984 = vmatpush1.bf16.msra.mxu0 0
        %985 = vmatprep.subr.bf16.mxu0 0
        %986 = vmatpush1.bf16.msra.mxu0 0
        %987 = vmatprep.subr.bf16.mxu0 0
        %988 = vmatpush1.bf16.msra.mxu0 0
        %989 = vmatprep.subr.bf16.mxu0 0
        %990 = vmatpush1.bf16.msra.mxu0 0
        %991 = vmatprep.subr.bf16.mxu0 0
        %992 = vmatpush1.bf16.msra.mxu0 0
        %993 = vmatprep.mubr.bf16.mxu0 0
        %994 = vmatmul.mubr.bf16.gmra.mrb[0].mxu0 %v407
        %v995 = vpop.f32.mrb[0].mxu0
        %v996 = vadd.f32 0.0, %v995
        %v997 = vpop.f32.mrb[0].mxu0
        %v998 = vpop.f32.mrb[0].mxu0
        %v999 = vpop.f32.mrb[0].mxu0
        %1000 = vdwg.mxu0
        %v1005 = vunpack.c.l.b16 %v841
        %v1006 = vunpack.c.l.b16 %v842
        %v1007 = vunpack.c.l.b16 %v843
        %v1008 = vunpack.c.l.b16 %v844
        %v1009 = vpack.c.b16 %v1006, %v1005
        %v1010 = vpack.c.b16 %v1008, %v1007
        %1013 = vmatprep.subr.bf16.mxu0 0
        %1014 = vmatpush1.bf16.msra.mxu0 %v1009
        %1015 = vmatprep.subr.bf16.mxu0 0
        %1016 = vmatpush1.bf16.msra.mxu0 %v1010
        %1017 = vmatprep.subr.bf16.mxu0 0
        %1018 = vmatpush1.bf16.msra.mxu0 0
        %1019 = vmatprep.subr.bf16.mxu0 0
        %1020 = vmatpush1.bf16.msra.mxu0 0
        %1021 = vmatprep.subr.bf16.mxu0 0
        %1022 = vmatpush1.bf16.msra.mxu0 0
        %1023 = vmatprep.subr.bf16.mxu0 0
        %1024 = vmatpush1.bf16.msra.mxu0 0
        %1025 = vmatprep.subr.bf16.mxu0 0
        %1026 = vmatpush1.bf16.msra.mxu0 0
        %1027 = vmatprep.subr.bf16.mxu0 0
        %1028 = vmatpush1.bf16.msra.mxu0 0
        %1029 = vmatprep.subr.bf16.mxu0 0
        %1030 = vmatpush1.bf16.msra.mxu0 0
        %1031 = vmatprep.subr.bf16.mxu0 0
        %1032 = vmatpush1.bf16.msra.mxu0 0
        %1033 = vmatprep.subr.bf16.mxu0 0
        %1034 = vmatpush1.bf16.msra.mxu0 0
        %1035 = vmatprep.subr.bf16.mxu0 0
        %1036 = vmatpush1.bf16.msra.mxu0 0
        %1037 = vmatprep.subr.bf16.mxu0 0
        %1038 = vmatpush1.bf16.msra.mxu0 0
        %1039 = vmatprep.subr.bf16.mxu0 0
        %1040 = vmatpush1.bf16.msra.mxu0 0
        %1041 = vmatprep.subr.bf16.mxu0 0
        %1042 = vmatpush1.bf16.msra.mxu0 0
        %1043 = vmatprep.subr.bf16.mxu0 0
        %1044 = vmatpush1.bf16.msra.mxu0 0
        %1045 = vmatprep.mubr.bf16.mxu0 0
        %1046 = vmatmul.mubr.bf16.gmra.mrb[0].mxu0 %v407
        %v1047 = vpop.f32.mrb[0].mxu0
        %v1048 = vadd.f32 0.0, %v1047
        %v1049 = vpop.f32.mrb[0].mxu0
        %v1050 = vpop.f32.mrb[0].mxu0
        %v1051 = vpop.f32.mrb[0].mxu0
        %1052 = vdwg.mxu0
        %v1053 = vld [vmem:[%s6] sm:$0xf]
        %v1054 = vld [vmem:[%s6 + $0x4] sm:$0xf]
        %v1055 = vld [vmem:[%s6 + $0x8] sm:$0xf]
        %v1056 = vld [vmem:[%s6 + $0xc] sm:$0xf]
        %v1057 = vld [vmem:[%s6 + $0x10] sm:$0xf]
        %v1058 = vld [vmem:[%s6 + $0x14] sm:$0xf]
        %v1059 = vld [vmem:[%s6 + $0x18] sm:$0xf]
        %v1060 = vld [vmem:[%s6 + $0x1c] sm:$0xf]
        %v1061 = vld [vmem:[%s6 + $0x20] sm:$0xf]
        %v1062 = vld [vmem:[%s6 + $0x24] sm:$0xf]
        %v1063 = vld [vmem:[%s6 + $0x28] sm:$0xf]
        %v1064 = vld [vmem:[%s6 + $0x2c] sm:$0xf]
        %v1065 = vld [vmem:[%s6 + $0x30] sm:$0xf]
        %v1066 = vld [vmem:[%s6 + $0x34] sm:$0xf]
        %v1067 = vld [vmem:[%s6 + $0x38] sm:$0xf]
        %v1068 = vld [vmem:[%s6 + $0x3c] sm:$0xf]
        %v1073 = vunpack.c.l.b16 %v1053
        %v1074 = vunpack.c.l.b16 %v1054
        %v1075 = vunpack.c.l.b16 %v1055
        %v1076 = vunpack.c.l.b16 %v1056
        %v1077 = vpack.c.b16 %v1074, %v1073
        %v1078 = vpack.c.b16 %v1076, %v1075
        %v1082 = vsel %vm405, %v376, 0
        %1084 = vmatprep.subr.bf16.mxu0 0
        %1085 = vmatpush1.bf16.msra.mxu0 %v1077
        %1086 = vmatprep.subr.bf16.mxu0 0
        %1087 = vmatpush1.bf16.msra.mxu0 %v1078
        %1088 = vmatprep.subr.bf16.mxu0 0
        %1089 = vmatpush1.bf16.msra.mxu0 0
        %1090 = vmatprep.subr.bf16.mxu0 0
        %1091 = vmatpush1.bf16.msra.mxu0 0
        %1092 = vmatprep.subr.bf16.mxu0 0
        %1093 = vmatpush1.bf16.msra.mxu0 0
        %1094 = vmatprep.subr.bf16.mxu0 0
        %1095 = vmatpush1.bf16.msra.mxu0 0
        %1096 = vmatprep.subr.bf16.mxu0 0
        %1097 = vmatpush1.bf16.msra.mxu0 0
        %1098 = vmatprep.subr.bf16.mxu0 0
        %1099 = vmatpush1.bf16.msra.mxu0 0
        %1100 = vmatprep.subr.bf16.mxu0 0
        %1101 = vmatpush1.bf16.msra.mxu0 0
        %1102 = vmatprep.subr.bf16.mxu0 0
        %1103 = vmatpush1.bf16.msra.mxu0 0
        %1104 = vmatprep.subr.bf16.mxu0 0
        %1105 = vmatpush1.bf16.msra.mxu0 0
        %1106 = vmatprep.subr.bf16.mxu0 0
        %1107 = vmatpush1.bf16.msra.mxu0 0
        %1108 = vmatprep.subr.bf16.mxu0 0
        %1109 = vmatpush1.bf16.msra.mxu0 0
        %1110 = vmatprep.subr.bf16.mxu0 0
        %1111 = vmatpush1.bf16.msra.mxu0 0
        %1112 = vmatprep.subr.bf16.mxu0 0
        %1113 = vmatpush1.bf16.msra.mxu0 0
        %1114 = vmatprep.subr.bf16.mxu0 0
        %1115 = vmatpush1.bf16.msra.mxu0 0
        %1116 = vmatprep.mubr.bf16.mxu0 0
        %1117 = vmatmul.mubr.bf16.gmra.mrb[0].mxu0 %v1082
        %v1118 = vpop.f32.mrb[0].mxu0
        %v1119 = vadd.f32 0.0, %v1118
        %v1120 = vpop.f32.mrb[0].mxu0
        %v1121 = vpop.f32.mrb[0].mxu0
        %v1122 = vpop.f32.mrb[0].mxu0
        %1123 = vdwg.mxu0
        %v1128 = vunpack.c.l.b16 %v1057
        %v1129 = vunpack.c.l.b16 %v1058
        %v1130 = vunpack.c.l.b16 %v1059
        %v1131 = vunpack.c.l.b16 %v1060
        %v1132 = vpack.c.b16 %v1129, %v1128
        %v1133 = vpack.c.b16 %v1131, %v1130
        %1136 = vmatprep.subr.bf16.mxu0 0
        %1137 = vmatpush1.bf16.msra.mxu0 %v1132
        %1138 = vmatprep.subr.bf16.mxu0 0
        %1139 = vmatpush1.bf16.msra.mxu0 %v1133
        %1140 = vmatprep.subr.bf16.mxu0 0
        %1141 = vmatpush1.bf16.msra.mxu0 0
        %1142 = vmatprep.subr.bf16.mxu0 0
        %1143 = vmatpush1.bf16.msra.mxu0 0
        %1144 = vmatprep.subr.bf16.mxu0 0
        %1145 = vmatpush1.bf16.msra.mxu0 0
        %1146 = vmatprep.subr.bf16.mxu0 0
        %1147 = vmatpush1.bf16.msra.mxu0 0
        %1148 = vmatprep.subr.bf16.mxu0 0
        %1149 = vmatpush1.bf16.msra.mxu0 0
        %1150 = vmatprep.subr.bf16.mxu0 0
        %1151 = vmatpush1.bf16.msra.mxu0 0
        %1152 = vmatprep.subr.bf16.mxu0 0
        %1153 = vmatpush1.bf16.msra.mxu0 0
        %1154 = vmatprep.subr.bf16.mxu0 0
        %1155 = vmatpush1.bf16.msra.mxu0 0
        %1156 = vmatprep.subr.bf16.mxu0 0
        %1157 = vmatpush1.bf16.msra.mxu0 0
        %1158 = vmatprep.subr.bf16.mxu0 0
        %1159 = vmatpush1.bf16.msra.mxu0 0
        %1160 = vmatprep.subr.bf16.mxu0 0
        %1161 = vmatpush1.bf16.msra.mxu0 0
        %1162 = vmatprep.subr.bf16.mxu0 0
        %1163 = vmatpush1.bf16.msra.mxu0 0
        %1164 = vmatprep.subr.bf16.mxu0 0
        %1165 = vmatpush1.bf16.msra.mxu0 0
        %1166 = vmatprep.subr.bf16.mxu0 0
        %1167 = vmatpush1.bf16.msra.mxu0 0
        %1168 = vmatprep.mubr.bf16.mxu0 0
        %1169 = vmatmul.mubr.bf16.gmra.mrb[0].mxu0 %v1082
        %v1170 = vpop.f32.mrb[0].mxu0
        %v1171 = vadd.f32 0.0, %v1170
        %v1172 = vpop.f32.mrb[0].mxu0
        %v1173 = vpop.f32.mrb[0].mxu0
        %v1174 = vpop.f32.mrb[0].mxu0
        %1175 = vdwg.mxu0
        %v1180 = vunpack.c.l.b16 %v1061
        %v1181 = vunpack.c.l.b16 %v1062
        %v1182 = vunpack.c.l.b16 %v1063
        %v1183 = vunpack.c.l.b16 %v1064
        %v1184 = vpack.c.b16 %v1181, %v1180
        %v1185 = vpack.c.b16 %v1183, %v1182
        %1188 = vmatprep.subr.bf16.mxu0 0
        %1189 = vmatpush1.bf16.msra.mxu0 %v1184
        %1190 = vmatprep.subr.bf16.mxu0 0
        %1191 = vmatpush1.bf16.msra.mxu0 %v1185
        %1192 = vmatprep.subr.bf16.mxu0 0
        %1193 = vmatpush1.bf16.msra.mxu0 0
        %1194 = vmatprep.subr.bf16.mxu0 0
        %1195 = vmatpush1.bf16.msra.mxu0 0
        %1196 = vmatprep.subr.bf16.mxu0 0
        %1197 = vmatpush1.bf16.msra.mxu0 0
        %1198 = vmatprep.subr.bf16.mxu0 0
        %1199 = vmatpush1.bf16.msra.mxu0 0
        %1200 = vmatprep.subr.bf16.mxu0 0
        %1201 = vmatpush1.bf16.msra.mxu0 0
        %1202 = vmatprep.subr.bf16.mxu0 0
        %1203 = vmatpush1.bf16.msra.mxu0 0
        %1204 = vmatprep.subr.bf16.mxu0 0
        %1205 = vmatpush1.bf16.msra.mxu0 0
        %1206 = vmatprep.subr.bf16.mxu0 0
        %1207 = vmatpush1.bf16.msra.mxu0 0
        %1208 = vmatprep.subr.bf16.mxu0 0
        %1209 = vmatpush1.bf16.msra.mxu0 0
        %1210 = vmatprep.subr.bf16.mxu0 0
        %1211 = vmatpush1.bf16.msra.mxu0 0
        %1212 = vmatprep.subr.bf16.mxu0 0
        %1213 = vmatpush1.bf16.msra.mxu0 0
        %1214 = vmatprep.subr.bf16.mxu0 0
        %1215 = vmatpush1.bf16.msra.mxu0 0
        %1216 = vmatprep.subr.bf16.mxu0 0
        %1217 = vmatpush1.bf16.msra.mxu0 0
        %1218 = vmatprep.subr.bf16.mxu0 0
        %1219 = vmatpush1.bf16.msra.mxu0 0
        %1220 = vmatprep.mubr.bf16.mxu0 0
        %1221 = vmatmul.mubr.bf16.gmra.mrb[0].mxu0 %v1082
        %v1222 = vpop.f32.mrb[0].mxu0
        %v1223 = vadd.f32 0.0, %v1222
        %v1224 = vpop.f32.mrb[0].mxu0
        %v1225 = vpop.f32.mrb[0].mxu0
        %v1226 = vpop.f32.mrb[0].mxu0
        %1227 = vdwg.mxu0
        %v1232 = vunpack.c.l.b16 %v1065
        %v1233 = vunpack.c.l.b16 %v1066
        %v1234 = vunpack.c.l.b16 %v1067
        %v1235 = vunpack.c.l.b16 %v1068
        %v1236 = vpack.c.b16 %v1233, %v1232
        %v1237 = vpack.c.b16 %v1235, %v1234
        %1240 = vmatprep.subr.bf16.mxu0 0
        %1241 = vmatpush1.bf16.msra.mxu0 %v1236
        %1242 = vmatprep.subr.bf16.mxu0 0
        %1243 = vmatpush1.bf16.msra.mxu0 %v1237
        %1244 = vmatprep.subr.bf16.mxu0 0
        %1245 = vmatpush1.bf16.msra.mxu0 0
        %1246 = vmatprep.subr.bf16.mxu0 0
        %1247 = vmatpush1.bf16.msra.mxu0 0
        %1248 = vmatprep.subr.bf16.mxu0 0
        %1249 = vmatpush1.bf16.msra.mxu0 0
        %1250 = vmatprep.subr.bf16.mxu0 0
        %1251 = vmatpush1.bf16.msra.mxu0 0
        %1252 = vmatprep.subr.bf16.mxu0 0
        %1253 = vmatpush1.bf16.msra.mxu0 0
        %1254 = vmatprep.subr.bf16.mxu0 0
        %1255 = vmatpush1.bf16.msra.mxu0 0
        %1256 = vmatprep.subr.bf16.mxu0 0
        %1257 = vmatpush1.bf16.msra.mxu0 0
        %1258 = vmatprep.subr.bf16.mxu0 0
        %1259 = vmatpush1.bf16.msra.mxu0 0
        %1260 = vmatprep.subr.bf16.mxu0 0
        %1261 = vmatpush1.bf16.msra.mxu0 0
        %1262 = vmatprep.subr.bf16.mxu0 0
        %1263 = vmatpush1.bf16.msra.mxu0 0
        %1264 = vmatprep.subr.bf16.mxu0 0
        %1265 = vmatpush1.bf16.msra.mxu0 0
        %1266 = vmatprep.subr.bf16.mxu0 0
        %1267 = vmatpush1.bf16.msra.mxu0 0
        %1268 = vmatprep.subr.bf16.mxu0 0
        %1269 = vmatpush1.bf16.msra.mxu0 0
        %1270 = vmatprep.subr.bf16.mxu0 0
        %1271 = vmatpush1.bf16.msra.mxu0 0
        %1272 = vmatprep.mubr.bf16.mxu0 0
        %1273 = vmatmul.mubr.bf16.gmra.mrb[0].mxu0 %v1082
        %v1274 = vpop.f32.mrb[0].mxu0
        %v1275 = vadd.f32 0.0, %v1274
        %v1276 = vpop.f32.mrb[0].mxu0
        %v1277 = vpop.f32.mrb[0].mxu0
        %v1278 = vpop.f32.mrb[0].mxu0
        %1279 = vdwg.mxu0
        %v1280 = vld [vmem:[%s7] sm:$0xf]
        %v1281 = vld [vmem:[%s7 + $0x4] sm:$0xf]
        %v1282 = vld [vmem:[%s7 + $0x8] sm:$0xf]
        %v1283 = vld [vmem:[%s7 + $0xc] sm:$0xf]
        %v1284 = vld [vmem:[%s7 + $0x10] sm:$0xf]
        %v1285 = vld [vmem:[%s7 + $0x14] sm:$0xf]
        %v1286 = vld [vmem:[%s7 + $0x18] sm:$0xf]
        %v1287 = vld [vmem:[%s7 + $0x1c] sm:$0xf]
        %v1288 = vld [vmem:[%s7 + $0x20] sm:$0xf]
        %v1289 = vld [vmem:[%s7 + $0x24] sm:$0xf]
        %v1290 = vld [vmem:[%s7 + $0x28] sm:$0xf]
        %v1291 = vld [vmem:[%s7 + $0x2c] sm:$0xf]
        %v1292 = vld [vmem:[%s7 + $0x30] sm:$0xf]
        %v1293 = vld [vmem:[%s7 + $0x34] sm:$0xf]
        %v1294 = vld [vmem:[%s7 + $0x38] sm:$0xf]
        %v1295 = vld [vmem:[%s7 + $0x3c] sm:$0xf]
        %v1300 = vunpack.c.l.b16 %v1280
        %v1301 = vunpack.c.l.b16 %v1281
        %v1302 = vunpack.c.l.b16 %v1282
        %v1303 = vunpack.c.l.b16 %v1283
        %v1304 = vpack.c.b16 %v1301, %v1300
        %v1305 = vpack.c.b16 %v1303, %v1302
        %1308 = vmatprep.subr.bf16.mxu0 0
        %1309 = vmatpush1.bf16.msra.mxu0 %v1304
        %1310 = vmatprep.subr.bf16.mxu0 0
        %1311 = vmatpush1.bf16.msra.mxu0 %v1305
        %1312 = vmatprep.subr.bf16.mxu0 0
        %1313 = vmatpush1.bf16.msra.mxu0 0
        %1314 = vmatprep.subr.bf16.mxu0 0
        %1315 = vmatpush1.bf16.msra.mxu0 0
        %1316 = vmatprep.subr.bf16.mxu0 0
        %1317 = vmatpush1.bf16.msra.mxu0 0
        %1318 = vmatprep.subr.bf16.mxu0 0
        %1319 = vmatpush1.bf16.msra.mxu0 0
        %1320 = vmatprep.subr.bf16.mxu0 0
        %1321 = vmatpush1.bf16.msra.mxu0 0
        %1322 = vmatprep.subr.bf16.mxu0 0
        %1323 = vmatpush1.bf16.msra.mxu0 0
        %1324 = vmatprep.subr.bf16.mxu0 0
        %1325 = vmatpush1.bf16.msra.mxu0 0
        %1326 = vmatprep.subr.bf16.mxu0 0
        %1327 = vmatpush1.bf16.msra.mxu0 0
        %1328 = vmatprep.subr.bf16.mxu0 0
        %1329 = vmatpush1.bf16.msra.mxu0 0
        %1330 = vmatprep.subr.bf16.mxu0 0
        %1331 = vmatpush1.bf16.msra.mxu0 0
        %1332 = vmatprep.subr.bf16.mxu0 0
        %1333 = vmatpush1.bf16.msra.mxu0 0
        %1334 = vmatprep.subr.bf16.mxu0 0
        %1335 = vmatpush1.bf16.msra.mxu0 0
        %1336 = vmatprep.subr.bf16.mxu0 0
        %1337 = vmatpush1.bf16.msra.mxu0 0
        %1338 = vmatprep.subr.bf16.mxu0 0
        %1339 = vmatpush1.bf16.msra.mxu0 0
        %1340 = vmatprep.mubr.bf16.mxu0 0
        %1341 = vmatmul.mubr.bf16.gmra.mrb[0].mxu0 %v1082
        %v1342 = vpop.f32.mrb[0].mxu0
        %v1343 = vadd.f32 0.0, %v1342
        %v1344 = vpop.f32.mrb[0].mxu0
        %v1345 = vpop.f32.mrb[0].mxu0
        %v1346 = vpop.f32.mrb[0].mxu0
        %1347 = vdwg.mxu0
        %v1352 = vunpack.c.l.b16 %v1284
        %v1353 = vunpack.c.l.b16 %v1285
        %v1354 = vunpack.c.l.b16 %v1286
        %v1355 = vunpack.c.l.b16 %v1287
        %v1356 = vpack.c.b16 %v1353, %v1352
        %v1357 = vpack.c.b16 %v1355, %v1354
        %1360 = vmatprep.subr.bf16.mxu0 0
        %1361 = vmatpush1.bf16.msra.mxu0 %v1356
        %1362 = vmatprep.subr.bf16.mxu0 0
        %1363 = vmatpush1.bf16.msra.mxu0 %v1357
        %1364 = vmatprep.subr.bf16.mxu0 0
        %1365 = vmatpush1.bf16.msra.mxu0 0
        %1366 = vmatprep.subr.bf16.mxu0 0
        %1367 = vmatpush1.bf16.msra.mxu0 0
        %1368 = vmatprep.subr.bf16.mxu0 0
        %1369 = vmatpush1.bf16.msra.mxu0 0
        %1370 = vmatprep.subr.bf16.mxu0 0
        %1371 = vmatpush1.bf16.msra.mxu0 0
        %1372 = vmatprep.subr.bf16.mxu0 0
        %1373 = vmatpush1.bf16.msra.mxu0 0
        %1374 = vmatprep.subr.bf16.mxu0 0
        %1375 = vmatpush1.bf16.msra.mxu0 0
        %1376 = vmatprep.subr.bf16.mxu0 0
        %1377 = vmatpush1.bf16.msra.mxu0 0
        %1378 = vmatprep.subr.bf16.mxu0 0
        %1379 = vmatpush1.bf16.msra.mxu0 0
        %1380 = vmatprep.subr.bf16.mxu0 0
        %1381 = vmatpush1.bf16.msra.mxu0 0
        %1382 = vmatprep.subr.bf16.mxu0 0
        %1383 = vmatpush1.bf16.msra.mxu0 0
        %1384 = vmatprep.subr.bf16.mxu0 0
        %1385 = vmatpush1.bf16.msra.mxu0 0
        %1386 = vmatprep.subr.bf16.mxu0 0
        %1387 = vmatpush1.bf16.msra.mxu0 0
        %1388 = vmatprep.subr.bf16.mxu0 0
        %1389 = vmatpush1.bf16.msra.mxu0 0
        %1390 = vmatprep.subr.bf16.mxu0 0
        %1391 = vmatpush1.bf16.msra.mxu0 0
        %1392 = vmatprep.mubr.bf16.mxu0 0
        %1393 = vmatmul.mubr.bf16.gmra.mrb[0].mxu0 %v1082
        %v1394 = vpop.f32.mrb[0].mxu0
        %v1395 = vadd.f32 0.0, %v1394
        %v1396 = vpop.f32.mrb[0].mxu0
        %v1397 = vpop.f32.mrb[0].mxu0
        %v1398 = vpop.f32.mrb[0].mxu0
        %1399 = vdwg.mxu0
        %v1404 = vunpack.c.l.b16 %v1288
        %v1405 = vunpack.c.l.b16 %v1289
        %v1406 = vunpack.c.l.b16 %v1290
        %v1407 = vunpack.c.l.b16 %v1291
        %v1408 = vpack.c.b16 %v1405, %v1404
        %v1409 = vpack.c.b16 %v1407, %v1406
        %1412 = vmatprep.subr.bf16.mxu0 0
        %1413 = vmatpush1.bf16.msra.mxu0 %v1408
        %1414 = vmatprep.subr.bf16.mxu0 0
        %1415 = vmatpush1.bf16.msra.mxu0 %v1409
        %1416 = vmatprep.subr.bf16.mxu0 0
        %1417 = vmatpush1.bf16.msra.mxu0 0
        %1418 = vmatprep.subr.bf16.mxu0 0
        %1419 = vmatpush1.bf16.msra.mxu0 0
        %1420 = vmatprep.subr.bf16.mxu0 0
        %1421 = vmatpush1.bf16.msra.mxu0 0
        %1422 = vmatprep.subr.bf16.mxu0 0
        %1423 = vmatpush1.bf16.msra.mxu0 0
        %1424 = vmatprep.subr.bf16.mxu0 0
        %1425 = vmatpush1.bf16.msra.mxu0 0
        %1426 = vmatprep.subr.bf16.mxu0 0
        %1427 = vmatpush1.bf16.msra.mxu0 0
        %1428 = vmatprep.subr.bf16.mxu0 0
        %1429 = vmatpush1.bf16.msra.mxu0 0
        %1430 = vmatprep.subr.bf16.mxu0 0
        %1431 = vmatpush1.bf16.msra.mxu0 0
        %1432 = vmatprep.subr.bf16.mxu0 0
        %1433 = vmatpush1.bf16.msra.mxu0 0
        %1434 = vmatprep.subr.bf16.mxu0 0
        %1435 = vmatpush1.bf16.msra.mxu0 0
        %1436 = vmatprep.subr.bf16.mxu0 0
        %1437 = vmatpush1.bf16.msra.mxu0 0
        %1438 = vmatprep.subr.bf16.mxu0 0
        %1439 = vmatpush1.bf16.msra.mxu0 0
        %1440 = vmatprep.subr.bf16.mxu0 0
        %1441 = vmatpush1.bf16.msra.mxu0 0
        %1442 = vmatprep.subr.bf16.mxu0 0
        %1443 = vmatpush1.bf16.msra.mxu0 0
        %1444 = vmatprep.mubr.bf16.mxu0 0
        %1445 = vmatmul.mubr.bf16.gmra.mrb[0].mxu0 %v1082
        %v1446 = vpop.f32.mrb[0].mxu0
        %v1447 = vadd.f32 0.0, %v1446
        %v1448 = vpop.f32.mrb[0].mxu0
        %v1449 = vpop.f32.mrb[0].mxu0
        %v1450 = vpop.f32.mrb[0].mxu0
        %1451 = vdwg.mxu0
        %v1456 = vunpack.c.l.b16 %v1292
        %v1457 = vunpack.c.l.b16 %v1293
        %v1458 = vunpack.c.l.b16 %v1294
        %v1459 = vunpack.c.l.b16 %v1295
        %v1460 = vpack.c.b16 %v1457, %v1456
        %v1461 = vpack.c.b16 %v1459, %v1458
        %1464 = vmatprep.subr.bf16.mxu0 0
        %1465 = vmatpush1.bf16.msra.mxu0 %v1460
        %1466 = vmatprep.subr.bf16.mxu0 0
        %1467 = vmatpush1.bf16.msra.mxu0 %v1461
        %1468 = vmatprep.subr.bf16.mxu0 0
        %1469 = vmatpush1.bf16.msra.mxu0 0
        %1470 = vmatprep.subr.bf16.mxu0 0
        %1471 = vmatpush1.bf16.msra.mxu0 0
        %1472 = vmatprep.subr.bf16.mxu0 0
        %1473 = vmatpush1.bf16.msra.mxu0 0
        %1474 = vmatprep.subr.bf16.mxu0 0
        %1475 = vmatpush1.bf16.msra.mxu0 0
        %1476 = vmatprep.subr.bf16.mxu0 0
        %1477 = vmatpush1.bf16.msra.mxu0 0
        %1478 = vmatprep.subr.bf16.mxu0 0
        %1479 = vmatpush1.bf16.msra.mxu0 0
        %1480 = vmatprep.subr.bf16.mxu0 0
        %1481 = vmatpush1.bf16.msra.mxu0 0
        %1482 = vmatprep.subr.bf16.mxu0 0
        %1483 = vmatpush1.bf16.msra.mxu0 0
        %1484 = vmatprep.subr.bf16.mxu0 0
        %1485 = vmatpush1.bf16.msra.mxu0 0
        %1486 = vmatprep.subr.bf16.mxu0 0
        %1487 = vmatpush1.bf16.msra.mxu0 0
        %1488 = vmatprep.subr.bf16.mxu0 0
        %1489 = vmatpush1.bf16.msra.mxu0 0
        %1490 = vmatprep.subr.bf16.mxu0 0
        %1491 = vmatpush1.bf16.msra.mxu0 0
        %1492 = vmatprep.subr.bf16.mxu0 0
        %1493 = vmatpush1.bf16.msra.mxu0 0
        %1494 = vmatprep.subr.bf16.mxu0 0
        %1495 = vmatpush1.bf16.msra.mxu0 0
        %1496 = vmatprep.mubr.bf16.mxu0 0
        %1497 = vmatmul.mubr.bf16.gmra.mrb[0].mxu0 %v1082
        %v1498 = vpop.f32.mrb[0].mxu0
        %v1499 = vadd.f32 0.0, %v1498
        %v1500 = vpop.f32.mrb[0].mxu0
        %v1501 = vpop.f32.mrb[0].mxu0
        %v1502 = vpop.f32.mrb[0].mxu0
        %1503 = vdwg.mxu0
        %v1504 = vld [vmem:[%s8] sm:$0xf]
        %v1505 = vld [vmem:[%s8 + $0x4] sm:$0xf]
        %v1506 = vld [vmem:[%s8 + $0x8] sm:$0xf]
        %v1507 = vld [vmem:[%s8 + $0xc] sm:$0xf]
        %v1508 = vld [vmem:[%s8 + $0x10] sm:$0xf]
        %v1509 = vld [vmem:[%s8 + $0x14] sm:$0xf]
        %v1510 = vld [vmem:[%s8 + $0x18] sm:$0xf]
        %v1511 = vld [vmem:[%s8 + $0x1c] sm:$0xf]
        %v1512 = vld [vmem:[%s8 + $0x20] sm:$0xf]
        %v1513 = vld [vmem:[%s8 + $0x24] sm:$0xf]
        %v1514 = vld [vmem:[%s8 + $0x28] sm:$0xf]
        %v1515 = vld [vmem:[%s8 + $0x2c] sm:$0xf]
        %v1516 = vld [vmem:[%s8 + $0x30] sm:$0xf]
        %v1517 = vld [vmem:[%s8 + $0x34] sm:$0xf]
        %v1518 = vld [vmem:[%s8 + $0x38] sm:$0xf]
        %v1519 = vld [vmem:[%s8 + $0x3c] sm:$0xf]
        %v1524 = vunpack.c.l.b16 %v1504
        %v1525 = vunpack.c.l.b16 %v1505
        %v1526 = vunpack.c.l.b16 %v1506
        %v1527 = vunpack.c.l.b16 %v1507
        %v1528 = vpack.c.b16 %v1525, %v1524
        %v1529 = vpack.c.b16 %v1527, %v1526
        %1532 = vmatprep.subr.bf16.mxu0 0
        %1533 = vmatpush1.bf16.msra.mxu0 %v1528
        %1534 = vmatprep.subr.bf16.mxu0 0
        %1535 = vmatpush1.bf16.msra.mxu0 %v1529
        %1536 = vmatprep.subr.bf16.mxu0 0
        %1537 = vmatpush1.bf16.msra.mxu0 0
        %1538 = vmatprep.subr.bf16.mxu0 0
        %1539 = vmatpush1.bf16.msra.mxu0 0
        %1540 = vmatprep.subr.bf16.mxu0 0
        %1541 = vmatpush1.bf16.msra.mxu0 0
        %1542 = vmatprep.subr.bf16.mxu0 0
        %1543 = vmatpush1.bf16.msra.mxu0 0
        %1544 = vmatprep.subr.bf16.mxu0 0
        %1545 = vmatpush1.bf16.msra.mxu0 0
        %1546 = vmatprep.subr.bf16.mxu0 0
        %1547 = vmatpush1.bf16.msra.mxu0 0
        %1548 = vmatprep.subr.bf16.mxu0 0
        %1549 = vmatpush1.bf16.msra.mxu0 0
        %1550 = vmatprep.subr.bf16.mxu0 0
        %1551 = vmatpush1.bf16.msra.mxu0 0
        %1552 = vmatprep.subr.bf16.mxu0 0
        %1553 = vmatpush1.bf16.msra.mxu0 0
        %1554 = vmatprep.subr.bf16.mxu0 0
        %1555 = vmatpush1.bf16.msra.mxu0 0
        %1556 = vmatprep.subr.bf16.mxu0 0
        %1557 = vmatpush1.bf16.msra.mxu0 0
        %1558 = vmatprep.subr.bf16.mxu0 0
        %1559 = vmatpush1.bf16.msra.mxu0 0
        %1560 = vmatprep.subr.bf16.mxu0 0
        %1561 = vmatpush1.bf16.msra.mxu0 0
        %1562 = vmatprep.subr.bf16.mxu0 0
        %1563 = vmatpush1.bf16.msra.mxu0 0
        %1564 = vmatprep.mubr.bf16.mxu0 0
        %1565 = vmatmul.mubr.bf16.gmra.mrb[0].mxu0 %v1082
        %v1566 = vpop.f32.mrb[0].mxu0
        %v1567 = vadd.f32 0.0, %v1566
        %v1568 = vpop.f32.mrb[0].mxu0
        %v1569 = vpop.f32.mrb[0].mxu0
        %v1570 = vpop.f32.mrb[0].mxu0
        %1571 = vdwg.mxu0
        %v1576 = vunpack.c.l.b16 %v1508
        %v1577 = vunpack.c.l.b16 %v1509
        %v1578 = vunpack.c.l.b16 %v1510
        %v1579 = vunpack.c.l.b16 %v1511
        %v1580 = vpack.c.b16 %v1577, %v1576
        %v1581 = vpack.c.b16 %v1579, %v1578
        %1584 = vmatprep.subr.bf16.mxu0 0
        %1585 = vmatpush1.bf16.msra.mxu0 %v1580
        %1586 = vmatprep.subr.bf16.mxu0 0
        %1587 = vmatpush1.bf16.msra.mxu0 %v1581
        %1588 = vmatprep.subr.bf16.mxu0 0
        %1589 = vmatpush1.bf16.msra.mxu0 0
        %1590 = vmatprep.subr.bf16.mxu0 0
        %1591 = vmatpush1.bf16.msra.mxu0 0
        %1592 = vmatprep.subr.bf16.mxu0 0
        %1593 = vmatpush1.bf16.msra.mxu0 0
        %1594 = vmatprep.subr.bf16.mxu0 0
        %1595 = vmatpush1.bf16.msra.mxu0 0
        %1596 = vmatprep.subr.bf16.mxu0 0
        %1597 = vmatpush1.bf16.msra.mxu0 0
        %1598 = vmatprep.subr.bf16.mxu0 0
        %1599 = vmatpush1.bf16.msra.mxu0 0
        %1600 = vmatprep.subr.bf16.mxu0 0
        %1601 = vmatpush1.bf16.msra.mxu0 0
        %1602 = vmatprep.subr.bf16.mxu0 0
        %1603 = vmatpush1.bf16.msra.mxu0 0
        %1604 = vmatprep.subr.bf16.mxu0 0
        %1605 = vmatpush1.bf16.msra.mxu0 0
        %1606 = vmatprep.subr.bf16.mxu0 0
        %1607 = vmatpush1.bf16.msra.mxu0 0
        %1608 = vmatprep.subr.bf16.mxu0 0
        %1609 = vmatpush1.bf16.msra.mxu0 0
        %1610 = vmatprep.subr.bf16.mxu0 0
        %1611 = vmatpush1.bf16.msra.mxu0 0
        %1612 = vmatprep.subr.bf16.mxu0 0
        %1613 = vmatpush1.bf16.msra.mxu0 0
        %1614 = vmatprep.subr.bf16.mxu0 0
        %1615 = vmatpush1.bf16.msra.mxu0 0
        %1616 = vmatprep.mubr.bf16.mxu0 0
        %1617 = vmatmul.mubr.bf16.gmra.mrb[0].mxu0 %v1082
        %v1618 = vpop.f32.mrb[0].mxu0
        %v1619 = vadd.f32 0.0, %v1618
        %v1620 = vpop.f32.mrb[0].mxu0
        %v1621 = vpop.f32.mrb[0].mxu0
        %v1622 = vpop.f32.mrb[0].mxu0
        %1623 = vdwg.mxu0
        %v1628 = vunpack.c.l.b16 %v1512
        %v1629 = vunpack.c.l.b16 %v1513
        %v1630 = vunpack.c.l.b16 %v1514
        %v1631 = vunpack.c.l.b16 %v1515
        %v1632 = vpack.c.b16 %v1629, %v1628
        %v1633 = vpack.c.b16 %v1631, %v1630
        %1636 = vmatprep.subr.bf16.mxu0 0
        %1637 = vmatpush1.bf16.msra.mxu0 %v1632
        %1638 = vmatprep.subr.bf16.mxu0 0
        %1639 = vmatpush1.bf16.msra.mxu0 %v1633
        %1640 = vmatprep.subr.bf16.mxu0 0
        %1641 = vmatpush1.bf16.msra.mxu0 0
        %1642 = vmatprep.subr.bf16.mxu0 0
        %1643 = vmatpush1.bf16.msra.mxu0 0
        %1644 = vmatprep.subr.bf16.mxu0 0
        %1645 = vmatpush1.bf16.msra.mxu0 0
        %1646 = vmatprep.subr.bf16.mxu0 0
        %1647 = vmatpush1.bf16.msra.mxu0 0
        %1648 = vmatprep.subr.bf16.mxu0 0
        %1649 = vmatpush1.bf16.msra.mxu0 0
        %1650 = vmatprep.subr.bf16.mxu0 0
        %1651 = vmatpush1.bf16.msra.mxu0 0
        %1652 = vmatprep.subr.bf16.mxu0 0
        %1653 = vmatpush1.bf16.msra.mxu0 0
        %1654 = vmatprep.subr.bf16.mxu0 0
        %1655 = vmatpush1.bf16.msra.mxu0 0
        %1656 = vmatprep.subr.bf16.mxu0 0
        %1657 = vmatpush1.bf16.msra.mxu0 0
        %1658 = vmatprep.subr.bf16.mxu0 0
        %1659 = vmatpush1.bf16.msra.mxu0 0
        %1660 = vmatprep.subr.bf16.mxu0 0
        %1661 = vmatpush1.bf16.msra.mxu0 0
        %1662 = vmatprep.subr.bf16.mxu0 0
        %1663 = vmatpush1.bf16.msra.mxu0 0
        %1664 = vmatprep.subr.bf16.mxu0 0
        %1665 = vmatpush1.bf16.msra.mxu0 0
        %1666 = vmatprep.subr.bf16.mxu0 0
        %1667 = vmatpush1.bf16.msra.mxu0 0
        %1668 = vmatprep.mubr.bf16.mxu0 0
        %1669 = vmatmul.mubr.bf16.gmra.mrb[0].mxu0 %v1082
        %v1670 = vpop.f32.mrb[0].mxu0
        %v1671 = vadd.f32 0.0, %v1670
        %v1672 = vpop.f32.mrb[0].mxu0
        %v1673 = vpop.f32.mrb[0].mxu0
        %v1674 = vpop.f32.mrb[0].mxu0
        %1675 = vdwg.mxu0
        %v1680 = vunpack.c.l.b16 %v1516
        %v1681 = vunpack.c.l.b16 %v1517
        %v1682 = vunpack.c.l.b16 %v1518
        %v1683 = vunpack.c.l.b16 %v1519
        %v1684 = vpack.c.b16 %v1681, %v1680
        %v1685 = vpack.c.b16 %v1683, %v1682
        %1688 = vmatprep.subr.bf16.mxu0 0
        %1689 = vmatpush1.bf16.msra.mxu0 %v1684
        %1690 = vmatprep.subr.bf16.mxu0 0
        %1691 = vmatpush1.bf16.msra.mxu0 %v1685
        %1692 = vmatprep.subr.bf16.mxu0 0
        %1693 = vmatpush1.bf16.msra.mxu0 0
        %1694 = vmatprep.subr.bf16.mxu0 0
        %1695 = vmatpush1.bf16.msra.mxu0 0
        %1696 = vmatprep.subr.bf16.mxu0 0
        %1697 = vmatpush1.bf16.msra.mxu0 0
        %1698 = vmatprep.subr.bf16.mxu0 0
        %1699 = vmatpush1.bf16.msra.mxu0 0
        %1700 = vmatprep.subr.bf16.mxu0 0
        %1701 = vmatpush1.bf16.msra.mxu0 0
        %1702 = vmatprep.subr.bf16.mxu0 0
        %1703 = vmatpush1.bf16.msra.mxu0 0
        %1704 = vmatprep.subr.bf16.mxu0 0
        %1705 = vmatpush1.bf16.msra.mxu0 0
        %1706 = vmatprep.subr.bf16.mxu0 0
        %1707 = vmatpush1.bf16.msra.mxu0 0
        %1708 = vmatprep.subr.bf16.mxu0 0
        %1709 = vmatpush1.bf16.msra.mxu0 0
        %1710 = vmatprep.subr.bf16.mxu0 0
        %1711 = vmatpush1.bf16.msra.mxu0 0
        %1712 = vmatprep.subr.bf16.mxu0 0
        %1713 = vmatpush1.bf16.msra.mxu0 0
        %1714 = vmatprep.subr.bf16.mxu0 0
        %1715 = vmatpush1.bf16.msra.mxu0 0
        %1716 = vmatprep.subr.bf16.mxu0 0
        %1717 = vmatpush1.bf16.msra.mxu0 0
        %1718 = vmatprep.subr.bf16.mxu0 0
        %1719 = vmatpush1.bf16.msra.mxu0 0
        %1720 = vmatprep.mubr.bf16.mxu0 0
        %1721 = vmatmul.mubr.bf16.gmra.mrb[0].mxu0 %v1082
        %v1722 = vpop.f32.mrb[0].mxu0
        %v1723 = vadd.f32 0.0, %v1722
        %v1724 = vpop.f32.mrb[0].mxu0
        %v1725 = vpop.f32.mrb[0].mxu0
        %v1726 = vpop.f32.mrb[0].mxu0
        %1727 = vdwg.mxu0
        %v1728 = vld [vmem:[%s5] sm:$0xf]
        %v1729 = vld [vmem:[%s5 + $0x4] sm:$0xf]
        %v1730 = vld [vmem:[%s5 + $0x8] sm:$0xf]
        %v1731 = vld [vmem:[%s5 + $0xc] sm:$0xf]
        %v1732 = vpack.c.bf16 %v1119, %v1119
        %v1733 = vpack.c.bf16 %v1171, %v1171
        %v1734 = vpack.c.bf16 %v1223, %v1223
        %v1735 = vpack.c.bf16 %v1275, %v1275
        %v1736 = vpack.c.bf16 %v668, %v668
        %v1737 = vpack.c.bf16 %v720, %v720
        %v1738 = vpack.c.bf16 %v772, %v772
        %v1739 = vpack.c.bf16 %v824, %v824
        %vm1740 = vcmask 64512
        %v1742 = vsel %vm1740, %v1732, 0
        %v1745 = vsel %vm1740, %v1736, 0
        %1747 = vmatprep.subr.bf16.mxu0 0
        %1748 = vmatpush1.bf16.xpose.msra.mxu0 %v1745
        %1749 = vmatprep.subr.bf16.mxu0 0
        %1750 = vmatpush1.bf16.xpose.msra.mxu0 0
        %1751 = vmatprep.subr.bf16.mxu0 0
        %1752 = vmatpush1.bf16.xpose.msra.mxu0 0
        %1753 = vmatprep.subr.bf16.mxu0 0
        %1754 = vmatpush1.bf16.xpose.msra.mxu0 0
        %1755 = vmatprep.subr.bf16.mxu0 0
        %1756 = vmatpush1.bf16.xpose.msra.mxu0 0
        %1757 = vmatprep.subr.bf16.mxu0 0
        %1758 = vmatpush1.bf16.xpose.msra.mxu0 0
        %1759 = vmatprep.subr.bf16.mxu0 0
        %1760 = vmatpush1.bf16.xpose.msra.mxu0 0
        %1761 = vmatprep.subr.bf16.mxu0 0
        %1762 = vmatpush1.bf16.xpose.msra.mxu0 0
        %1763 = vmatprep.subr.bf16.mxu0 0
        %1764 = vmatpush1.bf16.xpose.msra.mxu0 0
        %1765 = vmatprep.subr.bf16.mxu0 0
        %1766 = vmatpush1.bf16.xpose.msra.mxu0 0
        %1767 = vmatprep.subr.bf16.mxu0 0
        %1768 = vmatpush1.bf16.xpose.msra.mxu0 0
        %1769 = vmatprep.subr.bf16.mxu0 0
        %1770 = vmatpush1.bf16.xpose.msra.mxu0 0
        %1771 = vmatprep.subr.bf16.mxu0 0
        %1772 = vmatpush1.bf16.xpose.msra.mxu0 0
        %1773 = vmatprep.subr.bf16.mxu0 0
        %1774 = vmatpush1.bf16.xpose.msra.mxu0 0
        %1775 = vmatprep.subr.bf16.mxu0 0
        %1776 = vmatpush1.bf16.xpose.msra.mxu0 0
        %1777 = vmatprep.subr.bf16.mxu0 0
        %1778 = vmatpush1.bf16.xpose.msra.mxu0 0
        %1779 = vmatprep.mubr.bf16.mxu0 0
        %1780 = vmatmul.mubr.bf16.gmra.mrb[0].mxu0 %v1742
        %v1781 = vpop.f32.mrb[0].mxu0
        %v1782 = vadd.f32 0.0, %v1781
        %v1783 = vpop.f32.mrb[0].mxu0
        %v1784 = vpop.f32.mrb[0].mxu0
        %v1785 = vpop.f32.mrb[0].mxu0
        %1786 = vdwg.mxu0
        %v1788 = vsel %vm1740, %v1733, 0
        %v1791 = vsel %vm1740, %v1737, 0
        %1793 = vmatprep.subr.bf16.mxu0 0
        %1794 = vmatpush1.bf16.xpose.msra.mxu0 %v1791
        %1795 = vmatprep.subr.bf16.mxu0 0
        %1796 = vmatpush1.bf16.xpose.msra.mxu0 0
        %1797 = vmatprep.subr.bf16.mxu0 0
        %1798 = vmatpush1.bf16.xpose.msra.mxu0 0
        %1799 = vmatprep.subr.bf16.mxu0 0
        %1800 = vmatpush1.bf16.xpose.msra.mxu0 0
        %1801 = vmatprep.subr.bf16.mxu0 0
        %1802 = vmatpush1.bf16.xpose.msra.mxu0 0
        %1803 = vmatprep.subr.bf16.mxu0 0
        %1804 = vmatpush1.bf16.xpose.msra.mxu0 0
        %1805 = vmatprep.subr.bf16.mxu0 0
        %1806 = vmatpush1.bf16.xpose.msra.mxu0 0
        %1807 = vmatprep.subr.bf16.mxu0 0
        %1808 = vmatpush1.bf16.xpose.msra.mxu0 0
        %1809 = vmatprep.subr.bf16.mxu0 0
        %1810 = vmatpush1.bf16.xpose.msra.mxu0 0
        %1811 = vmatprep.subr.bf16.mxu0 0
        %1812 = vmatpush1.bf16.xpose.msra.mxu0 0
        %1813 = vmatprep.subr.bf16.mxu0 0
        %1814 = vmatpush1.bf16.xpose.msra.mxu0 0
        %1815 = vmatprep.subr.bf16.mxu0 0
        %1816 = vmatpush1.bf16.xpose.msra.mxu0 0
        %1817 = vmatprep.subr.bf16.mxu0 0
        %1818 = vmatpush1.bf16.xpose.msra.mxu0 0
        %1819 = vmatprep.subr.bf16.mxu0 0
        %1820 = vmatpush1.bf16.xpose.msra.mxu0 0
        %1821 = vmatprep.subr.bf16.mxu0 0
        %1822 = vmatpush1.bf16.xpose.msra.mxu0 0
        %1823 = vmatprep.subr.bf16.mxu0 0
        %1824 = vmatpush1.bf16.xpose.msra.mxu0 0
        %1825 = vmatprep.mubr.bf16.mxu0 0
        %1826 = vmatmul.mubr.bf16.gmra.mrb[0].mxu0 %v1788
        %v1827 = vpop.f32.mrb[0].mxu0
        %v1828 = vadd.f32 0.0, %v1827
        %v1829 = vpop.f32.mrb[0].mxu0
        %v1830 = vpop.f32.mrb[0].mxu0
        %v1831 = vpop.f32.mrb[0].mxu0
        %1832 = vdwg.mxu0
        %v1834 = vsel %vm1740, %v1734, 0
        %v1837 = vsel %vm1740, %v1738, 0
        %1839 = vmatprep.subr.bf16.mxu0 0
        %1840 = vmatpush1.bf16.xpose.msra.mxu0 %v1837
        %1841 = vmatprep.subr.bf16.mxu0 0
        %1842 = vmatpush1.bf16.xpose.msra.mxu0 0
        %1843 = vmatprep.subr.bf16.mxu0 0
        %1844 = vmatpush1.bf16.xpose.msra.mxu0 0
        %1845 = vmatprep.subr.bf16.mxu0 0
        %1846 = vmatpush1.bf16.xpose.msra.mxu0 0
        %1847 = vmatprep.subr.bf16.mxu0 0
        %1848 = vmatpush1.bf16.xpose.msra.mxu0 0
        %1849 = vmatprep.subr.bf16.mxu0 0
        %1850 = vmatpush1.bf16.xpose.msra.mxu0 0
        %1851 = vmatprep.subr.bf16.mxu0 0
        %1852 = vmatpush1.bf16.xpose.msra.mxu0 0
        %1853 = vmatprep.subr.bf16.mxu0 0
        %1854 = vmatpush1.bf16.xpose.msra.mxu0 0
        %1855 = vmatprep.subr.bf16.mxu0 0
        %1856 = vmatpush1.bf16.xpose.msra.mxu0 0
        %1857 = vmatprep.subr.bf16.mxu0 0
        %1858 = vmatpush1.bf16.xpose.msra.mxu0 0
        %1859 = vmatprep.subr.bf16.mxu0 0
        %1860 = vmatpush1.bf16.xpose.msra.mxu0 0
        %1861 = vmatprep.subr.bf16.mxu0 0
        %1862 = vmatpush1.bf16.xpose.msra.mxu0 0
        %1863 = vmatprep.subr.bf16.mxu0 0
        %1864 = vmatpush1.bf16.xpose.msra.mxu0 0
        %1865 = vmatprep.subr.bf16.mxu0 0
        %1866 = vmatpush1.bf16.xpose.msra.mxu0 0
        %1867 = vmatprep.subr.bf16.mxu0 0
        %1868 = vmatpush1.bf16.xpose.msra.mxu0 0
        %1869 = vmatprep.subr.bf16.mxu0 0
        %1870 = vmatpush1.bf16.xpose.msra.mxu0 0
        %1871 = vmatprep.mubr.bf16.mxu0 0
        %1872 = vmatmul.mubr.bf16.gmra.mrb[0].mxu0 %v1834
        %v1873 = vpop.f32.mrb[0].mxu0
        %v1874 = vadd.f32 0.0, %v1873
        %v1875 = vpop.f32.mrb[0].mxu0
        %v1876 = vpop.f32.mrb[0].mxu0
        %v1877 = vpop.f32.mrb[0].mxu0
        %1878 = vdwg.mxu0
        %v1880 = vsel %vm1740, %v1735, 0
        %v1883 = vsel %vm1740, %v1739, 0
        %1885 = vmatprep.subr.bf16.mxu0 0
        %1886 = vmatpush1.bf16.xpose.msra.mxu0 %v1883
        %1887 = vmatprep.subr.bf16.mxu0 0
        %1888 = vmatpush1.bf16.xpose.msra.mxu0 0
        %1889 = vmatprep.subr.bf16.mxu0 0
        %1890 = vmatpush1.bf16.xpose.msra.mxu0 0
        %1891 = vmatprep.subr.bf16.mxu0 0
        %1892 = vmatpush1.bf16.xpose.msra.mxu0 0
        %1893 = vmatprep.subr.bf16.mxu0 0
        %1894 = vmatpush1.bf16.xpose.msra.mxu0 0
        %1895 = vmatprep.subr.bf16.mxu0 0
        %1896 = vmatpush1.bf16.xpose.msra.mxu0 0
        %1897 = vmatprep.subr.bf16.mxu0 0
        %1898 = vmatpush1.bf16.xpose.msra.mxu0 0
        %1899 = vmatprep.subr.bf16.mxu0 0
        %1900 = vmatpush1.bf16.xpose.msra.mxu0 0
        %1901 = vmatprep.subr.bf16.mxu0 0
        %1902 = vmatpush1.bf16.xpose.msra.mxu0 0
        %1903 = vmatprep.subr.bf16.mxu0 0
        %1904 = vmatpush1.bf16.xpose.msra.mxu0 0
        %1905 = vmatprep.subr.bf16.mxu0 0
        %1906 = vmatpush1.bf16.xpose.msra.mxu0 0
        %1907 = vmatprep.subr.bf16.mxu0 0
        %1908 = vmatpush1.bf16.xpose.msra.mxu0 0
        %1909 = vmatprep.subr.bf16.mxu0 0
        %1910 = vmatpush1.bf16.xpose.msra.mxu0 0
        %1911 = vmatprep.subr.bf16.mxu0 0
        %1912 = vmatpush1.bf16.xpose.msra.mxu0 0
        %1913 = vmatprep.subr.bf16.mxu0 0
        %1914 = vmatpush1.bf16.xpose.msra.mxu0 0
        %1915 = vmatprep.subr.bf16.mxu0 0
        %1916 = vmatpush1.bf16.xpose.msra.mxu0 0
        %1917 = vmatprep.mubr.bf16.mxu0 0
        %1918 = vmatmul.mubr.bf16.gmra.mrb[0].mxu0 %v1880
        %v1919 = vpop.f32.mrb[0].mxu0
        %v1920 = vadd.f32 0.0, %v1919
        %v1921 = vpop.f32.mrb[0].mxu0
        %v1922 = vpop.f32.mrb[0].mxu0
        %v1923 = vpop.f32.mrb[0].mxu0
        %1924 = vdwg.mxu0
        %v1925 = vmul.f32 %v1782, 0.35355338
        %v1926 = vmul.f32 %v1828, 0.35355338
        %v1927 = vmul.f32 %v1874, 0.35355338
        %v1928 = vmul.f32 %v1920, 0.35355338
        %v1929 = vsel %vm1740, %v1925, -inf
        %1930 = vmax.xlane.f32.xlu0 %v1929
        %v1931 = vpop.xlane.xlu0 %1930
        %v1932 = vsel %vm1740, %v1926, -inf
        %1933 = vmax.xlane.f32.xlu0 %v1932
        %v1934 = vpop.xlane.xlu0 %1933
        %v1935 = vsel %vm1740, %v1927, -inf
        %1936 = vmax.xlane.f32.xlu0 %v1935
        %v1937 = vpop.xlane.xlu0 %1936
        %v1938 = vsel %vm1740, %v1928, -inf
        %1939 = vmax.xlane.f32.xlu0 %v1938
        %v1940 = vpop.xlane.xlu0 %1939
        %v1941 = vsub.f32 %v1925, %v1931
        %v1942 = vsub.f32 %v1926, %v1934
        %v1943 = vsub.f32 %v1927, %v1937
        %v1944 = vsub.f32 %v1928, %v1940
        %v1945 = vmul.f32 %v1941, 1.442695
        %v1946 = vpow.pop %v1945
        %v1947 = vmul.f32 %v1942, 1.442695
        %v1948 = vpow.pop %v1947
        %v1949 = vmul.f32 %v1943, 1.442695
        %v1950 = vpow.pop %v1949
        %v1951 = vmul.f32 %v1944, 1.442695
        %v1952 = vpow.pop %v1951
        %v1953 = vsel %vm1740, %v1946, 0.0
        %1954 = vadd.xlane.f32.xlu0 %v1953
        %v1955 = vpop.xlane.xlu0 %1954
        %v1956 = vsel %vm1740, %v1948, 0.0
        %1957 = vadd.xlane.f32.xlu0 %v1956
        %v1958 = vpop.xlane.xlu0 %1957
        %v1959 = vsel %vm1740, %v1950, 0.0
        %1960 = vadd.xlane.f32.xlu0 %v1959
        %v1961 = vpop.xlane.xlu0 %1960
        %v1962 = vsel %vm1740, %v1952, 0.0
        %1963 = vadd.xlane.f32.xlu0 %v1962
        %v1964 = vpop.xlane.xlu0 %1963
        %v1965 = vrcp.pop %v1955
        %v1966 = vrcp.pop %v1958
        %v1967 = vrcp.pop %v1961
        %v1968 = vrcp.pop %v1964
        %v1969 = vmul.f32 %v1946, %v1965
        %v1970 = vmul.f32 %v1948, %v1966
        %v1971 = vmul.f32 %v1950, %v1967
        %v1972 = vmul.f32 %v1952, %v1968
        %v1973 = vpack.c.bf16 %v1969, %v1969
        %v1974 = vpack.c.bf16 %v1970, %v1970
        %v1975 = vpack.c.bf16 %v1971, %v1971
        %v1976 = vpack.c.bf16 %v1972, %v1972
        %v1977 = vpack.c.bf16 %v892, %v892
        %v1978 = vpack.c.bf16 %v944, %v944
        %v1979 = vpack.c.bf16 %v996, %v996
        %v1980 = vpack.c.bf16 %v1048, %v1048
        %v1982 = vsel %vm1740, %v1973, 0
        %vm1984 = vcmask 1043456
        %v1986 = vsel %vm1984, %v1977, 0
        %1988 = vmatprep.subr.bf16.mxu0 0
        %1989 = vmatpush1.bf16.msra.mxu0 %v1986
        %1990 = vmatprep.subr.bf16.mxu0 0
        %1991 = vmatpush1.bf16.msra.mxu0 0
        %1992 = vmatprep.subr.bf16.mxu0 0
        %1993 = vmatpush1.bf16.msra.mxu0 0
        %1994 = vmatprep.subr.bf16.mxu0 0
        %1995 = vmatpush1.bf16.msra.mxu0 0
        %1996 = vmatprep.subr.bf16.mxu0 0
        %1997 = vmatpush1.bf16.msra.mxu0 0
        %1998 = vmatprep.subr.bf16.mxu0 0
        %1999 = vmatpush1.bf16.msra.mxu0 0
        %2000 = vmatprep.subr.bf16.mxu0 0
        %2001 = vmatpush1.bf16.msra.mxu0 0
        %2002 = vmatprep.subr.bf16.mxu0 0
        %2003 = vmatpush1.bf16.msra.mxu0 0
        %2004 = vmatprep.subr.bf16.mxu0 0
        %2005 = vmatpush1.bf16.msra.mxu0 0
        %2006 = vmatprep.subr.bf16.mxu0 0
        %2007 = vmatpush1.bf16.msra.mxu0 0
        %2008 = vmatprep.subr.bf16.mxu0 0
        %2009 = vmatpush1.bf16.msra.mxu0 0
        %2010 = vmatprep.subr.bf16.mxu0 0
        %2011 = vmatpush1.bf16.msra.mxu0 0
        %2012 = vmatprep.subr.bf16.mxu0 0
        %2013 = vmatpush1.bf16.msra.mxu0 0
        %2014 = vmatprep.subr.bf16.mxu0 0
        %2015 = vmatpush1.bf16.msra.mxu0 0
        %2016 = vmatprep.subr.bf16.mxu0 0
        %2017 = vmatpush1.bf16.msra.mxu0 0
        %2018 = vmatprep.subr.bf16.mxu0 0
        %2019 = vmatpush1.bf16.msra.mxu0 0
        %2020 = vmatprep.mubr.bf16.mxu0 0
        %2021 = vmatmul.mubr.bf16.gmra.mrb[0].mxu0 %v1982
        %v2022 = vpop.f32.mrb[0].mxu0
        %v2023 = vadd.f32 0.0, %v2022
        %v2024 = vpop.f32.mrb[0].mxu0
        %v2025 = vpop.f32.mrb[0].mxu0
        %v2026 = vpop.f32.mrb[0].mxu0
        %2027 = vdwg.mxu0
        %v2029 = vsel %vm1740, %v1974, 0
        %v2032 = vsel %vm1984, %v1978, 0
        %2034 = vmatprep.subr.bf16.mxu0 0
        %2035 = vmatpush1.bf16.msra.mxu0 %v2032
        %2036 = vmatprep.subr.bf16.mxu0 0
        %2037 = vmatpush1.bf16.msra.mxu0 0
        %2038 = vmatprep.subr.bf16.mxu0 0
        %2039 = vmatpush1.bf16.msra.mxu0 0
        %2040 = vmatprep.subr.bf16.mxu0 0
        %2041 = vmatpush1.bf16.msra.mxu0 0
        %2042 = vmatprep.subr.bf16.mxu0 0
        %2043 = vmatpush1.bf16.msra.mxu0 0
        %2044 = vmatprep.subr.bf16.mxu0 0
        %2045 = vmatpush1.bf16.msra.mxu0 0
        %2046 = vmatprep.subr.bf16.mxu0 0
        %2047 = vmatpush1.bf16.msra.mxu0 0
        %2048 = vmatprep.subr.bf16.mxu0 0
        %2049 = vmatpush1.bf16.msra.mxu0 0
        %2050 = vmatprep.subr.bf16.mxu0 0
        %2051 = vmatpush1.bf16.msra.mxu0 0
        %2052 = vmatprep.subr.bf16.mxu0 0
        %2053 = vmatpush1.bf16.msra.mxu0 0
        %2054 = vmatprep.subr.bf16.mxu0 0
        %2055 = vmatpush1.bf16.msra.mxu0 0
        %2056 = vmatprep.subr.bf16.mxu0 0
        %2057 = vmatpush1.bf16.msra.mxu0 0
        %2058 = vmatprep.subr.bf16.mxu0 0
        %2059 = vmatpush1.bf16.msra.mxu0 0
        %2060 = vmatprep.subr.bf16.mxu0 0
        %2061 = vmatpush1.bf16.msra.mxu0 0
        %2062 = vmatprep.subr.bf16.mxu0 0
        %2063 = vmatpush1.bf16.msra.mxu0 0
        %2064 = vmatprep.subr.bf16.mxu0 0
        %2065 = vmatpush1.bf16.msra.mxu0 0
        %2066 = vmatprep.mubr.bf16.mxu0 0
        %2067 = vmatmul.mubr.bf16.gmra.mrb[0].mxu0 %v2029
        %v2068 = vpop.f32.mrb[0].mxu0
        %v2069 = vadd.f32 0.0, %v2068
        %v2070 = vpop.f32.mrb[0].mxu0
        %v2071 = vpop.f32.mrb[0].mxu0
        %v2072 = vpop.f32.mrb[0].mxu0
        %2073 = vdwg.mxu0
        %v2075 = vsel %vm1740, %v1975, 0
        %v2078 = vsel %vm1984, %v1979, 0
        %2080 = vmatprep.subr.bf16.mxu0 0
        %2081 = vmatpush1.bf16.msra.mxu0 %v2078
        %2082 = vmatprep.subr.bf16.mxu0 0
        %2083 = vmatpush1.bf16.msra.mxu0 0
        %2084 = vmatprep.subr.bf16.mxu0 0
        %2085 = vmatpush1.bf16.msra.mxu0 0
        %2086 = vmatprep.subr.bf16.mxu0 0
        %2087 = vmatpush1.bf16.msra.mxu0 0
        %2088 = vmatprep.subr.bf16.mxu0 0
        %2089 = vmatpush1.bf16.msra.mxu0 0
        %2090 = vmatprep.subr.bf16.mxu0 0
        %2091 = vmatpush1.bf16.msra.mxu0 0
        %2092 = vmatprep.subr.bf16.mxu0 0
        %2093 = vmatpush1.bf16.msra.mxu0 0
        %2094 = vmatprep.subr.bf16.mxu0 0
        %2095 = vmatpush1.bf16.msra.mxu0 0
        %2096 = vmatprep.subr.bf16.mxu0 0
        %2097 = vmatpush1.bf16.msra.mxu0 0
        %2098 = vmatprep.subr.bf16.mxu0 0
        %2099 = vmatpush1.bf16.msra.mxu0 0
        %2100 = vmatprep.subr.bf16.mxu0 0
        %2101 = vmatpush1.bf16.msra.mxu0 0
        %2102 = vmatprep.subr.bf16.mxu0 0
        %2103 = vmatpush1.bf16.msra.mxu0 0
        %2104 = vmatprep.subr.bf16.mxu0 0
        %2105 = vmatpush1.bf16.msra.mxu0 0
        %2106 = vmatprep.subr.bf16.mxu0 0
        %2107 = vmatpush1.bf16.msra.mxu0 0
        %2108 = vmatprep.subr.bf16.mxu0 0
        %2109 = vmatpush1.bf16.msra.mxu0 0
        %2110 = vmatprep.subr.bf16.mxu0 0
        %2111 = vmatpush1.bf16.msra.mxu0 0
        %2112 = vmatprep.mubr.bf16.mxu0 0
        %2113 = vmatmul.mubr.bf16.gmra.mrb[0].mxu0 %v2075
        %v2114 = vpop.f32.mrb[0].mxu0
        %v2115 = vadd.f32 0.0, %v2114
        %v2116 = vpop.f32.mrb[0].mxu0
        %v2117 = vpop.f32.mrb[0].mxu0
        %v2118 = vpop.f32.mrb[0].mxu0
        %2119 = vdwg.mxu0
        %v2121 = vsel %vm1740, %v1976, 0
        %v2124 = vsel %vm1984, %v1980, 0
        %2126 = vmatprep.subr.bf16.mxu0 0
        %2127 = vmatpush1.bf16.msra.mxu0 %v2124
        %2128 = vmatprep.subr.bf16.mxu0 0
        %2129 = vmatpush1.bf16.msra.mxu0 0
        %2130 = vmatprep.subr.bf16.mxu0 0
        %2131 = vmatpush1.bf16.msra.mxu0 0
        %2132 = vmatprep.subr.bf16.mxu0 0
        %2133 = vmatpush1.bf16.msra.mxu0 0
        %2134 = vmatprep.subr.bf16.mxu0 0
        %2135 = vmatpush1.bf16.msra.mxu0 0
        %2136 = vmatprep.subr.bf16.mxu0 0
        %2137 = vmatpush1.bf16.msra.mxu0 0
        %2138 = vmatprep.subr.bf16.mxu0 0
        %2139 = vmatpush1.bf16.msra.mxu0 0
        %2140 = vmatprep.subr.bf16.mxu0 0
        %2141 = vmatpush1.bf16.msra.mxu0 0
        %2142 = vmatprep.subr.bf16.mxu0 0
        %2143 = vmatpush1.bf16.msra.mxu0 0
        %2144 = vmatprep.subr.bf16.mxu0 0
        %2145 = vmatpush1.bf16.msra.mxu0 0
        %2146 = vmatprep.subr.bf16.mxu0 0
        %2147 = vmatpush1.bf16.msra.mxu0 0
        %2148 = vmatprep.subr.bf16.mxu0 0
        %2149 = vmatpush1.bf16.msra.mxu0 0
        %2150 = vmatprep.subr.bf16.mxu0 0
        %2151 = vmatpush1.bf16.msra.mxu0 0
        %2152 = vmatprep.subr.bf16.mxu0 0
        %2153 = vmatpush1.bf16.msra.mxu0 0
        %2154 = vmatprep.subr.bf16.mxu0 0
        %2155 = vmatpush1.bf16.msra.mxu0 0
        %2156 = vmatprep.subr.bf16.mxu0 0
        %2157 = vmatpush1.bf16.msra.mxu0 0
        %2158 = vmatprep.mubr.bf16.mxu0 0
        %2159 = vmatmul.mubr.bf16.gmra.mrb[0].mxu0 %v2121
        %v2160 = vpop.f32.mrb[0].mxu0
        %v2161 = vadd.f32 0.0, %v2160
        %v2162 = vpop.f32.mrb[0].mxu0
        %v2163 = vpop.f32.mrb[0].mxu0
        %v2164 = vpop.f32.mrb[0].mxu0
        %2165 = vdwg.mxu0
        %v2166 = vpack.c.bf16 %v2023, %v2023
        %v2167 = vpack.c.bf16 %v2069, %v2069
        %v2168 = vpack.c.bf16 %v2115, %v2115
        %v2169 = vpack.c.bf16 %v2161, %v2161
        %v2171 = vsel %vm1740, %v2166, 0
        %v2174 = vsel %vm1984, %v1728, 0
        %2176 = vmatprep.subr.bf16.mxu0 0
        %2177 = vmatpush1.bf16.msra.mxu0 %v2174
        %2178 = vmatprep.subr.bf16.mxu0 0
        %2179 = vmatpush1.bf16.msra.mxu0 0
        %2180 = vmatprep.subr.bf16.mxu0 0
        %2181 = vmatpush1.bf16.msra.mxu0 0
        %2182 = vmatprep.subr.bf16.mxu0 0
        %2183 = vmatpush1.bf16.msra.mxu0 0
        %2184 = vmatprep.subr.bf16.mxu0 0
        %2185 = vmatpush1.bf16.msra.mxu0 0
        %2186 = vmatprep.subr.bf16.mxu0 0
        %2187 = vmatpush1.bf16.msra.mxu0 0
        %2188 = vmatprep.subr.bf16.mxu0 0
        %2189 = vmatpush1.bf16.msra.mxu0 0
        %2190 = vmatprep.subr.bf16.mxu0 0
        %2191 = vmatpush1.bf16.msra.mxu0 0
        %2192 = vmatprep.subr.bf16.mxu0 0
        %2193 = vmatpush1.bf16.msra.mxu0 0
        %2194 = vmatprep.subr.bf16.mxu0 0
        %2195 = vmatpush1.bf16.msra.mxu0 0
        %2196 = vmatprep.subr.bf16.mxu0 0
        %2197 = vmatpush1.bf16.msra.mxu0 0
        %2198 = vmatprep.subr.bf16.mxu0 0
        %2199 = vmatpush1.bf16.msra.mxu0 0
        %2200 = vmatprep.subr.bf16.mxu0 0
        %2201 = vmatpush1.bf16.msra.mxu0 0
        %2202 = vmatprep.subr.bf16.mxu0 0
        %2203 = vmatpush1.bf16.msra.mxu0 0
        %2204 = vmatprep.subr.bf16.mxu0 0
        %2205 = vmatpush1.bf16.msra.mxu0 0
        %2206 = vmatprep.subr.bf16.mxu0 0
        %2207 = vmatpush1.bf16.msra.mxu0 0
        %2208 = vmatprep.mubr.bf16.mxu0 0
        %2209 = vmatmul.mubr.bf16.gmra.mrb[0].mxu0 %v2171
        %v2210 = vpop.f32.mrb[0].mxu0
        %v2211 = vadd.f32 0.0, %v2210
        %v2212 = vpop.f32.mrb[0].mxu0
        %v2213 = vpop.f32.mrb[0].mxu0
        %v2214 = vpop.f32.mrb[0].mxu0
        %2215 = vdwg.mxu0
        %v2217 = vsel %vm1740, %v2167, 0
        %v2220 = vsel %vm1984, %v1729, 0
        %2222 = vmatprep.subr.bf16.mxu0 0
        %2223 = vmatpush1.bf16.msra.mxu0 %v2220
        %2224 = vmatprep.subr.bf16.mxu0 0
        %2225 = vmatpush1.bf16.msra.mxu0 0
        %2226 = vmatprep.subr.bf16.mxu0 0
        %2227 = vmatpush1.bf16.msra.mxu0 0
        %2228 = vmatprep.subr.bf16.mxu0 0
        %2229 = vmatpush1.bf16.msra.mxu0 0
        %2230 = vmatprep.subr.bf16.mxu0 0
        %2231 = vmatpush1.bf16.msra.mxu0 0
        %2232 = vmatprep.subr.bf16.mxu0 0
        %2233 = vmatpush1.bf16.msra.mxu0 0
        %2234 = vmatprep.subr.bf16.mxu0 0
        %2235 = vmatpush1.bf16.msra.mxu0 0
        %2236 = vmatprep.subr.bf16.mxu0 0
        %2237 = vmatpush1.bf16.msra.mxu0 0
        %2238 = vmatprep.subr.bf16.mxu0 0
        %2239 = vmatpush1.bf16.msra.mxu0 0
        %2240 = vmatprep.subr.bf16.mxu0 0
        %2241 = vmatpush1.bf16.msra.mxu0 0
        %2242 = vmatprep.subr.bf16.mxu0 0
        %2243 = vmatpush1.bf16.msra.mxu0 0
        %2244 = vmatprep.subr.bf16.mxu0 0
        %2245 = vmatpush1.bf16.msra.mxu0 0
        %2246 = vmatprep.subr.bf16.mxu0 0
        %2247 = vmatpush1.bf16.msra.mxu0 0
        %2248 = vmatprep.subr.bf16.mxu0 0
        %2249 = vmatpush1.bf16.msra.mxu0 0
        %2250 = vmatprep.subr.bf16.mxu0 0
        %2251 = vmatpush1.bf16.msra.mxu0 0
        %2252 = vmatprep.subr.bf16.mxu0 0
        %2253 = vmatpush1.bf16.msra.mxu0 0
        %2254 = vmatprep.mubr.bf16.mxu0 0
        %2255 = vmatmul.mubr.bf16.gmra.mrb[0].mxu0 %v2217
        %v2256 = vpop.f32.mrb[0].mxu0
        %v2257 = vadd.f32 0.0, %v2256
        %v2258 = vpop.f32.mrb[0].mxu0
        %v2259 = vpop.f32.mrb[0].mxu0
        %v2260 = vpop.f32.mrb[0].mxu0
        %2261 = vdwg.mxu0
        %v2263 = vsel %vm1740, %v2168, 0
        %v2266 = vsel %vm1984, %v1730, 0
        %2268 = vmatprep.subr.bf16.mxu0 0
        %2269 = vmatpush1.bf16.msra.mxu0 %v2266
        %2270 = vmatprep.subr.bf16.mxu0 0
        %2271 = vmatpush1.bf16.msra.mxu0 0
        %2272 = vmatprep.subr.bf16.mxu0 0
        %2273 = vmatpush1.bf16.msra.mxu0 0
        %2274 = vmatprep.subr.bf16.mxu0 0
        %2275 = vmatpush1.bf16.msra.mxu0 0
        %2276 = vmatprep.subr.bf16.mxu0 0
        %2277 = vmatpush1.bf16.msra.mxu0 0
        %2278 = vmatprep.subr.bf16.mxu0 0
        %2279 = vmatpush1.bf16.msra.mxu0 0
        %2280 = vmatprep.subr.bf16.mxu0 0
        %2281 = vmatpush1.bf16.msra.mxu0 0
        %2282 = vmatprep.subr.bf16.mxu0 0
        %2283 = vmatpush1.bf16.msra.mxu0 0
        %2284 = vmatprep.subr.bf16.mxu0 0
        %2285 = vmatpush1.bf16.msra.mxu0 0
        %2286 = vmatprep.subr.bf16.mxu0 0
        %2287 = vmatpush1.bf16.msra.mxu0 0
        %2288 = vmatprep.subr.bf16.mxu0 0
        %2289 = vmatpush1.bf16.msra.mxu0 0
        %2290 = vmatprep.subr.bf16.mxu0 0
        %2291 = vmatpush1.bf16.msra.mxu0 0
        %2292 = vmatprep.subr.bf16.mxu0 0
        %2293 = vmatpush1.bf16.msra.mxu0 0
        %2294 = vmatprep.subr.bf16.mxu0 0
        %2295 = vmatpush1.bf16.msra.mxu0 0
        %2296 = vmatprep.subr.bf16.mxu0 0
        %2297 = vmatpush1.bf16.msra.mxu0 0
        %2298 = vmatprep.subr.bf16.mxu0 0
        %2299 = vmatpush1.bf16.msra.mxu0 0
        %2300 = vmatprep.mubr.bf16.mxu0 0
        %2301 = vmatmul.mubr.bf16.gmra.mrb[0].mxu0 %v2263
        %v2302 = vpop.f32.mrb[0].mxu0
        %v2303 = vadd.f32 0.0, %v2302
        %v2304 = vpop.f32.mrb[0].mxu0
        %v2305 = vpop.f32.mrb[0].mxu0
        %v2306 = vpop.f32.mrb[0].mxu0
        %2307 = vdwg.mxu0
        %v2309 = vsel %vm1740, %v2169, 0
        %v2312 = vsel %vm1984, %v1731, 0
        %2314 = vmatprep.subr.bf16.mxu0 0
        %2315 = vmatpush1.bf16.msra.mxu0 %v2312
        %2316 = vmatprep.subr.bf16.mxu0 0
        %2317 = vmatpush1.bf16.msra.mxu0 0
        %2318 = vmatprep.subr.bf16.mxu0 0
        %2319 = vmatpush1.bf16.msra.mxu0 0
        %2320 = vmatprep.subr.bf16.mxu0 0
        %2321 = vmatpush1.bf16.msra.mxu0 0
        %2322 = vmatprep.subr.bf16.mxu0 0
        %2323 = vmatpush1.bf16.msra.mxu0 0
        %2324 = vmatprep.subr.bf16.mxu0 0
        %2325 = vmatpush1.bf16.msra.mxu0 0
        %2326 = vmatprep.subr.bf16.mxu0 0
        %2327 = vmatpush1.bf16.msra.mxu0 0
        %2328 = vmatprep.subr.bf16.mxu0 0
        %2329 = vmatpush1.bf16.msra.mxu0 0
        %2330 = vmatprep.subr.bf16.mxu0 0
        %2331 = vmatpush1.bf16.msra.mxu0 0
        %2332 = vmatprep.subr.bf16.mxu0 0
        %2333 = vmatpush1.bf16.msra.mxu0 0
        %2334 = vmatprep.subr.bf16.mxu0 0
        %2335 = vmatpush1.bf16.msra.mxu0 0
        %2336 = vmatprep.subr.bf16.mxu0 0
        %2337 = vmatpush1.bf16.msra.mxu0 0
        %2338 = vmatprep.subr.bf16.mxu0 0
        %2339 = vmatpush1.bf16.msra.mxu0 0
        %2340 = vmatprep.subr.bf16.mxu0 0
        %2341 = vmatpush1.bf16.msra.mxu0 0
        %2342 = vmatprep.subr.bf16.mxu0 0
        %2343 = vmatpush1.bf16.msra.mxu0 0
        %2344 = vmatprep.subr.bf16.mxu0 0
        %2345 = vmatpush1.bf16.msra.mxu0 0
        %2346 = vmatprep.mubr.bf16.mxu0 0
        %2347 = vmatmul.mubr.bf16.gmra.mrb[0].mxu0 %v2309
        %v2348 = vpop.f32.mrb[0].mxu0
        %v2349 = vadd.f32 0.0, %v2348
        %v2350 = vpop.f32.mrb[0].mxu0
        %v2351 = vpop.f32.mrb[0].mxu0
        %v2352 = vpop.f32.mrb[0].mxu0
        %2353 = vdwg.mxu0
        %v2354 = vsel %vm405, %v2211, 0.0
        %v2355 = vsel %vm405, %v2257, 0.0
        %v2356 = vadd.f32 %v2354, %v2355
        %v2357 = vsel %vm405, %v2303, 0.0
        %v2358 = vadd.f32 %v2356, %v2357
        %v2359 = vsel %vm405, %v2349, 0.0
        %v2360 = vadd.f32 %v2358, %v2359
        %v2361 = vld [vmem:[%s9] sm:$0xf]
        %v2362 = vld [vmem:[%s9 + $0x4] sm:$0xf]
        %v2363 = vld [vmem:[%s9 + $0x8] sm:$0xf]
        %v2364 = vld [vmem:[%s9 + $0xc] sm:$0xf]
        %v2365 = vpack.c.bf16 %v444, %v444
        %v2366 = vpack.c.bf16 %v496, %v496
        %v2367 = vpack.c.bf16 %v548, %v548
        %v2368 = vpack.c.bf16 %v600, %v600
        %v2369 = vpack.c.bf16 %v1343, %v1343
        %v2370 = vpack.c.bf16 %v1395, %v1395
        %v2371 = vpack.c.bf16 %v1447, %v1447
        %v2372 = vpack.c.bf16 %v1499, %v1499
        %v2374 = vsel %vm1740, %v2365, 0
        %v2377 = vsel %vm1740, %v2369, 0
        %2379 = vmatprep.subr.bf16.mxu0 0
        %2380 = vmatpush1.bf16.xpose.msra.mxu0 %v2377
        %2381 = vmatprep.subr.bf16.mxu0 0
        %2382 = vmatpush1.bf16.xpose.msra.mxu0 0
        %2383 = vmatprep.subr.bf16.mxu0 0
        %2384 = vmatpush1.bf16.xpose.msra.mxu0 0
        %2385 = vmatprep.subr.bf16.mxu0 0
        %2386 = vmatpush1.bf16.xpose.msra.mxu0 0
        %2387 = vmatprep.subr.bf16.mxu0 0
        %2388 = vmatpush1.bf16.xpose.msra.mxu0 0
        %2389 = vmatprep.subr.bf16.mxu0 0
        %2390 = vmatpush1.bf16.xpose.msra.mxu0 0
        %2391 = vmatprep.subr.bf16.mxu0 0
        %2392 = vmatpush1.bf16.xpose.msra.mxu0 0
        %2393 = vmatprep.subr.bf16.mxu0 0
        %2394 = vmatpush1.bf16.xpose.msra.mxu0 0
        %2395 = vmatprep.subr.bf16.mxu0 0
        %2396 = vmatpush1.bf16.xpose.msra.mxu0 0
        %2397 = vmatprep.subr.bf16.mxu0 0
        %2398 = vmatpush1.bf16.xpose.msra.mxu0 0
        %2399 = vmatprep.subr.bf16.mxu0 0
        %2400 = vmatpush1.bf16.xpose.msra.mxu0 0
        %2401 = vmatprep.subr.bf16.mxu0 0
        %2402 = vmatpush1.bf16.xpose.msra.mxu0 0
        %2403 = vmatprep.subr.bf16.mxu0 0
        %2404 = vmatpush1.bf16.xpose.msra.mxu0 0
        %2405 = vmatprep.subr.bf16.mxu0 0
        %2406 = vmatpush1.bf16.xpose.msra.mxu0 0
        %2407 = vmatprep.subr.bf16.mxu0 0
        %2408 = vmatpush1.bf16.xpose.msra.mxu0 0
        %2409 = vmatprep.subr.bf16.mxu0 0
        %2410 = vmatpush1.bf16.xpose.msra.mxu0 0
        %2411 = vmatprep.mubr.bf16.mxu0 0
        %2412 = vmatmul.mubr.bf16.gmra.mrb[0].mxu0 %v2374
        %v2413 = vpop.f32.mrb[0].mxu0
        %v2414 = vadd.f32 0.0, %v2413
        %v2415 = vpop.f32.mrb[0].mxu0
        %v2416 = vpop.f32.mrb[0].mxu0
        %v2417 = vpop.f32.mrb[0].mxu0
        %2418 = vdwg.mxu0
        %v2420 = vsel %vm1740, %v2366, 0
        %v2423 = vsel %vm1740, %v2370, 0
        %2425 = vmatprep.subr.bf16.mxu0 0
        %2426 = vmatpush1.bf16.xpose.msra.mxu0 %v2423
        %2427 = vmatprep.subr.bf16.mxu0 0
        %2428 = vmatpush1.bf16.xpose.msra.mxu0 0
        %2429 = vmatprep.subr.bf16.mxu0 0
        %2430 = vmatpush1.bf16.xpose.msra.mxu0 0
        %2431 = vmatprep.subr.bf16.mxu0 0
        %2432 = vmatpush1.bf16.xpose.msra.mxu0 0
        %2433 = vmatprep.subr.bf16.mxu0 0
        %2434 = vmatpush1.bf16.xpose.msra.mxu0 0
        %2435 = vmatprep.subr.bf16.mxu0 0
        %2436 = vmatpush1.bf16.xpose.msra.mxu0 0
        %2437 = vmatprep.subr.bf16.mxu0 0
        %2438 = vmatpush1.bf16.xpose.msra.mxu0 0
        %2439 = vmatprep.subr.bf16.mxu0 0
        %2440 = vmatpush1.bf16.xpose.msra.mxu0 0
        %2441 = vmatprep.subr.bf16.mxu0 0
        %2442 = vmatpush1.bf16.xpose.msra.mxu0 0
        %2443 = vmatprep.subr.bf16.mxu0 0
        %2444 = vmatpush1.bf16.xpose.msra.mxu0 0
        %2445 = vmatprep.subr.bf16.mxu0 0
        %2446 = vmatpush1.bf16.xpose.msra.mxu0 0
        %2447 = vmatprep.subr.bf16.mxu0 0
        %2448 = vmatpush1.bf16.xpose.msra.mxu0 0
        %2449 = vmatprep.subr.bf16.mxu0 0
        %2450 = vmatpush1.bf16.xpose.msra.mxu0 0
        %2451 = vmatprep.subr.bf16.mxu0 0
        %2452 = vmatpush1.bf16.xpose.msra.mxu0 0
        %2453 = vmatprep.subr.bf16.mxu0 0
        %2454 = vmatpush1.bf16.xpose.msra.mxu0 0
        %2455 = vmatprep.subr.bf16.mxu0 0
        %2456 = vmatpush1.bf16.xpose.msra.mxu0 0
        %2457 = vmatprep.mubr.bf16.mxu0 0
        %2458 = vmatmul.mubr.bf16.gmra.mrb[0].mxu0 %v2420
        %v2459 = vpop.f32.mrb[0].mxu0
        %v2460 = vadd.f32 0.0, %v2459
        %v2461 = vpop.f32.mrb[0].mxu0
        %v2462 = vpop.f32.mrb[0].mxu0
        %v2463 = vpop.f32.mrb[0].mxu0
        %2464 = vdwg.mxu0
        %v2466 = vsel %vm1740, %v2367, 0
        %v2469 = vsel %vm1740, %v2371, 0
        %2471 = vmatprep.subr.bf16.mxu0 0
        %2472 = vmatpush1.bf16.xpose.msra.mxu0 %v2469
        %2473 = vmatprep.subr.bf16.mxu0 0
        %2474 = vmatpush1.bf16.xpose.msra.mxu0 0
        %2475 = vmatprep.subr.bf16.mxu0 0
        %2476 = vmatpush1.bf16.xpose.msra.mxu0 0
        %2477 = vmatprep.subr.bf16.mxu0 0
        %2478 = vmatpush1.bf16.xpose.msra.mxu0 0
        %2479 = vmatprep.subr.bf16.mxu0 0
        %2480 = vmatpush1.bf16.xpose.msra.mxu0 0
        %2481 = vmatprep.subr.bf16.mxu0 0
        %2482 = vmatpush1.bf16.xpose.msra.mxu0 0
        %2483 = vmatprep.subr.bf16.mxu0 0
        %2484 = vmatpush1.bf16.xpose.msra.mxu0 0
        %2485 = vmatprep.subr.bf16.mxu0 0
        %2486 = vmatpush1.bf16.xpose.msra.mxu0 0
        %2487 = vmatprep.subr.bf16.mxu0 0
        %2488 = vmatpush1.bf16.xpose.msra.mxu0 0
        %2489 = vmatprep.subr.bf16.mxu0 0
        %2490 = vmatpush1.bf16.xpose.msra.mxu0 0
        %2491 = vmatprep.subr.bf16.mxu0 0
        %2492 = vmatpush1.bf16.xpose.msra.mxu0 0
        %2493 = vmatprep.subr.bf16.mxu0 0
        %2494 = vmatpush1.bf16.xpose.msra.mxu0 0
        %2495 = vmatprep.subr.bf16.mxu0 0
        %2496 = vmatpush1.bf16.xpose.msra.mxu0 0
        %2497 = vmatprep.subr.bf16.mxu0 0
        %2498 = vmatpush1.bf16.xpose.msra.mxu0 0
        %2499 = vmatprep.subr.bf16.mxu0 0
        %2500 = vmatpush1.bf16.xpose.msra.mxu0 0
        %2501 = vmatprep.subr.bf16.mxu0 0
        %2502 = vmatpush1.bf16.xpose.msra.mxu0 0
        %2503 = vmatprep.mubr.bf16.mxu0 0
        %2504 = vmatmul.mubr.bf16.gmra.mrb[0].mxu0 %v2466
        %v2505 = vpop.f32.mrb[0].mxu0
        %v2506 = vadd.f32 0.0, %v2505
        %v2507 = vpop.f32.mrb[0].mxu0
        %v2508 = vpop.f32.mrb[0].mxu0
        %v2509 = vpop.f32.mrb[0].mxu0
        %2510 = vdwg.mxu0
        %v2512 = vsel %vm1740, %v2368, 0
        %v2515 = vsel %vm1740, %v2372, 0
        %2517 = vmatprep.subr.bf16.mxu0 0
        %2518 = vmatpush1.bf16.xpose.msra.mxu0 %v2515
        %2519 = vmatprep.subr.bf16.mxu0 0
        %2520 = vmatpush1.bf16.xpose.msra.mxu0 0
        %2521 = vmatprep.subr.bf16.mxu0 0
        %2522 = vmatpush1.bf16.xpose.msra.mxu0 0
        %2523 = vmatprep.subr.bf16.mxu0 0
        %2524 = vmatpush1.bf16.xpose.msra.mxu0 0
        %2525 = vmatprep.subr.bf16.mxu0 0
        %2526 = vmatpush1.bf16.xpose.msra.mxu0 0
        %2527 = vmatprep.subr.bf16.mxu0 0
        %2528 = vmatpush1.bf16.xpose.msra.mxu0 0
        %2529 = vmatprep.subr.bf16.mxu0 0
        %2530 = vmatpush1.bf16.xpose.msra.mxu0 0
        %2531 = vmatprep.subr.bf16.mxu0 0
        %2532 = vmatpush1.bf16.xpose.msra.mxu0 0
        %2533 = vmatprep.subr.bf16.mxu0 0
        %2534 = vmatpush1.bf16.xpose.msra.mxu0 0
        %2535 = vmatprep.subr.bf16.mxu0 0
        %2536 = vmatpush1.bf16.xpose.msra.mxu0 0
        %2537 = vmatprep.subr.bf16.mxu0 0
        %2538 = vmatpush1.bf16.xpose.msra.mxu0 0
        %2539 = vmatprep.subr.bf16.mxu0 0
        %2540 = vmatpush1.bf16.xpose.msra.mxu0 0
        %2541 = vmatprep.subr.bf16.mxu0 0
        %2542 = vmatpush1.bf16.xpose.msra.mxu0 0
        %2543 = vmatprep.subr.bf16.mxu0 0
        %2544 = vmatpush1.bf16.xpose.msra.mxu0 0
        %2545 = vmatprep.subr.bf16.mxu0 0
        %2546 = vmatpush1.bf16.xpose.msra.mxu0 0
        %2547 = vmatprep.subr.bf16.mxu0 0
        %2548 = vmatpush1.bf16.xpose.msra.mxu0 0
        %2549 = vmatprep.mubr.bf16.mxu0 0
        %2550 = vmatmul.mubr.bf16.gmra.mrb[0].mxu0 %v2512
        %v2551 = vpop.f32.mrb[0].mxu0
        %v2552 = vadd.f32 0.0, %v2551
        %v2553 = vpop.f32.mrb[0].mxu0
        %v2554 = vpop.f32.mrb[0].mxu0
        %v2555 = vpop.f32.mrb[0].mxu0
        %2556 = vdwg.mxu0
        %v2557 = vmul.f32 %v2414, 0.35355338
        %v2558 = vmul.f32 %v2460, 0.35355338
        %v2559 = vmul.f32 %v2506, 0.35355338
        %v2560 = vmul.f32 %v2552, 0.35355338
        %v2561 = vsel %vm1740, %v2557, -inf
        %2562 = vmax.xlane.f32.xlu0 %v2561
        %v2563 = vpop.xlane.xlu0 %2562
        %v2564 = vsel %vm1740, %v2558, -inf
        %2565 = vmax.xlane.f32.xlu0 %v2564
        %v2566 = vpop.xlane.xlu0 %2565
        %v2567 = vsel %vm1740, %v2559, -inf
        %2568 = vmax.xlane.f32.xlu0 %v2567
        %v2569 = vpop.xlane.xlu0 %2568
        %v2570 = vsel %vm1740, %v2560, -inf
        %2571 = vmax.xlane.f32.xlu0 %v2570
        %v2572 = vpop.xlane.xlu0 %2571
        %v2573 = vsub.f32 %v2557, %v2563
        %v2574 = vsub.f32 %v2558, %v2566
        %v2575 = vsub.f32 %v2559, %v2569
        %v2576 = vsub.f32 %v2560, %v2572
        %v2577 = vmul.f32 %v2573, 1.442695
        %v2578 = vpow.pop %v2577
        %v2579 = vmul.f32 %v2574, 1.442695
        %v2580 = vpow.pop %v2579
        %v2581 = vmul.f32 %v2575, 1.442695
        %v2582 = vpow.pop %v2581
        %v2583 = vmul.f32 %v2576, 1.442695
        %v2584 = vpow.pop %v2583
        %v2585 = vsel %vm1740, %v2578, 0.0
        %2586 = vadd.xlane.f32.xlu0 %v2585
        %v2587 = vpop.xlane.xlu0 %2586
        %v2588 = vsel %vm1740, %v2580, 0.0
        %2589 = vadd.xlane.f32.xlu0 %v2588
        %v2590 = vpop.xlane.xlu0 %2589
        %v2591 = vsel %vm1740, %v2582, 0.0
        %2592 = vadd.xlane.f32.xlu0 %v2591
        %v2593 = vpop.xlane.xlu0 %2592
        %v2594 = vsel %vm1740, %v2584, 0.0
        %2595 = vadd.xlane.f32.xlu0 %v2594
        %v2596 = vpop.xlane.xlu0 %2595
        %v2597 = vrcp.pop %v2587
        %v2598 = vrcp.pop %v2590
        %v2599 = vrcp.pop %v2593
        %v2600 = vrcp.pop %v2596
        %v2601 = vmul.f32 %v2578, %v2597
        %v2602 = vmul.f32 %v2580, %v2598
        %v2603 = vmul.f32 %v2582, %v2599
        %v2604 = vmul.f32 %v2584, %v2600
        %v2605 = vpack.c.bf16 %v2601, %v2601
        %v2606 = vpack.c.bf16 %v2602, %v2602
        %v2607 = vpack.c.bf16 %v2603, %v2603
        %v2608 = vpack.c.bf16 %v2604, %v2604
        %v2609 = vpack.c.bf16 %v1567, %v1567
        %v2610 = vpack.c.bf16 %v1619, %v1619
        %v2611 = vpack.c.bf16 %v1671, %v1671
        %v2612 = vpack.c.bf16 %v1723, %v1723
        %v2614 = vsel %vm1740, %v2605, 0
        %v2617 = vsel %vm1984, %v2609, 0
        %2619 = vmatprep.subr.bf16.mxu0 0
        %2620 = vmatpush1.bf16.msra.mxu0 %v2617
        %2621 = vmatprep.subr.bf16.mxu0 0
        %2622 = vmatpush1.bf16.msra.mxu0 0
        %2623 = vmatprep.subr.bf16.mxu0 0
        %2624 = vmatpush1.bf16.msra.mxu0 0
        %2625 = vmatprep.subr.bf16.mxu0 0
        %2626 = vmatpush1.bf16.msra.mxu0 0
        %2627 = vmatprep.subr.bf16.mxu0 0
        %2628 = vmatpush1.bf16.msra.mxu0 0
        %2629 = vmatprep.subr.bf16.mxu0 0
        %2630 = vmatpush1.bf16.msra.mxu0 0
        %2631 = vmatprep.subr.bf16.mxu0 0
        %2632 = vmatpush1.bf16.msra.mxu0 0
        %2633 = vmatprep.subr.bf16.mxu0 0
        %2634 = vmatpush1.bf16.msra.mxu0 0
        %2635 = vmatprep.subr.bf16.mxu0 0
        %2636 = vmatpush1.bf16.msra.mxu0 0
        %2637 = vmatprep.subr.bf16.mxu0 0
        %2638 = vmatpush1.bf16.msra.mxu0 0
        %2639 = vmatprep.subr.bf16.mxu0 0
        %2640 = vmatpush1.bf16.msra.mxu0 0
        %2641 = vmatprep.subr.bf16.mxu0 0
        %2642 = vmatpush1.bf16.msra.mxu0 0
        %2643 = vmatprep.subr.bf16.mxu0 0
        %2644 = vmatpush1.bf16.msra.mxu0 0
        %2645 = vmatprep.subr.bf16.mxu0 0
        %2646 = vmatpush1.bf16.msra.mxu0 0
        %2647 = vmatprep.subr.bf16.mxu0 0
        %2648 = vmatpush1.bf16.msra.mxu0 0
        %2649 = vmatprep.subr.bf16.mxu0 0
        %2650 = vmatpush1.bf16.msra.mxu0 0
        %2651 = vmatprep.mubr.bf16.mxu0 0
        %2652 = vmatmul.mubr.bf16.gmra.mrb[0].mxu0 %v2614
        %v2653 = vpop.f32.mrb[0].mxu0
        %v2654 = vadd.f32 0.0, %v2653
        %v2655 = vpop.f32.mrb[0].mxu0
        %v2656 = vpop.f32.mrb[0].mxu0
        %v2657 = vpop.f32.mrb[0].mxu0
        %2658 = vdwg.mxu0
        %v2660 = vsel %vm1740, %v2606, 0
        %v2663 = vsel %vm1984, %v2610, 0
        %2665 = vmatprep.subr.bf16.mxu0 0
        %2666 = vmatpush1.bf16.msra.mxu0 %v2663
        %2667 = vmatprep.subr.bf16.mxu0 0
        %2668 = vmatpush1.bf16.msra.mxu0 0
        %2669 = vmatprep.subr.bf16.mxu0 0
        %2670 = vmatpush1.bf16.msra.mxu0 0
        %2671 = vmatprep.subr.bf16.mxu0 0
        %2672 = vmatpush1.bf16.msra.mxu0 0
        %2673 = vmatprep.subr.bf16.mxu0 0
        %2674 = vmatpush1.bf16.msra.mxu0 0
        %2675 = vmatprep.subr.bf16.mxu0 0
        %2676 = vmatpush1.bf16.msra.mxu0 0
        %2677 = vmatprep.subr.bf16.mxu0 0
        %2678 = vmatpush1.bf16.msra.mxu0 0
        %2679 = vmatprep.subr.bf16.mxu0 0
        %2680 = vmatpush1.bf16.msra.mxu0 0
        %2681 = vmatprep.subr.bf16.mxu0 0
        %2682 = vmatpush1.bf16.msra.mxu0 0
        %2683 = vmatprep.subr.bf16.mxu0 0
        %2684 = vmatpush1.bf16.msra.mxu0 0
        %2685 = vmatprep.subr.bf16.mxu0 0
        %2686 = vmatpush1.bf16.msra.mxu0 0
        %2687 = vmatprep.subr.bf16.mxu0 0
        %2688 = vmatpush1.bf16.msra.mxu0 0
        %2689 = vmatprep.subr.bf16.mxu0 0
        %2690 = vmatpush1.bf16.msra.mxu0 0
        %2691 = vmatprep.subr.bf16.mxu0 0
        %2692 = vmatpush1.bf16.msra.mxu0 0
        %2693 = vmatprep.subr.bf16.mxu0 0
        %2694 = vmatpush1.bf16.msra.mxu0 0
        %2695 = vmatprep.subr.bf16.mxu0 0
        %2696 = vmatpush1.bf16.msra.mxu0 0
        %2697 = vmatprep.mubr.bf16.mxu0 0
        %2698 = vmatmul.mubr.bf16.gmra.mrb[0].mxu0 %v2660
        %v2699 = vpop.f32.mrb[0].mxu0
        %v2700 = vadd.f32 0.0, %v2699
        %v2701 = vpop.f32.mrb[0].mxu0
        %v2702 = vpop.f32.mrb[0].mxu0
        %v2703 = vpop.f32.mrb[0].mxu0
        %2704 = vdwg.mxu0
        %v2706 = vsel %vm1740, %v2607, 0
        %v2709 = vsel %vm1984, %v2611, 0
        %2711 = vmatprep.subr.bf16.mxu0 0
        %2712 = vmatpush1.bf16.msra.mxu0 %v2709
        %2713 = vmatprep.subr.bf16.mxu0 0
        %2714 = vmatpush1.bf16.msra.mxu0 0
        %2715 = vmatprep.subr.bf16.mxu0 0
        %2716 = vmatpush1.bf16.msra.mxu0 0
        %2717 = vmatprep.subr.bf16.mxu0 0
        %2718 = vmatpush1.bf16.msra.mxu0 0
        %2719 = vmatprep.subr.bf16.mxu0 0
        %2720 = vmatpush1.bf16.msra.mxu0 0
        %2721 = vmatprep.subr.bf16.mxu0 0
        %2722 = vmatpush1.bf16.msra.mxu0 0
        %2723 = vmatprep.subr.bf16.mxu0 0
        %2724 = vmatpush1.bf16.msra.mxu0 0
        %2725 = vmatprep.subr.bf16.mxu0 0
        %2726 = vmatpush1.bf16.msra.mxu0 0
        %2727 = vmatprep.subr.bf16.mxu0 0
        %2728 = vmatpush1.bf16.msra.mxu0 0
        %2729 = vmatprep.subr.bf16.mxu0 0
        %2730 = vmatpush1.bf16.msra.mxu0 0
        %2731 = vmatprep.subr.bf16.mxu0 0
        %2732 = vmatpush1.bf16.msra.mxu0 0
        %2733 = vmatprep.subr.bf16.mxu0 0
        %2734 = vmatpush1.bf16.msra.mxu0 0
        %2735 = vmatprep.subr.bf16.mxu0 0
        %2736 = vmatpush1.bf16.msra.mxu0 0
        %2737 = vmatprep.subr.bf16.mxu0 0
        %2738 = vmatpush1.bf16.msra.mxu0 0
        %2739 = vmatprep.subr.bf16.mxu0 0
        %2740 = vmatpush1.bf16.msra.mxu0 0
        %2741 = vmatprep.subr.bf16.mxu0 0
        %2742 = vmatpush1.bf16.msra.mxu0 0
        %2743 = vmatprep.mubr.bf16.mxu0 0
        %2744 = vmatmul.mubr.bf16.gmra.mrb[0].mxu0 %v2706
        %v2745 = vpop.f32.mrb[0].mxu0
        %v2746 = vadd.f32 0.0, %v2745
        %v2747 = vpop.f32.mrb[0].mxu0
        %v2748 = vpop.f32.mrb[0].mxu0
        %v2749 = vpop.f32.mrb[0].mxu0
        %2750 = vdwg.mxu0
        %v2752 = vsel %vm1740, %v2608, 0
        %v2755 = vsel %vm1984, %v2612, 0
        %2757 = vmatprep.subr.bf16.mxu0 0
        %2758 = vmatpush1.bf16.msra.mxu0 %v2755
        %2759 = vmatprep.subr.bf16.mxu0 0
        %2760 = vmatpush1.bf16.msra.mxu0 0
        %2761 = vmatprep.subr.bf16.mxu0 0
        %2762 = vmatpush1.bf16.msra.mxu0 0
        %2763 = vmatprep.subr.bf16.mxu0 0
        %2764 = vmatpush1.bf16.msra.mxu0 0
        %2765 = vmatprep.subr.bf16.mxu0 0
        %2766 = vmatpush1.bf16.msra.mxu0 0
        %2767 = vmatprep.subr.bf16.mxu0 0
        %2768 = vmatpush1.bf16.msra.mxu0 0
        %2769 = vmatprep.subr.bf16.mxu0 0
        %2770 = vmatpush1.bf16.msra.mxu0 0
        %2771 = vmatprep.subr.bf16.mxu0 0
        %2772 = vmatpush1.bf16.msra.mxu0 0
        %2773 = vmatprep.subr.bf16.mxu0 0
        %2774 = vmatpush1.bf16.msra.mxu0 0
        %2775 = vmatprep.subr.bf16.mxu0 0
        %2776 = vmatpush1.bf16.msra.mxu0 0
        %2777 = vmatprep.subr.bf16.mxu0 0
        %2778 = vmatpush1.bf16.msra.mxu0 0
        %2779 = vmatprep.subr.bf16.mxu0 0
        %2780 = vmatpush1.bf16.msra.mxu0 0
        %2781 = vmatprep.subr.bf16.mxu0 0
        %2782 = vmatpush1.bf16.msra.mxu0 0
        %2783 = vmatprep.subr.bf16.mxu0 0
        %2784 = vmatpush1.bf16.msra.mxu0 0
        %2785 = vmatprep.subr.bf16.mxu0 0
        %2786 = vmatpush1.bf16.msra.mxu0 0
        %2787 = vmatprep.subr.bf16.mxu0 0
        %2788 = vmatpush1.bf16.msra.mxu0 0
        %2789 = vmatprep.mubr.bf16.mxu0 0
        %2790 = vmatmul.mubr.bf16.gmra.mrb[0].mxu0 %v2752
        %v2791 = vpop.f32.mrb[0].mxu0
        %v2792 = vadd.f32 0.0, %v2791
        %v2793 = vpop.f32.mrb[0].mxu0
        %v2794 = vpop.f32.mrb[0].mxu0
        %v2795 = vpop.f32.mrb[0].mxu0
        %2796 = vdwg.mxu0
        %v2797 = vpack.c.bf16 %v2654, %v2654
        %v2798 = vpack.c.bf16 %v2700, %v2700
        %v2799 = vpack.c.bf16 %v2746, %v2746
        %v2800 = vpack.c.bf16 %v2792, %v2792
        %v2802 = vsel %vm1740, %v2797, 0
        %v2805 = vsel %vm1984, %v2361, 0
        %2807 = vmatprep.subr.bf16.mxu0 0
        %2808 = vmatpush1.bf16.msra.mxu0 %v2805
        %2809 = vmatprep.subr.bf16.mxu0 0
        %2810 = vmatpush1.bf16.msra.mxu0 0
        %2811 = vmatprep.subr.bf16.mxu0 0
        %2812 = vmatpush1.bf16.msra.mxu0 0
        %2813 = vmatprep.subr.bf16.mxu0 0
        %2814 = vmatpush1.bf16.msra.mxu0 0
        %2815 = vmatprep.subr.bf16.mxu0 0
        %2816 = vmatpush1.bf16.msra.mxu0 0
        %2817 = vmatprep.subr.bf16.mxu0 0
        %2818 = vmatpush1.bf16.msra.mxu0 0
        %2819 = vmatprep.subr.bf16.mxu0 0
        %2820 = vmatpush1.bf16.msra.mxu0 0
        %2821 = vmatprep.subr.bf16.mxu0 0
        %2822 = vmatpush1.bf16.msra.mxu0 0
        %2823 = vmatprep.subr.bf16.mxu0 0
        %2824 = vmatpush1.bf16.msra.mxu0 0
        %2825 = vmatprep.subr.bf16.mxu0 0
        %2826 = vmatpush1.bf16.msra.mxu0 0
        %2827 = vmatprep.subr.bf16.mxu0 0
        %2828 = vmatpush1.bf16.msra.mxu0 0
        %2829 = vmatprep.subr.bf16.mxu0 0
        %2830 = vmatpush1.bf16.msra.mxu0 0
        %2831 = vmatprep.subr.bf16.mxu0 0
        %2832 = vmatpush1.bf16.msra.mxu0 0
        %2833 = vmatprep.subr.bf16.mxu0 0
        %2834 = vmatpush1.bf16.msra.mxu0 0
        %2835 = vmatprep.subr.bf16.mxu0 0
        %2836 = vmatpush1.bf16.msra.mxu0 0
        %2837 = vmatprep.subr.bf16.mxu0 0
        %2838 = vmatpush1.bf16.msra.mxu0 0
        %2839 = vmatprep.mubr.bf16.mxu0 0
        %2840 = vmatmul.mubr.bf16.gmra.mrb[0].mxu0 %v2802
        %v2841 = vpop.f32.mrb[0].mxu0
        %v2842 = vadd.f32 0.0, %v2841
        %v2843 = vpop.f32.mrb[0].mxu0
        %v2844 = vpop.f32.mrb[0].mxu0
        %v2845 = vpop.f32.mrb[0].mxu0
        %2846 = vdwg.mxu0
        %v2848 = vsel %vm1740, %v2798, 0
        %v2851 = vsel %vm1984, %v2362, 0
        %2853 = vmatprep.subr.bf16.mxu0 0
        %2854 = vmatpush1.bf16.msra.mxu0 %v2851
        %2855 = vmatprep.subr.bf16.mxu0 0
        %2856 = vmatpush1.bf16.msra.mxu0 0
        %2857 = vmatprep.subr.bf16.mxu0 0
        %2858 = vmatpush1.bf16.msra.mxu0 0
        %2859 = vmatprep.subr.bf16.mxu0 0
        %2860 = vmatpush1.bf16.msra.mxu0 0
        %2861 = vmatprep.subr.bf16.mxu0 0
        %2862 = vmatpush1.bf16.msra.mxu0 0
        %2863 = vmatprep.subr.bf16.mxu0 0
        %2864 = vmatpush1.bf16.msra.mxu0 0
        %2865 = vmatprep.subr.bf16.mxu0 0
        %2866 = vmatpush1.bf16.msra.mxu0 0
        %2867 = vmatprep.subr.bf16.mxu0 0
        %2868 = vmatpush1.bf16.msra.mxu0 0
        %2869 = vmatprep.subr.bf16.mxu0 0
        %2870 = vmatpush1.bf16.msra.mxu0 0
        %2871 = vmatprep.subr.bf16.mxu0 0
        %2872 = vmatpush1.bf16.msra.mxu0 0
        %2873 = vmatprep.subr.bf16.mxu0 0
        %2874 = vmatpush1.bf16.msra.mxu0 0
        %2875 = vmatprep.subr.bf16.mxu0 0
        %2876 = vmatpush1.bf16.msra.mxu0 0
        %2877 = vmatprep.subr.bf16.mxu0 0
        %2878 = vmatpush1.bf16.msra.mxu0 0
        %2879 = vmatprep.subr.bf16.mxu0 0
        %2880 = vmatpush1.bf16.msra.mxu0 0
        %2881 = vmatprep.subr.bf16.mxu0 0
        %2882 = vmatpush1.bf16.msra.mxu0 0
        %2883 = vmatprep.subr.bf16.mxu0 0
        %2884 = vmatpush1.bf16.msra.mxu0 0
        %2885 = vmatprep.mubr.bf16.mxu0 0
        %2886 = vmatmul.mubr.bf16.gmra.mrb[0].mxu0 %v2848
        %v2887 = vpop.f32.mrb[0].mxu0
        %v2888 = vadd.f32 0.0, %v2887
        %v2889 = vpop.f32.mrb[0].mxu0
        %v2890 = vpop.f32.mrb[0].mxu0
        %v2891 = vpop.f32.mrb[0].mxu0
        %2892 = vdwg.mxu0
        %v2894 = vsel %vm1740, %v2799, 0
        %v2897 = vsel %vm1984, %v2363, 0
        %2899 = vmatprep.subr.bf16.mxu0 0
        %2900 = vmatpush1.bf16.msra.mxu0 %v2897
        %2901 = vmatprep.subr.bf16.mxu0 0
        %2902 = vmatpush1.bf16.msra.mxu0 0
        %2903 = vmatprep.subr.bf16.mxu0 0
        %2904 = vmatpush1.bf16.msra.mxu0 0
        %2905 = vmatprep.subr.bf16.mxu0 0
        %2906 = vmatpush1.bf16.msra.mxu0 0
        %2907 = vmatprep.subr.bf16.mxu0 0
        %2908 = vmatpush1.bf16.msra.mxu0 0
        %2909 = vmatprep.subr.bf16.mxu0 0
        %2910 = vmatpush1.bf16.msra.mxu0 0
        %2911 = vmatprep.subr.bf16.mxu0 0
        %2912 = vmatpush1.bf16.msra.mxu0 0
        %2913 = vmatprep.subr.bf16.mxu0 0
        %2914 = vmatpush1.bf16.msra.mxu0 0
        %2915 = vmatprep.subr.bf16.mxu0 0
        %2916 = vmatpush1.bf16.msra.mxu0 0
        %2917 = vmatprep.subr.bf16.mxu0 0
        %2918 = vmatpush1.bf16.msra.mxu0 0
        %2919 = vmatprep.subr.bf16.mxu0 0
        %2920 = vmatpush1.bf16.msra.mxu0 0
        %2921 = vmatprep.subr.bf16.mxu0 0
        %2922 = vmatpush1.bf16.msra.mxu0 0
        %2923 = vmatprep.subr.bf16.mxu0 0
        %2924 = vmatpush1.bf16.msra.mxu0 0
        %2925 = vmatprep.subr.bf16.mxu0 0
        %2926 = vmatpush1.bf16.msra.mxu0 0
        %2927 = vmatprep.subr.bf16.mxu0 0
        %2928 = vmatpush1.bf16.msra.mxu0 0
        %2929 = vmatprep.subr.bf16.mxu0 0
        %2930 = vmatpush1.bf16.msra.mxu0 0
        %2931 = vmatprep.mubr.bf16.mxu0 0
        %2932 = vmatmul.mubr.bf16.gmra.mrb[0].mxu0 %v2894
        %v2933 = vpop.f32.mrb[0].mxu0
        %v2934 = vadd.f32 0.0, %v2933
        %v2935 = vpop.f32.mrb[0].mxu0
        %v2936 = vpop.f32.mrb[0].mxu0
        %v2937 = vpop.f32.mrb[0].mxu0
        %2938 = vdwg.mxu0
        %v2940 = vsel %vm1740, %v2800, 0
        %v2943 = vsel %vm1984, %v2364, 0
        %2945 = vmatprep.subr.bf16.mxu0 0
        %2946 = vmatpush1.bf16.msra.mxu0 %v2943
        %2947 = vmatprep.subr.bf16.mxu0 0
        %2948 = vmatpush1.bf16.msra.mxu0 0
        %2949 = vmatprep.subr.bf16.mxu0 0
        %2950 = vmatpush1.bf16.msra.mxu0 0
        %2951 = vmatprep.subr.bf16.mxu0 0
        %2952 = vmatpush1.bf16.msra.mxu0 0
        %2953 = vmatprep.subr.bf16.mxu0 0
        %2954 = vmatpush1.bf16.msra.mxu0 0
        %2955 = vmatprep.subr.bf16.mxu0 0
        %2956 = vmatpush1.bf16.msra.mxu0 0
        %2957 = vmatprep.subr.bf16.mxu0 0
        %2958 = vmatpush1.bf16.msra.mxu0 0
        %2959 = vmatprep.subr.bf16.mxu0 0
        %2960 = vmatpush1.bf16.msra.mxu0 0
        %2961 = vmatprep.subr.bf16.mxu0 0
        %2962 = vmatpush1.bf16.msra.mxu0 0
        %2963 = vmatprep.subr.bf16.mxu0 0
        %2964 = vmatpush1.bf16.msra.mxu0 0
        %2965 = vmatprep.subr.bf16.mxu0 0
        %2966 = vmatpush1.bf16.msra.mxu0 0
        %2967 = vmatprep.subr.bf16.mxu0 0
        %2968 = vmatpush1.bf16.msra.mxu0 0
        %2969 = vmatprep.subr.bf16.mxu0 0
        %2970 = vmatpush1.bf16.msra.mxu0 0
        %2971 = vmatprep.subr.bf16.mxu0 0
        %2972 = vmatpush1.bf16.msra.mxu0 0
        %2973 = vmatprep.subr.bf16.mxu0 0
        %2974 = vmatpush1.bf16.msra.mxu0 0
        %2975 = vmatprep.subr.bf16.mxu0 0
        %2976 = vmatpush1.bf16.msra.mxu0 0
        %2977 = vmatprep.mubr.bf16.mxu0 0
        %2978 = vmatmul.mubr.bf16.gmra.mrb[0].mxu0 %v2940
        %v2979 = vpop.f32.mrb[0].mxu0
        %v2980 = vadd.f32 0.0, %v2979
        %v2981 = vpop.f32.mrb[0].mxu0
        %v2982 = vpop.f32.mrb[0].mxu0
        %v2983 = vpop.f32.mrb[0].mxu0
        %2984 = vdwg.mxu0
        %v2985 = vsel %vm405, %v2842, 0.0
        %v2986 = vsel %vm405, %v2888, 0.0
        %v2987 = vadd.f32 %v2985, %v2986
        %v2988 = vsel %vm405, %v2934, 0.0
        %v2989 = vadd.f32 %v2987, %v2988
        %v2990 = vsel %vm405, %v2980, 0.0
        %v2991 = vadd.f32 %v2989, %v2990
        %v2992 = vsel %vm405, %v2360, -inf
        %2993 = vmax.xlane.f32.xlu0 %v2992
        %v2994 = vpop.xlane.xlu0 %2993
        %v2995 = vsub.f32 %v2360, %v2994
        %v2996 = vmul.f32 %v2995, 1.442695
        %v2997 = vpow.pop %v2996
        %v2998 = vsel %vm405, %v2997, 0.0
        %2999 = vadd.xlane.f32.xlu0 %v2998
        %v3000 = vpop.xlane.xlu0 %2999
        %v3001 = vrcp.pop %v3000
        %v3002 = vmul.f32 %v2997, %v3001
        %v3003 = vsel %vm405, %v2991, -inf
        %3004 = vmax.xlane.f32.xlu0 %v3003
        %v3005 = vpop.xlane.xlu0 %3004
        %v3006 = vsub.f32 %v2991, %v3005
        %v3007 = vmul.f32 %v3006, 1.442695
        %v3008 = vpow.pop %v3007
        %v3009 = vsel %vm405, %v3008, 0.0
        %3010 = vadd.xlane.f32.xlu0 %v3009
        %v3011 = vpop.xlane.xlu0 %3010
        %v3012 = vrcp.pop %v3011
        %v3013 = vmul.f32 %v3008, %v3012
        %v3014 = vmul.f32 %v3002, %v373
        %v3015 = vmul.f32 %v3013, %v374
        %v3016 = vadd.f32 %v3014, %v3015
        %3017 = vst.msk [vmem:[%s363] sm:$0xff] %vm405, %v3016
        %s3018 = sand.u32 %s252, 1
        %s3019 = scalar_lea.sflag [#allocation3], %s3018
        %s3020 = sand.u32 %s252, 1
        %s3021 = smul.addr %s3020, 8
        %s3022 = scalar_lea.vmem [#allocation2], %s3021
        // Predicated region
        $region61: #{tpu_custom_call.1} parent=59 // pred_check
          %p3023 = pneg %p262
        $region62: #{tpu_custom_call.1} parent=59 // pred_check_branch
          %3025 = sbr.rel (%p3023) target = $region64
        $region63: #{tpu_custom_call.1} parent=59 // pred_region
          %s3027 = ssub.s32 128, 128
          %3028 = vsyncadd %s3019, %s3027
          %s3029 = smul.addr %s24, 128
          %s3030 = scalar_lea.hbm %s10, %s3029
          %s3032 = sshll.u32 %s3022, 4
          %s3033 = int_to_ptr.vmem [resolvable:$true] %s3032
          %3035 = dma.vmem_to_hbm [thread:$0]  %s3033, 128, %s3030, %s3019
        $region64: #{tpu_custom_call.1} parent=59 // pred_fallthru
          _
      $region60: #{tpu_custom_call.1} parent=5 // pred_fallthru
        _
      %p3036 = scmp.le.s32.totalorder 2, %s19
      // Predicated region
      $region65: #{tpu_custom_call.1} parent=5 // pred_check
        %p3037 = pneg %p3036
      $region66: #{tpu_custom_call.1} parent=5 // pred_check_branch
        %3039 = sbr.rel (%p3037) target = $region68
      $region67: #{tpu_custom_call.1} parent=5 // pred_region
        %s3040 = ssub.s32 %s19, 2
        // Predicated region
        $region69: #{tpu_custom_call.1} parent=67 // pred_check
          %p3041 = pneg %p268
        $region70: #{tpu_custom_call.1} parent=67 // pred_check_branch
          %3043 = sbr.rel (%p3041) target = $region72
        $region71: #{tpu_custom_call.1} parent=67 // pred_region
          %s3044 = sand.u32 %s253, 1
          %s3045 = scalar_lea.sflag [#allocation3], %s3044
          %s3046 = sand.u32 %s253, 1
          %s3047 = smul.addr %s3046, 8
          %s3048 = scalar_lea.vmem [#allocation2], %s3047
          %3049 = dma.done %s3045, 128
        $region72: #{tpu_custom_call.1} parent=67 // pred_fallthru
          _
      $region68: #{tpu_custom_call.1} parent=5 // pred_fallthru
        _
    $region6: #{tpu_custom_call.1} parent=1 // loop_footer
      %s23 = sadd.s32 1, %s19
    $region7: #{tpu_custom_call.1} parent=1 // loop_footer_branch
      %18 = sbr.rel target = $region3
    $region8: #{tpu_custom_call.1} parent=1 // loop_exit
      _
    %3050 = vsyncpa [#allocation3], 1
    %s3051 = scalar_lea.sflag [#allocation3], 1
    %3052 = vsyncpa %s3051, 1

</llo_original>
